<compile_context>
chip_gen: v6e
topology: v6e:2x2x1
jax: 0.10.0
libtpu: 0.0.40
codegen_flags: <defaults>
</compile_context>

<pallas_src>
import functools

import jax
import jax.numpy as jnp
from jax import lax
from jax.experimental import pallas as pl
from jax.experimental.pallas import tpu as pltpu


# ----------------------------- generation-aware knobs ------------------------------

@functools.lru_cache(maxsize=None)
def _vmem_limit_bytes():
    cap = 128 * 1024 * 1024
    try:
        cap = int(getattr(pltpu.get_tpu_info(), "vmem_capacity_bytes", cap))
    except Exception:
        pass
    # leave headroom for compiler-internal scratch; ~48 MiB on v7x (64 MiB/core),
    # ~96 MiB on v5e/v6e (128 MiB/core).
    return int(min(max(cap - 16 * 1024 * 1024, 32 * 1024 * 1024), 96 * 1024 * 1024))


def _pick_tile(n, candidates):
    for c in candidates:
        if 0 < c <= n and n % c == 0:
            return c
    return n


# ----------------------------- layout glue (plain JAX) -----------------------------

def patch_split(x, bin_size):
    """B C H W -> B P rH rW C   (P = bin_size**2)."""
    B, C, H, W = x.shape
    rH, rW = H // bin_size, W // bin_size
    out = x.reshape(B, C, bin_size, rH, bin_size, rW)
    out = out.transpose(0, 2, 4, 3, 5, 1)
    return out.reshape(B, bin_size * bin_size, rH, rW, C)


def patch_recover(x, bin_size):
    """B P rH rW C -> B C H W  (NCHW, used by the reference)."""
    B, P, rH, rW, C = x.shape
    out = x.reshape(B, bin_size, bin_size, rH, rW, C)
    out = out.transpose(0, 5, 1, 3, 2, 4)
    return out.reshape(B, C, rH * bin_size, rW * bin_size)


def patch_recover_nhwc(x, bin_size):
    """B P rH rW C -> B H W C  (NHWC, used by the Pallas conv path)."""
    B, P, rH, rW, C = x.shape
    out = x.reshape(B, bin_size, bin_size, rH, rW, C)
    out = out.transpose(0, 1, 3, 2, 4, 5)
    return out.reshape(B, rH * bin_size, rW * bin_size, C)


def fold_bn(g, b, m, v, eps=1e-5):
    """Fold eval-mode BatchNorm into per-channel (scale, bias), f32."""
    s = g / jnp.sqrt(v + eps)
    return (s.reshape(1, -1).astype(jnp.float32),
            (b - m * s).reshape(1, -1).astype(jnp.float32))


# ------------------- Pallas kernel 1: fused patch-attention head -------------------
# Per batch element: pixel-confidence softmax, local aggregation (F_l), LG block,
# FUSE block, Q/K/V projections, affinity softmax and value aggregation (F_s).
# Heavy matmuls are batched over the patch dimension; kept in f32 (tiny vs convs).

def make_attention_kernel(P, S):
    def kernel(fp_ref, ip_ref, binc_ref,
               wlg1_ref, wfuse_ref, bfuse_ref,              # SMEM scalars
               wlg2_ref, wq_ref, bq_ref, wk_ref, bk_ref, wv_ref, bv_ref,
               o_ref):
        f32 = jnp.float32
        fp3 = fp_ref[0]                                     # [P, S, C]
        C = fp3.shape[-1]

        # pixel_confidence = softmax(I_p, axis=S) for all patches at once
        ip = ip_ref[0]                                      # [P, S, K]
        m = jnp.max(ip, axis=1, keepdims=True)
        e = jnp.exp(ip - m)
        pc = e * pl.reciprocal(jnp.sum(e, axis=1, keepdims=True), approx=True)

        # F_l[p] = pc[p]^T @ F_p[p] * bin_confidence[p]   (batched over P)
        fl = lax.dot_general(pc, fp3, (((1,), (1,)), ((0,), (0,))),
                             preferred_element_type=f32)    # [P, K, C]
        fl = fl * binc_ref[0]                               # [P, K, 1] broadcast

        # LG: 1x1 conv mixing the patch dim (+residual, ReLU); P is small -> SMEM mix
        mixed = []
        for p in range(P):
            acc = wlg1_ref[p, 0] * fl[0]
            for q in range(1, P):
                acc = acc + wlg1_ref[p, q] * fl[q]
            mixed.append(acc)
        lg = jnp.maximum(jnp.stack(mixed, axis=0) + fl, 0.0)          # [P, K, C]

        # LG linear (C -> C) as one [P*K, C] matmul
        K = lg.shape[1]
        fl2 = jnp.dot(lg.reshape(P * K, C), wlg2_ref[...],
                      preferred_element_type=f32)                      # [P*K, C]
        fl2_3 = fl2.reshape(P, K, C)

        # FUSE: 1x1 conv P->1 (+scalar bias); shared value across patches
        fg = wfuse_ref[0, 0] * fl2_3[0]
        for p in range(1, P):
            fg = fg + wfuse_ref[0, p] * fl2_3[p]
        fg = fg + bfuse_ref[0, 0]                                      # [K, C]
        val = jnp.dot(fg, wv_ref[...], preferred_element_type=f32) + bv_ref[...]   # [K, Ci]

        # Q / K projections as single large matmuls (bias broadcasts hoisted)
        qry = jnp.dot(fp3.reshape(P * S, C), wq_ref[...],
                      preferred_element_type=f32) + bq_ref[...]        # [P*S, Ci]
        key = jnp.dot(fl2, wk_ref[...],
                      preferred_element_type=f32) + bk_ref[...]        # [P*K, Ci]

        # affinity softmax + value aggregation
        aff = lax.dot_general(qry.reshape(P, S, -1), key.reshape(P, K, -1),
                              (((2,), (2,)), ((0,), (0,))),
                              preferred_element_type=f32)              # [P, S, K]
        am = jnp.max(aff, axis=-1, keepdims=True)
        ae = jnp.exp(aff - am)
        aff = ae * pl.reciprocal(jnp.sum(ae, axis=-1, keepdims=True), approx=True)

        o_ref[0] = jnp.dot(aff.reshape(P * S, K), val,
                           preferred_element_type=f32)                 # [P*S, Ci]
    return kernel


def attention_fused(F_p, I_p, binc, params):
    B, P, S, C = F_p.shape
    K = I_p.shape[-1]
    Ci = params['wq'].shape[0]

    def fixed(shape):
        nd = len(shape)
        return pl.BlockSpec(shape, lambda b, _nd=nd: (0,) * _nd)

    smem = pl.BlockSpec(memory_space=pltpu.MemorySpace.SMEM)
    in_specs = [
        pl.BlockSpec((1, P, S, C), lambda b: (b, 0, 0, 0)),
        pl.BlockSpec((1, P, S, K), lambda b: (b, 0, 0, 0)),
        pl.BlockSpec((1, P, K, 1), lambda b: (b, 0, 0, 0)),
        smem, smem, smem,
        fixed((C, C)),
        fixed((C, Ci)), fixed((1, Ci)),
        fixed((C, Ci)), fixed((1, Ci)),
        fixed((C, Ci)), fixed((1, Ci)),
    ]
    return pl.pallas_call(
        make_attention_kernel(P, S),
        out_shape=jax.ShapeDtypeStruct((B, P * S, Ci), jnp.float32),
        grid=(B,),
        in_specs=in_specs,
        out_specs=pl.BlockSpec((1, P * S, Ci), lambda b: (b, 0, 0)),
        compiler_params=pltpu.CompilerParams(
            dimension_semantics=("parallel",),
            vmem_limit_bytes=_vmem_limit_bytes()),
    )(F_p, I_p, binc,
      params['lg_w1'], params['fuse_w'], params['fuse_b'],
      params['lg_w2'].T,
      params['wq'].T, params['bq'],
      params['wk'].T, params['bk'],
      params['wv'].T, params['bv'])


# ------- Pallas kernel 2: M-tiled 1x1-conv GEMM + fused BN + ReLU + residual -------

def conv1x1_bn_relu_res_kernel(x_ref, w_ref, s_ref, b_ref, r_ref, o_ref):
    acc = jnp.dot(x_ref[...], w_ref[...], preferred_element_type=jnp.float32)
    y = jnp.maximum(acc * s_ref[...] + b_ref[...], 0.0) + r_ref[...]
    o_ref[...] = y.astype(o_ref.dtype)


def conv1x1_bn_relu_residual(x_bf16, w_bf16, scale, bias, residual_f32,
                             out_dtype=jnp.bfloat16):
    M, K = x_bf16.shape
    N = w_bf16.shape[1]
    tm_target = 512 if _vmem_limit_bytes() >= 80 * 1024 * 1024 else 256
    tm = _pick_tile(M, (tm_target, 512, 256, 128, 64, 32, 16, 8))
    return pl.pallas_call(
        conv1x1_bn_relu_res_kernel,
        out_shape=jax.ShapeDtypeStruct((M, N), out_dtype),
        grid=(M // tm,),
        in_specs=[
            pl.BlockSpec((tm, K), lambda i: (i, 0)),
            pl.BlockSpec((K, N), lambda i: (0, 0)),
            pl.BlockSpec((1, N), lambda i: (0, 0)),
            pl.BlockSpec((1, N), lambda i: (0, 0)),
            pl.BlockSpec((tm, N), lambda i: (i, 0)),
        ],
        out_specs=pl.BlockSpec((tm, N), lambda i: (i, 0)),
        compiler_params=pltpu.CompilerParams(
            dimension_semantics=("parallel",),
            vmem_limit_bytes=_vmem_limit_bytes()),
    )(x_bf16, w_bf16, scale, bias, residual_f32)


# ------ Pallas kernel 3: fused 3x3 conv (pad=1) + BN + ReLU (+ optional classifier) ------
# Reads the padded NHWC bf16 input directly (row block + 2 halo rows), accumulates
# over input-channel chunks on an "arbitrary" grid axis, and applies BN/ReLU (and,
# for conv3, the 1x1 classifier) in the epilogue.  No HBM im2col is materialized.

def make_conv3x3_kernel(TH, W, fuse_classifier):
    def kernel(xm_ref, xh1_ref, xh2_ref, w_ref, s_ref, b_ref, *rest):
        if fuse_classifier:
            wc_ref, o_ref, acc_ref = rest
        else:
            o_ref, acc_ref = rest
        c = pl.program_id(2)

        @pl.when(c == 0)
        def _():
            acc_ref[...] = jnp.zeros_like(acc_ref)

        # (TH+2, W+2, ck) window of the padded input for this row block / chunk
        win = jnp.concatenate([xm_ref[0], xh1_ref[0], xh2_ref[0]], axis=0)
        for dw in range(3):
            shifted = win[:, dw:dw + W, :]                    # (TH+2, W, ck)
            for dh in range(3):
                lhs = shifted[dh:dh + TH].reshape(TH * W, shifted.shape[-1])
                acc_ref[...] += jnp.dot(lhs, w_ref[dh, dw],
                                        preferred_element_type=jnp.float32)

        @pl.when(c == pl.num_programs(2) - 1)
        def _():
            y = jnp.maximum(acc_ref[...] * s_ref[...] + b_ref[...], 0.0)
            if fuse_classifier:
                y = jnp.dot(y.astype(jnp.bfloat16), wc_ref[...],
                            preferred_element_type=jnp.float32)
            o_ref[0] = y.reshape(TH, W, y.shape[-1]).astype(o_ref.dtype)
    return kernel


def conv3x3_bn_relu(x_nhwc, w_oihw, scale, bias, cls_w=None,
                    out_dtype=jnp.bfloat16):
    B, H, W, Cin = x_nhwc.shape
    Cout = w_oihw.shape[0]
    xp = jnp.pad(x_nhwc.astype(jnp.bfloat16), ((0, 0), (1, 1), (1, 1), (0, 0)))
    Wp = W + 2
    wt = jnp.transpose(w_oihw, (2, 3, 1, 0)).astype(jnp.bfloat16)   # [3,3,Cin,Cout]

    ck = _pick_tile(Cin, (512, 256, 128))      # reduction (input-channel) chunk
    nck = Cin // ck
    TH = _pick_tile(H, (16, 8, 4, 2, 1))       # output rows per grid step

    fuse_cls = cls_w is not None
    if fuse_cls:
        cls_w = cls_w.astype(jnp.bfloat16)
        n_out = cls_w.shape[1]
        odtype = jnp.float32
    else:
        n_out = Cout
        odtype = out_dtype

    in_specs = [
        pl.BlockSpec((1, TH, Wp, ck), lambda b, h, c: (b, h, 0, c)),
        pl.BlockSpec((1, 1, Wp, ck), lambda b, h, c: (b, h * TH + TH, 0, c)),
        pl.BlockSpec((1, 1, Wp, ck), lambda b, h, c: (b, h * TH + TH + 1, 0, c)),
        pl.BlockSpec((3, 3, ck, Cout), lambda b, h, c: (0, 0, c, 0)),
        pl.BlockSpec((1, Cout), lambda b, h, c: (0, 0)),
        pl.BlockSpec((1, Cout), lambda b, h, c: (0, 0)),
    ]
    args = [xp, xp, xp, wt, scale, bias]
    if fuse_cls:
        in_specs.append(pl.BlockSpec((Cout, n_out), lambda b, h, c: (0, 0)))
        args.append(cls_w)

    return pl.pallas_call(
        make_conv3x3_kernel(TH, W, fuse_cls),
        out_shape=jax.ShapeDtypeStruct((B, H, W, n_out), odtype),
        grid_spec=pltpu.PrefetchScalarGridSpec(
            num_scalar_prefetch=0,
            grid=(B, H // TH, nck),
            in_specs=in_specs,
            out_specs=pl.BlockSpec((1, TH, W, n_out), lambda b, h, c: (b, h, 0, 0)),
            scratch_shapes=[pltpu.VMEM((TH * W, Cout), jnp.float32)]),
        compiler_params=pltpu.CompilerParams(
            dimension_semantics=("parallel", "parallel", "arbitrary"),
            vmem_limit_bytes=_vmem_limit_bytes()),
    )(*args)


# --------------------------------- forward pass ------------------------------------

def segmentation_head_forward(params, M_1, F, I, R, patch_size):
    B, C4, H, W = F.shape                       # C4 = 512
    P = patch_size * patch_size
    rH, rW = H // patch_size, W // patch_size
    S = rH * rW
    Kc = I.shape[1]
    Ci = params['wq'].shape[0]                  # 256

    # ----- patch/attention path (fused Pallas kernel, grid over B) -----
    F_p = patch_split(F, patch_size).reshape(B, P, S, C4)
    I_p = patch_split(I, patch_size).reshape(B, P, S, Kc)
    binc = jnp.transpose(R.reshape(B, Kc, -1), (0, 2, 1))[..., None]      # [B, P, K, 1]

    F_s = attention_fused(F_p, I_p, binc, params)                         # [B, P*S, Ci]
    F_s = patch_recover_nhwc(F_s.reshape(B, P, rH, rW, Ci), patch_size)   # [B, H, W, Ci]

    # ----- conv1 (1x1) + BN + ReLU + residual, M-tiled GEMM (bf16 operands) -----
    M = B * H * W
    F_nhwc = jnp.transpose(F, (0, 2, 3, 1)).reshape(M, C4)                # f32 residual
    s1, b1 = fold_bn(params['bn1_g'], params['bn1_b'], params['bn1_m'], params['bn1_v'])
    w1 = params['conv1_w'].reshape(C4, Ci).T.astype(jnp.bfloat16)         # [Ci, C4]
    Fo1 = conv1x1_bn_relu_residual(F_s.reshape(M, Ci).astype(jnp.bfloat16),
                                   w1, s1, b1, F_nhwc)                    # [M, C4] bf16
    Fo1 = Fo1.reshape(B, H, W, C4)

    # ----- conv2 (3x3) + BN + ReLU, fused direct-conv kernel -----
    s2, b2 = fold_bn(params['bn2_g'], params['bn2_b'], params['bn2_m'], params['bn2_v'])
    y2 = conv3x3_bn_relu(Fo1, params['conv2_w'], s2, b2)                  # [B,H,W,512] bf16

    # ----- conv3 (3x3, 2560 in) + BN + ReLU + fused 1x1 classifier -----
    m1_nhwc = jnp.transpose(M_1, (0, 2, 3, 1)).astype(jnp.bfloat16)
    cat = jnp.concatenate([y2, m1_nhwc], axis=-1)                         # [B,H,W,2560] bf16
    s3, b3 = fold_bn(params['bn3_g'], params['bn3_b'], params['bn3_m'], params['bn3_v'])
    # TODO(synk): Dropout2d(0.1) treated as identity (eval mode); no stochastic masking.
    logits = conv3x3_bn_relu(cat, params['conv3_w'], s3, b3,
                             cls_w=params['drop_w'].T)                    # [B,H,W,ncls] f32
    return jnp.transpose(logits, (0, 3, 1, 2))


# --------------------------- deterministic parameter init --------------------------

def init_params(key, patch_size, n_classes):
    P = patch_size * patch_size
    C, Ci = 512, 256
    ks = iter(jax.random.split(key, 32))

    def n(shape, scale):
        return (scale * jax.random.normal(next(ks), shape)).astype(jnp.float32)

    p = {
        'lg_w1': n((P, P), 0.3),                 # LG.conv1  (Conv2d P->P, 1x1, no bias)
        'lg_w2': n((C, C), 0.045),               # LG.conv2  (Linear C->C, no bias)
        'fuse_w': n((1, P), 0.5),                # FUSE.conv (Conv2d P->1, 1x1)
        'fuse_b': n((1, 1), 0.5),
        'wq': n((Ci, C), 0.045), 'bq': n((1, Ci), 0.05),
        'wk': n((Ci, C), 0.045), 'bk': n((1, Ci), 0.05),
        'wv': n((Ci, C), 0.045), 'bv': n((1, Ci), 0.05),
        'conv1_w': n((C, Ci, 1, 1), 0.0625),
        'conv2_w': n((C, C, 3, 3), 0.015),
        'conv3_w': n((C, 2048 + C, 3, 3), 0.007),
        'drop_w': n((n_classes, C), 0.045),
    }
    for name in ('bn1', 'bn2', 'bn3'):          # eval-mode BatchNorm2d parameters
        p[name + '_g'] = (1.0 + 0.1 * jax.random.normal(next(ks), (C,))).astype(jnp.float32)
        p[name + '_b'] = (0.1 * jax.random.normal(next(ks), (C,))).astype(jnp.float32)
        p[name + '_m'] = (0.1 * jax.random.normal(next(ks), (C,))).astype(jnp.float32)
        p[name + '_v'] = jax.random.uniform(next(ks), (C,), jnp.float32, 0.5, 1.5)
    return p


# ------------------------------ pure-JAX reference ----------------------------------

def reference_forward(params, M_1, F, I, R, patch_size):
    hp = functools.partial(jnp.einsum, precision=lax.Precision.HIGHEST)
    B, C, H, W = F.shape
    P = patch_size * patch_size
    F_p = patch_split(F, patch_size)
    I_p = patch_split(I, patch_size)
    rH, rW = F_p.shape[2], F_p.shape[3]
    S = rH * rW
    K = I_p.shape[-1]
    F_p = F_p.reshape(B, P, S, C)
    I_p = I_p.reshape(B, P, S, K)
    binc = jnp.transpose(R.reshape(B, K, -1), (0, 2, 1))[..., None]
    pc = jax.nn.softmax(I_p, axis=2)
    F_l = hp('bpsk,bpsc->bpkc', pc, F_p) * binc
    lg = jax.nn.relu(hp('pq,bqkc->bpkc', params['lg_w1'], F_l) + F_l)
    F_l2 = hp('bpkc,dc->bpkd', lg, params['lg_w2'])
    F_g = hp('p,bpkc->bkc', params['fuse_w'][0], F_l2) + params['fuse_b'][0, 0]
    F_g = jnp.broadcast_to(F_g[:, None], (B, P, K, C))
    qy = hp('bpsc,dc->bpsd', F_p, params['wq']) + params['bq'][0]
    ky = hp('bpkc,dc->bpkd', F_l2, params['wk']) + params['bk'][0]
    vy = hp('bpkc,dc->bpkd', F_g, params['wv']) + params['bv'][0]
    aff = jax.nn.softmax(hp('bpsd,bpkd->bpsk', qy, ky), axis=-1)
    F_s = hp('bpsk,bpkd->bpsd', aff, vy)
    Ci = F_s.shape[-1]
    F_s = patch_recover(F_s.reshape(B, P, rH, rW, Ci), patch_size)

    def conv_bn_relu(x, w, g, b, m, v, pad):
        y = lax.conv_general_dilated(
            x, w, (1, 1), [(pad, pad), (pad, pad)],
            dimension_numbers=('NCHW', 'OIHW', 'NCHW'),
            precision=lax.Precision.HIGHEST)
        s = g / jnp.sqrt(v + 1e-5)
        return jax.nn.relu(y * s[None, :, None, None] + (b - m * s)[None, :, None, None])

    Fo1 = F + conv_bn_relu(F_s, params['conv1_w'], params['bn1_g'], params['bn1_b'],
                           params['bn1_m'], params['bn1_v'], 0)
    x2 = conv_bn_relu(Fo1, params['conv2_w'], params['bn2_g'], params['bn2_b'],
                      params['bn2_m'], params['bn2_v'], 1)
    x3 = conv_bn_relu(jnp.concatenate([x2, M_1], axis=1), params['conv3_w'],
                      params['bn3_g'], params['bn3_b'], params['bn3_m'], params['bn3_v'], 1)
    return lax.conv_general_dilated(
        x3, params['drop_w'][:, :, None, None], (1, 1), [(0, 0), (0, 0)],
        dimension_numbers=('NCHW', 'OIHW', 'NCHW'),
        precision=lax.Precision.HIGHEST)


# -------------------------------------- main ----------------------------------------

if __name__ == "__main__":
    root = jax.random.PRNGKey(0)
    kF, kI, kR, kM, kp = jax.random.split(root, 5)
    B, H, W = 2, 8, 8
    patch_size, n_classes, Kch = 2, 8, 8

    Fx = jax.random.normal(kF, (B, 512, H, W), jnp.float32)
    Ix = jax.random.normal(kI, (B, Kch, H, W), jnp.float32)
    Rx = jax.random.normal(kR, (B, Kch, patch_size, patch_size), jnp.float32)
    M1 = jax.random.normal(kM, (B, 2048, H, W), jnp.float32)
    params = init_params(kp, patch_size, n_classes)

    out = segmentation_head_forward(params, M1, Fx, Ix, Rx, patch_size)
    out = jax.block_until_ready(out)
    assert out.shape == (B, n_classes, H, W), out.shape
    assert bool(jnp.all(jnp.isfinite(out)))

    ref = jax.block_until_ready(reference_forward(params, M1, Fx, Ix, Rx, patch_size))
    max_err = float(jnp.max(jnp.abs(out - ref)))
    assert max_err < 5e-2, f"max abs error vs reference: {max_err}"
    print("KERNEL_OK")
</pallas_src>

<mosaic_0001>
module attributes {stable_mosaic.version = 11 : i64} {
  func.func @kernel(%arg0: i32, %arg1: memref<1x4x16x512xf32, #tpu.memory_space<vmem>>, %arg2: memref<1x4x16x8xf32, #tpu.memory_space<vmem>>, %arg3: memref<1x4x8x1xf32, #tpu.memory_space<vmem>>, %arg4: memref<4x4xf32, #tpu.memory_space<smem>>, %arg5: memref<1x4xf32, #tpu.memory_space<smem>>, %arg6: memref<1x1xf32, #tpu.memory_space<smem>>, %arg7: memref<512x512xf32, #tpu.memory_space<vmem>>, %arg8: memref<512x256xf32, #tpu.memory_space<vmem>>, %arg9: memref<1x256xf32, #tpu.memory_space<vmem>>, %arg10: memref<512x256xf32, #tpu.memory_space<vmem>>, %arg11: memref<1x256xf32, #tpu.memory_space<vmem>>, %arg12: memref<512x256xf32, #tpu.memory_space<vmem>>, %arg13: memref<1x256xf32, #tpu.memory_space<vmem>>, %arg14: memref<1x64x256xf32, #tpu.memory_space<vmem>>) attributes {dimension_semantics = [#tpu.dimension_semantics<parallel>], iteration_bounds = array<i64: 2>, scalar_prefetch = 0 : i64, scratch_operands = 0 : i64, tpu.core_type = #tpu.core_type<tc>, window_params = [{transform_indices = @transform_0, window_bounds = array<i64: 1, 4, 16, 512>}, {transform_indices = @transform_1, window_bounds = array<i64: 1, 4, 16, 8>}, {transform_indices = @transform_2, window_bounds = array<i64: 1, 4, 8, 1>}, {transform_indices = @transform_3, window_bounds = array<i64: 4, 4>}, {transform_indices = @transform_4, window_bounds = array<i64: 1, 4>}, {transform_indices = @transform_5, window_bounds = array<i64: 1, 1>}, {pipeline_mode = #tpu.pipeline_mode<synchronous>, transform_indices = @transform_6, window_bounds = array<i64: 512, 512>}, {pipeline_mode = #tpu.pipeline_mode<synchronous>, transform_indices = @transform_7, window_bounds = array<i64: 512, 256>}, {pipeline_mode = #tpu.pipeline_mode<synchronous>, transform_indices = @transform_8, window_bounds = array<i64: 1, 256>}, {pipeline_mode = #tpu.pipeline_mode<synchronous>, transform_indices = @transform_9, window_bounds = array<i64: 512, 256>}, {pipeline_mode = #tpu.pipeline_mode<synchronous>, transform_indices = @transform_10, window_bounds = array<i64: 1, 256>}, {pipeline_mode = #tpu.pipeline_mode<synchronous>, transform_indices = @transform_11, window_bounds = array<i64: 512, 256>}, {pipeline_mode = #tpu.pipeline_mode<synchronous>, transform_indices = @transform_12, window_bounds = array<i64: 1, 256>}, {transform_indices = @transform_13, window_bounds = array<i64: 1, 64, 256>}]} {
    %c0 = arith.constant 0 : index
    %c0_0 = arith.constant 0 : index
    %c0_1 = arith.constant 0 : index
    %c0_2 = arith.constant 0 : index
    %0 = vector.load %arg1[%c0, %c0_0, %c0_1, %c0_2] : memref<1x4x16x512xf32, #tpu.memory_space<vmem>>, vector<1x4x16x512xf32>
    %1 = vector.shape_cast %0 : vector<1x4x16x512xf32> to vector<4x16x512xf32>
    %c0_3 = arith.constant 0 : index
    %c0_4 = arith.constant 0 : index
    %c0_5 = arith.constant 0 : index
    %c0_6 = arith.constant 0 : index
    %2 = vector.load %arg2[%c0_3, %c0_4, %c0_5, %c0_6] : memref<1x4x16x8xf32, #tpu.memory_space<vmem>>, vector<1x4x16x8xf32>
    %3 = vector.shape_cast %2 : vector<1x4x16x8xf32> to vector<4x16x8xf32>
    %cst = arith.constant dense<0xFF800000> : vector<4x8xf32>
    %4 = vector.multi_reduction <maximumf>, %3, %cst [1] : vector<4x16x8xf32> to vector<4x8xf32>
    %5 = vector.shape_cast %4 : vector<4x8xf32> to vector<4x1x8xf32>
    %6 = vector.broadcast %5 : vector<4x1x8xf32> to vector<4x16x8xf32>
    %7 = arith.subf %3, %6 : vector<4x16x8xf32>
    %8 = math.exp %7 : vector<4x16x8xf32>
    %cst_7 = arith.constant dense<0.000000e+00> : vector<4x8xf32>
    %9 = vector.multi_reduction <add>, %8, %cst_7 [1] : vector<4x16x8xf32> to vector<4x8xf32>
    %10 = vector.shape_cast %9 : vector<4x8xf32> to vector<4x1x8xf32>
    %11 = tpu.reciprocal %10 {approx = true} : vector<4x1x8xf32> -> vector<4x1x8xf32>
    %12 = vector.broadcast %11 : vector<4x1x8xf32> to vector<4x16x8xf32>
    %13 = arith.mulf %8, %12 : vector<4x16x8xf32>
    %cst_8 = arith.constant dense<0.000000e+00> : vector<4x8x512xf32>
    %14 = tpu.matmul %13, %1, %cst_8 {dimension_numbers = #tpu.dot_dimension_numbers<[1], [1], [2], [2], [0, 0, 0, 2, 1, 2], [0], [0]>} : vector<4x16x8xf32>, vector<4x16x512xf32>, vector<4x8x512xf32> -> vector<4x8x512xf32>
    %c0_9 = arith.constant 0 : index
    %c0_10 = arith.constant 0 : index
    %c0_11 = arith.constant 0 : index
    %c0_12 = arith.constant 0 : index
    %15 = vector.load %arg3[%c0_9, %c0_10, %c0_11, %c0_12] : memref<1x4x8x1xf32, #tpu.memory_space<vmem>>, vector<1x4x8x1xf32>
    %16 = vector.shape_cast %15 : vector<1x4x8x1xf32> to vector<4x8x1xf32>
    %17 = vector.broadcast %16 : vector<4x8x1xf32> to vector<4x8x512xf32>
    %18 = arith.mulf %14, %17 : vector<4x8x512xf32>
    %c0_13 = arith.constant 0 : index
    %c0_14 = arith.constant 0 : index
    %19 = memref.load %arg4[%c0_13, %c0_14] : memref<4x4xf32, #tpu.memory_space<smem>>
    %20 = vector.extract_strided_slice %18 {offsets = [0, 0, 0], sizes = [1, 8, 512], strides = [1, 1, 1]} : vector<4x8x512xf32> to vector<1x8x512xf32>
    %21 = vector.shape_cast %20 : vector<1x8x512xf32> to vector<8x512xf32>
    %22 = vector.broadcast %19 : f32 to vector<8x512xf32>
    %23 = arith.mulf %22, %21 : vector<8x512xf32>
    %c0_15 = arith.constant 0 : index
    %c1 = arith.constant 1 : index
    %24 = memref.load %arg4[%c0_15, %c1] : memref<4x4xf32, #tpu.memory_space<smem>>
    %25 = vector.extract_strided_slice %18 {offsets = [1, 0, 0], sizes = [1, 8, 512], strides = [1, 1, 1]} : vector<4x8x512xf32> to vector<1x8x512xf32>
    %26 = vector.shape_cast %25 : vector<1x8x512xf32> to vector<8x512xf32>
    %27 = vector.broadcast %24 : f32 to vector<8x512xf32>
    %28 = arith.mulf %27, %26 : vector<8x512xf32>
    %29 = arith.addf %23, %28 : vector<8x512xf32>
    %c0_16 = arith.constant 0 : index
    %c2 = arith.constant 2 : index
    %30 = memref.load %arg4[%c0_16, %c2] : memref<4x4xf32, #tpu.memory_space<smem>>
    %31 = vector.extract_strided_slice %18 {offsets = [2, 0, 0], sizes = [1, 8, 512], strides = [1, 1, 1]} : vector<4x8x512xf32> to vector<1x8x512xf32>
    %32 = vector.shape_cast %31 : vector<1x8x512xf32> to vector<8x512xf32>
    %33 = vector.broadcast %30 : f32 to vector<8x512xf32>
    %34 = arith.mulf %33, %32 : vector<8x512xf32>
    %35 = arith.addf %29, %34 : vector<8x512xf32>
    %c0_17 = arith.constant 0 : index
    %c3 = arith.constant 3 : index
    %36 = memref.load %arg4[%c0_17, %c3] : memref<4x4xf32, #tpu.memory_space<smem>>
    %37 = vector.extract_strided_slice %18 {offsets = [3, 0, 0], sizes = [1, 8, 512], strides = [1, 1, 1]} : vector<4x8x512xf32> to vector<1x8x512xf32>
    %38 = vector.shape_cast %37 : vector<1x8x512xf32> to vector<8x512xf32>
    %39 = vector.broadcast %36 : f32 to vector<8x512xf32>
    %40 = arith.mulf %39, %38 : vector<8x512xf32>
    %41 = arith.addf %35, %40 : vector<8x512xf32>
    %c1_18 = arith.constant 1 : index
    %c0_19 = arith.constant 0 : index
    %42 = memref.load %arg4[%c1_18, %c0_19] : memref<4x4xf32, #tpu.memory_space<smem>>
    %43 = vector.extract_strided_slice %18 {offsets = [0, 0, 0], sizes = [1, 8, 512], strides = [1, 1, 1]} : vector<4x8x512xf32> to vector<1x8x512xf32>
    %44 = vector.shape_cast %43 : vector<1x8x512xf32> to vector<8x512xf32>
    %45 = vector.broadcast %42 : f32 to vector<8x512xf32>
    %46 = arith.mulf %45, %44 : vector<8x512xf32>
    %c1_20 = arith.constant 1 : index
    %c1_21 = arith.constant 1 : index
    %47 = memref.load %arg4[%c1_20, %c1_21] : memref<4x4xf32, #tpu.memory_space<smem>>
    %48 = vector.extract_strided_slice %18 {offsets = [1, 0, 0], sizes = [1, 8, 512], strides = [1, 1, 1]} : vector<4x8x512xf32> to vector<1x8x512xf32>
    %49 = vector.shape_cast %48 : vector<1x8x512xf32> to vector<8x512xf32>
    %50 = vector.broadcast %47 : f32 to vector<8x512xf32>
    %51 = arith.mulf %50, %49 : vector<8x512xf32>
    %52 = arith.addf %46, %51 : vector<8x512xf32>
    %c1_22 = arith.constant 1 : index
    %c2_23 = arith.constant 2 : index
    %53 = memref.load %arg4[%c1_22, %c2_23] : memref<4x4xf32, #tpu.memory_space<smem>>
    %54 = vector.extract_strided_slice %18 {offsets = [2, 0, 0], sizes = [1, 8, 512], strides = [1, 1, 1]} : vector<4x8x512xf32> to vector<1x8x512xf32>
    %55 = vector.shape_cast %54 : vector<1x8x512xf32> to vector<8x512xf32>
    %56 = vector.broadcast %53 : f32 to vector<8x512xf32>
    %57 = arith.mulf %56, %55 : vector<8x512xf32>
    %58 = arith.addf %52, %57 : vector<8x512xf32>
    %c1_24 = arith.constant 1 : index
    %c3_25 = arith.constant 3 : index
    %59 = memref.load %arg4[%c1_24, %c3_25] : memref<4x4xf32, #tpu.memory_space<smem>>
    %60 = vector.extract_strided_slice %18 {offsets = [3, 0, 0], sizes = [1, 8, 512], strides = [1, 1, 1]} : vector<4x8x512xf32> to vector<1x8x512xf32>
    %61 = vector.shape_cast %60 : vector<1x8x512xf32> to vector<8x512xf32>
    %62 = vector.broadcast %59 : f32 to vector<8x512xf32>
    %63 = arith.mulf %62, %61 : vector<8x512xf32>
    %64 = arith.addf %58, %63 : vector<8x512xf32>
    %c2_26 = arith.constant 2 : index
    %c0_27 = arith.constant 0 : index
    %65 = memref.load %arg4[%c2_26, %c0_27] : memref<4x4xf32, #tpu.memory_space<smem>>
    %66 = vector.extract_strided_slice %18 {offsets = [0, 0, 0], sizes = [1, 8, 512], strides = [1, 1, 1]} : vector<4x8x512xf32> to vector<1x8x512xf32>
    %67 = vector.shape_cast %66 : vector<1x8x512xf32> to vector<8x512xf32>
    %68 = vector.broadcast %65 : f32 to vector<8x512xf32>
    %69 = arith.mulf %68, %67 : vector<8x512xf32>
    %c2_28 = arith.constant 2 : index
    %c1_29 = arith.constant 1 : index
    %70 = memref.load %arg4[%c2_28, %c1_29] : memref<4x4xf32, #tpu.memory_space<smem>>
    %71 = vector.extract_strided_slice %18 {offsets = [1, 0, 0], sizes = [1, 8, 512], strides = [1, 1, 1]} : vector<4x8x512xf32> to vector<1x8x512xf32>
    %72 = vector.shape_cast %71 : vector<1x8x512xf32> to vector<8x512xf32>
    %73 = vector.broadcast %70 : f32 to vector<8x512xf32>
    %74 = arith.mulf %73, %72 : vector<8x512xf32>
    %75 = arith.addf %69, %74 : vector<8x512xf32>
    %c2_30 = arith.constant 2 : index
    %c2_31 = arith.constant 2 : index
    %76 = memref.load %arg4[%c2_30, %c2_31] : memref<4x4xf32, #tpu.memory_space<smem>>
    %77 = vector.extract_strided_slice %18 {offsets = [2, 0, 0], sizes = [1, 8, 512], strides = [1, 1, 1]} : vector<4x8x512xf32> to vector<1x8x512xf32>
    %78 = vector.shape_cast %77 : vector<1x8x512xf32> to vector<8x512xf32>
    %79 = vector.broadcast %76 : f32 to vector<8x512xf32>
    %80 = arith.mulf %79, %78 : vector<8x512xf32>
    %81 = arith.addf %75, %80 : vector<8x512xf32>
    %c2_32 = arith.constant 2 : index
    %c3_33 = arith.constant 3 : index
    %82 = memref.load %arg4[%c2_32, %c3_33] : memref<4x4xf32, #tpu.memory_space<smem>>
    %83 = vector.extract_strided_slice %18 {offsets = [3, 0, 0], sizes = [1, 8, 512], strides = [1, 1, 1]} : vector<4x8x512xf32> to vector<1x8x512xf32>
    %84 = vector.shape_cast %83 : vector<1x8x512xf32> to vector<8x512xf32>
    %85 = vector.broadcast %82 : f32 to vector<8x512xf32>
    %86 = arith.mulf %85, %84 : vector<8x512xf32>
    %87 = arith.addf %81, %86 : vector<8x512xf32>
    %c3_34 = arith.constant 3 : index
    %c0_35 = arith.constant 0 : index
    %88 = memref.load %arg4[%c3_34, %c0_35] : memref<4x4xf32, #tpu.memory_space<smem>>
    %89 = vector.extract_strided_slice %18 {offsets = [0, 0, 0], sizes = [1, 8, 512], strides = [1, 1, 1]} : vector<4x8x512xf32> to vector<1x8x512xf32>
    %90 = vector.shape_cast %89 : vector<1x8x512xf32> to vector<8x512xf32>
    %91 = vector.broadcast %88 : f32 to vector<8x512xf32>
    %92 = arith.mulf %91, %90 : vector<8x512xf32>
    %c3_36 = arith.constant 3 : index
    %c1_37 = arith.constant 1 : index
    %93 = memref.load %arg4[%c3_36, %c1_37] : memref<4x4xf32, #tpu.memory_space<smem>>
    %94 = vector.extract_strided_slice %18 {offsets = [1, 0, 0], sizes = [1, 8, 512], strides = [1, 1, 1]} : vector<4x8x512xf32> to vector<1x8x512xf32>
    %95 = vector.shape_cast %94 : vector<1x8x512xf32> to vector<8x512xf32>
    %96 = vector.broadcast %93 : f32 to vector<8x512xf32>
    %97 = arith.mulf %96, %95 : vector<8x512xf32>
    %98 = arith.addf %92, %97 : vector<8x512xf32>
    %c3_38 = arith.constant 3 : index
    %c2_39 = arith.constant 2 : index
    %99 = memref.load %arg4[%c3_38, %c2_39] : memref<4x4xf32, #tpu.memory_space<smem>>
    %100 = vector.extract_strided_slice %18 {offsets = [2, 0, 0], sizes = [1, 8, 512], strides = [1, 1, 1]} : vector<4x8x512xf32> to vector<1x8x512xf32>
    %101 = vector.shape_cast %100 : vector<1x8x512xf32> to vector<8x512xf32>
    %102 = vector.broadcast %99 : f32 to vector<8x512xf32>
    %103 = arith.mulf %102, %101 : vector<8x512xf32>
    %104 = arith.addf %98, %103 : vector<8x512xf32>
    %c3_40 = arith.constant 3 : index
    %c3_41 = arith.constant 3 : index
    %105 = memref.load %arg4[%c3_40, %c3_41] : memref<4x4xf32, #tpu.memory_space<smem>>
    %106 = vector.extract_strided_slice %18 {offsets = [3, 0, 0], sizes = [1, 8, 512], strides = [1, 1, 1]} : vector<4x8x512xf32> to vector<1x8x512xf32>
    %107 = vector.shape_cast %106 : vector<1x8x512xf32> to vector<8x512xf32>
    %108 = vector.broadcast %105 : f32 to vector<8x512xf32>
    %109 = arith.mulf %108, %107 : vector<8x512xf32>
    %110 = arith.addf %104, %109 : vector<8x512xf32>
    %111 = vector.shape_cast %41 : vector<8x512xf32> to vector<1x8x512xf32>
    %112 = vector.shape_cast %64 : vector<8x512xf32> to vector<1x8x512xf32>
    %113 = vector.shape_cast %87 : vector<8x512xf32> to vector<1x8x512xf32>
    %114 = vector.shape_cast %110 : vector<8x512xf32> to vector<1x8x512xf32>
    %115 = tpu.concatenate %111, %112, %113, %114 in 0 : vector<1x8x512xf32>, vector<1x8x512xf32>, vector<1x8x512xf32>, vector<1x8x512xf32> -> vector<4x8x512xf32>
    %116 = arith.addf %115, %18 : vector<4x8x512xf32>
    %cst_42 = arith.constant 0.000000e+00 : f32
    %117 = vector.broadcast %cst_42 : f32 to vector<4x8x512xf32>
    %118 = arith.maximumf %116, %117 : vector<4x8x512xf32>
    %119 = vector.shape_cast %118 : vector<4x8x512xf32> to vector<32x512xf32>
    %c0_43 = arith.constant 0 : index
    %c0_44 = arith.constant 0 : index
    %120 = vector.load %arg7[%c0_43, %c0_44] : memref<512x512xf32, #tpu.memory_space<vmem>>, vector<512x512xf32>
    %cst_45 = arith.constant dense<0.000000e+00> : vector<32x512xf32>
    %121 = tpu.matmul %119, %120, %cst_45 {dimension_numbers = #tpu.dot_dimension_numbers<[1], [0], [0], [1], [0, 0, 1, 1], [], []>} : vector<32x512xf32>, vector<512x512xf32>, vector<32x512xf32> -> vector<32x512xf32>
    %122 = vector.shape_cast %121 : vector<32x512xf32> to vector<4x8x512xf32>
    %c0_46 = arith.constant 0 : index
    %c0_47 = arith.constant 0 : index
    %123 = memref.load %arg5[%c0_46, %c0_47] : memref<1x4xf32, #tpu.memory_space<smem>>
    %124 = vector.extract_strided_slice %122 {offsets = [0, 0, 0], sizes = [1, 8, 512], strides = [1, 1, 1]} : vector<4x8x512xf32> to vector<1x8x512xf32>
    %125 = vector.shape_cast %124 : vector<1x8x512xf32> to vector<8x512xf32>
    %126 = vector.broadcast %123 : f32 to vector<8x512xf32>
    %127 = arith.mulf %126, %125 : vector<8x512xf32>
    %c0_48 = arith.constant 0 : index
    %c1_49 = arith.constant 1 : index
    %128 = memref.load %arg5[%c0_48, %c1_49] : memref<1x4xf32, #tpu.memory_space<smem>>
    %129 = vector.extract_strided_slice %122 {offsets = [1, 0, 0], sizes = [1, 8, 512], strides = [1, 1, 1]} : vector<4x8x512xf32> to vector<1x8x512xf32>
    %130 = vector.shape_cast %129 : vector<1x8x512xf32> to vector<8x512xf32>
    %131 = vector.broadcast %128 : f32 to vector<8x512xf32>
    %132 = arith.mulf %131, %130 : vector<8x512xf32>
    %133 = arith.addf %127, %132 : vector<8x512xf32>
    %c0_50 = arith.constant 0 : index
    %c2_51 = arith.constant 2 : index
    %134 = memref.load %arg5[%c0_50, %c2_51] : memref<1x4xf32, #tpu.memory_space<smem>>
    %135 = vector.extract_strided_slice %122 {offsets = [2, 0, 0], sizes = [1, 8, 512], strides = [1, 1, 1]} : vector<4x8x512xf32> to vector<1x8x512xf32>
    %136 = vector.shape_cast %135 : vector<1x8x512xf32> to vector<8x512xf32>
    %137 = vector.broadcast %134 : f32 to vector<8x512xf32>
    %138 = arith.mulf %137, %136 : vector<8x512xf32>
    %139 = arith.addf %133, %138 : vector<8x512xf32>
    %c0_52 = arith.constant 0 : index
    %c3_53 = arith.constant 3 : index
    %140 = memref.load %arg5[%c0_52, %c3_53] : memref<1x4xf32, #tpu.memory_space<smem>>
    %141 = vector.extract_strided_slice %122 {offsets = [3, 0, 0], sizes = [1, 8, 512], strides = [1, 1, 1]} : vector<4x8x512xf32> to vector<1x8x512xf32>
    %142 = vector.shape_cast %141 : vector<1x8x512xf32> to vector<8x512xf32>
    %143 = vector.broadcast %140 : f32 to vector<8x512xf32>
    %144 = arith.mulf %143, %142 : vector<8x512xf32>
    %145 = arith.addf %139, %144 : vector<8x512xf32>
    %c0_54 = arith.constant 0 : index
    %c0_55 = arith.constant 0 : index
    %146 = memref.load %arg6[%c0_54, %c0_55] : memref<1x1xf32, #tpu.memory_space<smem>>
    %147 = vector.broadcast %146 : f32 to vector<8x512xf32>
    %148 = arith.addf %145, %147 : vector<8x512xf32>
    %c0_56 = arith.constant 0 : index
    %c0_57 = arith.constant 0 : index
    %149 = vector.load %arg12[%c0_56, %c0_57] : memref<512x256xf32, #tpu.memory_space<vmem>>, vector<512x256xf32>
    %cst_58 = arith.constant dense<0.000000e+00> : vector<8x256xf32>
    %150 = tpu.matmul %148, %149, %cst_58 {dimension_numbers = #tpu.dot_dimension_numbers<[1], [0], [0], [1], [0, 0, 1, 1], [], []>} : vector<8x512xf32>, vector<512x256xf32>, vector<8x256xf32> -> vector<8x256xf32>
    %c0_59 = arith.constant 0 : index
    %c0_60 = arith.constant 0 : index
    %151 = vector.load %arg13[%c0_59, %c0_60] : memref<1x256xf32, #tpu.memory_space<vmem>>, vector<1x256xf32>
    %152 = vector.broadcast %151 : vector<1x256xf32> to vector<8x256xf32>
    %153 = arith.addf %150, %152 : vector<8x256xf32>
    %154 = vector.shape_cast %1 : vector<4x16x512xf32> to vector<64x512xf32>
    %c0_61 = arith.constant 0 : index
    %c0_62 = arith.constant 0 : index
    %155 = vector.load %arg8[%c0_61, %c0_62] : memref<512x256xf32, #tpu.memory_space<vmem>>, vector<512x256xf32>
    %cst_63 = arith.constant dense<0.000000e+00> : vector<64x256xf32>
    %156 = tpu.matmul %154, %155, %cst_63 {dimension_numbers = #tpu.dot_dimension_numbers<[1], [0], [0], [1], [0, 0, 1, 1], [], []>} : vector<64x512xf32>, vector<512x256xf32>, vector<64x256xf32> -> vector<64x256xf32>
    %c0_64 = arith.constant 0 : index
    %c0_65 = arith.constant 0 : index
    %157 = vector.load %arg9[%c0_64, %c0_65] : memref<1x256xf32, #tpu.memory_space<vmem>>, vector<1x256xf32>
    %158 = vector.broadcast %157 : vector<1x256xf32> to vector<64x256xf32>
    %159 = arith.addf %156, %158 : vector<64x256xf32>
    %c0_66 = arith.constant 0 : index
    %c0_67 = arith.constant 0 : index
    %160 = vector.load %arg10[%c0_66, %c0_67] : memref<512x256xf32, #tpu.memory_space<vmem>>, vector<512x256xf32>
    %cst_68 = arith.constant dense<0.000000e+00> : vector<32x256xf32>
    %161 = tpu.matmul %121, %160, %cst_68 {dimension_numbers = #tpu.dot_dimension_numbers<[1], [0], [0], [1], [0, 0, 1, 1], [], []>} : vector<32x512xf32>, vector<512x256xf32>, vector<32x256xf32> -> vector<32x256xf32>
    %c0_69 = arith.constant 0 : index
    %c0_70 = arith.constant 0 : index
    %162 = vector.load %arg11[%c0_69, %c0_70] : memref<1x256xf32, #tpu.memory_space<vmem>>, vector<1x256xf32>
    %163 = vector.broadcast %162 : vector<1x256xf32> to vector<32x256xf32>
    %164 = arith.addf %161, %163 : vector<32x256xf32>
    %165 = vector.shape_cast %159 : vector<64x256xf32> to vector<4x16x256xf32>
    %166 = vector.shape_cast %164 : vector<32x256xf32> to vector<4x8x256xf32>
    %cst_71 = arith.constant dense<0.000000e+00> : vector<4x16x8xf32>
    %167 = tpu.matmul %165, %166, %cst_71 {dimension_numbers = #tpu.dot_dimension_numbers<[2], [2], [1], [1], [0, 0, 0, 1, 1, 1], [0], [0]>} : vector<4x16x256xf32>, vector<4x8x256xf32>, vector<4x16x8xf32> -> vector<4x16x8xf32>
    %cst_72 = arith.constant dense<0xFF800000> : vector<4x16xf32>
    %168 = vector.multi_reduction <maximumf>, %167, %cst_72 [2] : vector<4x16x8xf32> to vector<4x16xf32>
    %169 = vector.shape_cast %168 : vector<4x16xf32> to vector<4x16x1xf32>
    %170 = vector.broadcast %169 : vector<4x16x1xf32> to vector<4x16x8xf32>
    %171 = arith.subf %167, %170 : vector<4x16x8xf32>
    %172 = math.exp %171 : vector<4x16x8xf32>
    %cst_73 = arith.constant dense<0.000000e+00> : vector<4x16xf32>
    %173 = vector.multi_reduction <add>, %172, %cst_73 [2] : vector<4x16x8xf32> to vector<4x16xf32>
    %174 = vector.shape_cast %173 : vector<4x16xf32> to vector<4x16x1xf32>
    %175 = tpu.reciprocal %174 {approx = true} : vector<4x16x1xf32> -> vector<4x16x1xf32>
    %176 = vector.broadcast %175 : vector<4x16x1xf32> to vector<4x16x8xf32>
    %177 = arith.mulf %172, %176 : vector<4x16x8xf32>
    %178 = vector.shape_cast %177 : vector<4x16x8xf32> to vector<64x8xf32>
    %cst_74 = arith.constant dense<0.000000e+00> : vector<64x256xf32>
    %179 = tpu.matmul %178, %153, %cst_74 {dimension_numbers = #tpu.dot_dimension_numbers<[1], [0], [0], [1], [0, 0, 1, 1], [], []>} : vector<64x8xf32>, vector<8x256xf32>, vector<64x256xf32> -> vector<64x256xf32>
    %c0_75 = arith.constant 0 : index
    %c0_76 = arith.constant 0 : index
    %c0_77 = arith.constant 0 : index
    %180 = vector.load %arg14[%c0_75, %c0_76, %c0_77] : memref<1x64x256xf32, #tpu.memory_space<vmem>>, vector<1x64x256xf32>
    %181 = vector.shape_cast %180 : vector<1x64x256xf32> to vector<64x256xf32>
    %182 = vector.shape_cast %179 : vector<64x256xf32> to vector<1x64x256xf32>
    tpu.vector_store %arg14[%c0_75, %c0_76, %c0_77], %182 {strides = array<i32>} : memref<1x64x256xf32, #tpu.memory_space<vmem>>, vector<1x64x256xf32>,
    return
  }
  func.func @transform_0(%arg0: i32) -> (i32, i32, i32, i32) {
    %c0_i32 = arith.constant 0 : i32
    %c0_i32_0 = arith.constant 0 : i32
    %c0_i32_1 = arith.constant 0 : i32
    %c0_i32_2 = arith.constant 0 : i32
    return %arg0, %c0_i32, %c0_i32_0, %c0_i32_1 : i32, i32, i32, i32
  }
  func.func @transform_1(%arg0: i32) -> (i32, i32, i32, i32) {
    %c0_i32 = arith.constant 0 : i32
    %c0_i32_0 = arith.constant 0 : i32
    %c0_i32_1 = arith.constant 0 : i32
    %c0_i32_2 = arith.constant 0 : i32
    return %arg0, %c0_i32, %c0_i32_0, %c0_i32_1 : i32, i32, i32, i32
  }
  func.func @transform_2(%arg0: i32) -> (i32, i32, i32, i32) {
    %c0_i32 = arith.constant 0 : i32
    %c0_i32_0 = arith.constant 0 : i32
    %c0_i32_1 = arith.constant 0 : i32
    %c0_i32_2 = arith.constant 0 : i32
    return %arg0, %c0_i32, %c0_i32_0, %c0_i32_1 : i32, i32, i32, i32
  }
  func.func @transform_3(%arg0: i32) -> (i32, i32) {
    %c0_i32 = arith.constant 0 : i32
    %c0_i32_0 = arith.constant 0 : i32
    %c0_i32_1 = arith.constant 0 : i32
    return %c0_i32, %c0_i32_0 : i32, i32
  }
  func.func @transform_4(%arg0: i32) -> (i32, i32) {
    %c0_i32 = arith.constant 0 : i32
    %c0_i32_0 = arith.constant 0 : i32
    %c0_i32_1 = arith.constant 0 : i32
    return %c0_i32, %c0_i32_0 : i32, i32
  }
  func.func @transform_5(%arg0: i32) -> (i32, i32) {
    %c0_i32 = arith.constant 0 : i32
    %c0_i32_0 = arith.constant 0 : i32
    %c0_i32_1 = arith.constant 0 : i32
    return %c0_i32, %c0_i32_0 : i32, i32
  }
  func.func @transform_6(%arg0: i32) -> (i32, i32) {
    %c0_i32 = arith.constant 0 : i32
    %c0_i32_0 = arith.constant 0 : i32
    %c0_i32_1 = arith.constant 0 : i32
    return %c0_i32, %c0_i32_0 : i32, i32
  }
  func.func @transform_7(%arg0: i32) -> (i32, i32) {
    %c0_i32 = arith.constant 0 : i32
    %c0_i32_0 = arith.constant 0 : i32
    %c0_i32_1 = arith.constant 0 : i32
    return %c0_i32, %c0_i32_0 : i32, i32
  }
  func.func @transform_8(%arg0: i32) -> (i32, i32) {
    %c0_i32 = arith.constant 0 : i32
    %c0_i32_0 = arith.constant 0 : i32
    %c0_i32_1 = arith.constant 0 : i32
    return %c0_i32, %c0_i32_0 : i32, i32
  }
  func.func @transform_9(%arg0: i32) -> (i32, i32) {
    %c0_i32 = arith.constant 0 : i32
    %c0_i32_0 = arith.constant 0 : i32
    %c0_i32_1 = arith.constant 0 : i32
    return %c0_i32, %c0_i32_0 : i32, i32
  }
  func.func @transform_10(%arg0: i32) -> (i32, i32) {
    %c0_i32 = arith.constant 0 : i32
    %c0_i32_0 = arith.constant 0 : i32
    %c0_i32_1 = arith.constant 0 : i32
    return %c0_i32, %c0_i32_0 : i32, i32
  }
  func.func @transform_11(%arg0: i32) -> (i32, i32) {
    %c0_i32 = arith.constant 0 : i32
    %c0_i32_0 = arith.constant 0 : i32
    %c0_i32_1 = arith.constant 0 : i32
    return %c0_i32, %c0_i32_0 : i32, i32
  }
  func.func @transform_12(%arg0: i32) -> (i32, i32) {
    %c0_i32 = arith.constant 0 : i32
    %c0_i32_0 = arith.constant 0 : i32
    %c0_i32_1 = arith.constant 0 : i32
    return %c0_i32, %c0_i32_0 : i32, i32
  }
  func.func @transform_13(%arg0: i32) -> (i32, i32, i32) {
    %c0_i32 = arith.constant 0 : i32
    %c0_i32_0 = arith.constant 0 : i32
    %c0_i32_1 = arith.constant 0 : i32
    return %arg0, %c0_i32, %c0_i32_0 : i32, i32, i32
  }
}

</mosaic_0001>

<llo_original>
// kernel: tpu_custom_call.1
$region0: #{tpu_custom_call.1}
  #allocation0 [shape = 'u32[]', space=smem, size = 0x4, offset = 0x4, fixed_abs, tag = 'smem constant byte address 0x4 - core index']
  #allocation1 [shape = 'u32[144,128]{1,0:T(1,128)}', space=vmem, size = 0x12000, scoped, tag = 'internal scratch']
  #allocation2 [shape = 'f32[1,1]{1,0:T(1,128)S(6)}', space=smem, size = 0x200, scoped, tag = 'scoped memory for tpu_custom_call.1']
  %s0 = inlined_call_operand.hbm [shape: f32[2,4,16,512], index: 0, kind: input, shape index: {}]
  %s1 = inlined_call_operand.vmem [shape: f32[2,4,16,8], index: 1, kind: input, shape index: {}]
  %s2 = inlined_call_operand.vmem [shape: f32[2,4,8,1], index: 2, kind: input, shape index: {}]
  %s3 = inlined_call_operand.vmem [shape: f32[4,4], index: 3, kind: input, shape index: {}]
  %s4 = inlined_call_operand.vmem [shape: f32[1,4], index: 4, kind: input, shape index: {}]
  %s5 = inlined_call_operand.<no memory space> [shape: f32[1,1], index: 5, kind: input, shape index: {}]
  %s6 = inlined_call_operand.hbm [shape: f32[512,512], index: 6, kind: input, shape index: {}]
  %s7 = inlined_call_operand.hbm [shape: f32[512,256], index: 7, kind: input, shape index: {}]
  %s8 = inlined_call_operand.vmem [shape: f32[1,256], index: 8, kind: input, shape index: {}]
  %s9 = inlined_call_operand.hbm [shape: f32[512,256], index: 9, kind: input, shape index: {}]
  %s10 = inlined_call_operand.vmem [shape: f32[1,256], index: 10, kind: input, shape index: {}]
  %s11 = inlined_call_operand.hbm [shape: f32[512,256], index: 11, kind: input, shape index: {}]
  %s12 = inlined_call_operand.vmem [shape: f32[1,256], index: 12, kind: input, shape index: {}]
  %s13 = inlined_call_operand.hbm [shape: f32[2,64,256], index: 13, kind: output, shape index: {}]
  %s14 = sld [smem:[#allocation0]]
  $region113: #{tpu_custom_call.1} parent=0
    _
  %s16 = ssub.s32 1, %s14
  %s17 = scalar_select 0, %s16, %s14
  %18 = sst [smem:[#allocation2]] %s5
  $region1: #{tpu_custom_call.1} parent=0
    #allocation3 [shape = 'u8[262144]{0}', space=vmem, size = 0x40000, scoped, tag = 'input window, operand 0']
    #allocation4 [shape = 's32[2]{0}', space=sflag, size = 0x8, scoped, tag = 'scoped memory for tpu_custom_call.1']
    #allocation5 [shape = 's32[2]{0}', space=sflag, size = 0x8, scoped, tag = 'scoped memory for tpu_custom_call.1']
    #allocation6 [shape = 's32[2]{0}', space=sflag, size = 0x8, scoped, tag = 'scoped memory for tpu_custom_call.1']
    #allocation7 [shape = 'u8[2048]{0}', space=smem, size = 0x800, scoped, tag = 'input window, operand 3, single buffered']
    #allocation8 [shape = 'u8[512]{0}', space=smem, size = 0x200, scoped, tag = 'input window, operand 4, single buffered']
    #allocation9 [shape = 's32[1]{0}', space=sflag, size = 0x4, scoped, tag = 'scoped memory for tpu_custom_call.1']
    #allocation10 [shape = 'u8[1048576]{0}', space=vmem, size = 0x100000, scoped, tag = 'input window, operand 6, single buffered']
    #allocation11 [shape = 's32[1]{0}', space=sflag, size = 0x4, scoped, tag = 'scoped memory for tpu_custom_call.1']
    #allocation12 [shape = 'u8[524288]{0}', space=vmem, size = 0x80000, scoped, tag = 'input window, operand 7, single buffered']
    #allocation13 [shape = 'u8[524288]{0}', space=vmem, size = 0x80000, scoped, tag = 'input window, operand 9, single buffered']
    #allocation14 [shape = 's32[1]{0}', space=sflag, size = 0x4, scoped, tag = 'scoped memory for tpu_custom_call.1']
    #allocation15 [shape = 'u8[524288]{0}', space=vmem, size = 0x80000, scoped, tag = 'input window, operand 11, single buffered']
    #allocation16 [shape = 'u8[131072]{0}', space=vmem, size = 0x20000, scoped, tag = 'output window, operand 0']
    %19 = vsyncpa [#allocation4], 0
    %s20 = scalar_lea.sflag [#allocation4], 1
    %21 = vsyncpa %s20, 0
    %22 = vsyncpa [#allocation6], 0
    %23 = vsyncpa [#allocation9], 0
    %24 = vsyncpa [#allocation11], 0
    %25 = vsyncpa [#allocation14], 0
    %26 = vsyncpa [#allocation5], 0
    %s27 = scalar_lea.sflag [#allocation5], 1
    %28 = vsyncpa %s27, 0
    loop: start=0, step=1, limit=4
    $region2: #{tpu_custom_call.1} parent=1 // loop_pre_header
      _
    $region3: #{tpu_custom_call.1} parent=1 // loop_header
      %s30 = sphi 0, %s34
      %p31 = scmp.ge.s32.totalorder %s30, 4
      %s40 = sphi 0, %s42
      %s43 = sphi 0, %s40
      %s44 = sphi 0, %s43
      %s60 = sphi 0, %s44
      %s66 = sphi 0, %s68
      %s69 = sphi 0, %s66
      %s70 = sphi 0, %s69
      %s86 = sphi 0, %s70
      %s92 = sphi 0, %s94
      %s95 = sphi 0, %s92
      %s96 = sphi 0, %s95
      %s112 = sphi 0, %s96
      %s116 = sphi 0, %s116
      %s118 = sphi 0, %s116
      %s119 = sphi 0, %s118
      %s133 = sphi 0, %s119
      %s137 = sphi 0, %s137
      %s139 = sphi 0, %s137
      %s140 = sphi 0, %s139
      %s154 = sphi 0, %s140
      %s158 = sphi 0, %s158
      %s160 = sphi 0, %s158
      %s161 = sphi 0, %s160
      %s175 = sphi 0, %s161
      %s179 = sphi 0, %s179
      %s181 = sphi 0, %s179
      %s182 = sphi 0, %s181
      %s196 = sphi 0, %s182
      %s200 = sphi 0, %s200
      %s202 = sphi 0, %s200
      %s203 = sphi 0, %s202
      %s217 = sphi 0, %s203
      %s221 = sphi 0, %s221
      %s223 = sphi 0, %s221
      %s224 = sphi 0, %s223
      %s238 = sphi 0, %s224
      %s242 = sphi 0, %s242
      %s244 = sphi 0, %s242
      %s245 = sphi 0, %s244
      %s259 = sphi 0, %s245
      %s263 = sphi 0, %s263
      %s265 = sphi 0, %s263
      %s266 = sphi 0, %s265
      %s280 = sphi 0, %s266
      %s284 = sphi 0, %s284
      %s286 = sphi 0, %s284
      %s287 = sphi 0, %s286
      %s301 = sphi 0, %s287
      %s305 = sphi 0, %s305
      %s307 = sphi 0, %s305
      %s308 = sphi 0, %s307
      %s322 = sphi 0, %s308
      %s328 = sphi 0, %s330
      %s331 = sphi 0, %s328
      %s332 = sphi 0, %s331
      %s348 = sphi 0, %s332
    $region4: #{tpu_custom_call.1} parent=1 // loop_header_branch
      %33 = sbr.rel (%p31) target = $region8
    $region5: #{tpu_custom_call.1} parent=1 // loop_body
      %s35 = ssub.s32 %s30, 1
      %s36 = ssub.s32 %s30, 2
      %s37 = sadd.s32 %s30, 1
      %s38 = ssub.s32 %s30, %s37
      %p39 = scmp.eq.s32.totalorder %s38, 0
      %s41 = sadd.s32 %s40, 1
      %s42 = scalar_select %p39, %s40, %s41
      %p45 = pneg %p39
      %p46 = scmp.eq.s32.totalorder %s30, 1
      %p47 = por %p45, %p46
      %p48 = scmp.ne.s32.totalorder %s40, %s43
      %p49 = scmp.eq.s32.totalorder %s30, 0
      %p50 = por %p48, %p49
      %p51 = scmp.ne.s32.totalorder %s40, %s43
      %p52 = scmp.eq.s32.totalorder %s35, 1
      %p53 = por %p51, %p52
      %p54 = scmp.ne.s32.totalorder %s43, %s44
      %p55 = scmp.eq.s32.totalorder %s35, 0
      %p56 = por %p54, %p55
      %p57 = scmp.ne.s32.totalorder %s43, %s44
      %p58 = scmp.eq.s32.totalorder %s36, 1
      %p59 = por %p57, %p58
      %p61 = scmp.ne.s32.totalorder %s44, %s60
      %p62 = scmp.eq.s32.totalorder %s36, 0
      %p63 = por %p61, %p62
      %s64 = ssub.s32 %s30, %s37
      %p65 = scmp.eq.s32.totalorder %s64, 0
      %s67 = sadd.s32 %s66, 1
      %s68 = scalar_select %p65, %s66, %s67
      %p71 = pneg %p65
      %p72 = scmp.eq.s32.totalorder %s30, 1
      %p73 = por %p71, %p72
      %p74 = scmp.ne.s32.totalorder %s66, %s69
      %p75 = scmp.eq.s32.totalorder %s30, 0
      %p76 = por %p74, %p75
      %p77 = scmp.ne.s32.totalorder %s66, %s69
      %p78 = scmp.eq.s32.totalorder %s35, 1
      %p79 = por %p77, %p78
      %p80 = scmp.ne.s32.totalorder %s69, %s70
      %p81 = scmp.eq.s32.totalorder %s35, 0
      %p82 = por %p80, %p81
      %p83 = scmp.ne.s32.totalorder %s69, %s70
      %p84 = scmp.eq.s32.totalorder %s36, 1
      %p85 = por %p83, %p84
      %p87 = scmp.ne.s32.totalorder %s70, %s86
      %p88 = scmp.eq.s32.totalorder %s36, 0
      %p89 = por %p87, %p88
      %s90 = ssub.s32 %s30, %s37
      %p91 = scmp.eq.s32.totalorder %s90, 0
      %s93 = sadd.s32 %s92, 1
      %s94 = scalar_select %p91, %s92, %s93
      %p97 = pneg %p91
      %p98 = scmp.eq.s32.totalorder %s30, 1
      %p99 = por %p97, %p98
      %p100 = scmp.ne.s32.totalorder %s92, %s95
      %p101 = scmp.eq.s32.totalorder %s30, 0
      %p102 = por %p100, %p101
      %p103 = scmp.ne.s32.totalorder %s92, %s95
      %p104 = scmp.eq.s32.totalorder %s35, 1
      %p105 = por %p103, %p104
      %p106 = scmp.ne.s32.totalorder %s95, %s96
      %p107 = scmp.eq.s32.totalorder %s35, 0
      %p108 = por %p106, %p107
      %p109 = scmp.ne.s32.totalorder %s95, %s96
      %p110 = scmp.eq.s32.totalorder %s36, 1
      %p111 = por %p109, %p110
      %p113 = scmp.ne.s32.totalorder %s96, %s112
      %p114 = scmp.eq.s32.totalorder %s36, 0
      %p115 = por %p113, %p114
      %s117 = sadd.s32 %s116, 1
      %p120 = scmp.eq.s32.totalorder %s30, 1
      %p121 = scmp.ne.s32.totalorder %s116, %s118
      %p122 = scmp.eq.s32.totalorder %s30, 0
      %p123 = por %p121, %p122
      %p124 = scmp.ne.s32.totalorder %s116, %s118
      %p125 = scmp.eq.s32.totalorder %s35, 1
      %p126 = por %p124, %p125
      %p127 = scmp.ne.s32.totalorder %s118, %s119
      %p128 = scmp.eq.s32.totalorder %s35, 0
      %p129 = por %p127, %p128
      %p130 = scmp.ne.s32.totalorder %s118, %s119
      %p131 = scmp.eq.s32.totalorder %s36, 1
      %p132 = por %p130, %p131
      %p134 = scmp.ne.s32.totalorder %s119, %s133
      %p135 = scmp.eq.s32.totalorder %s36, 0
      %p136 = por %p134, %p135
      %s138 = sadd.s32 %s137, 1
      %p141 = scmp.eq.s32.totalorder %s30, 1
      %p142 = scmp.ne.s32.totalorder %s137, %s139
      %p143 = scmp.eq.s32.totalorder %s30, 0
      %p144 = por %p142, %p143
      %p145 = scmp.ne.s32.totalorder %s137, %s139
      %p146 = scmp.eq.s32.totalorder %s35, 1
      %p147 = por %p145, %p146
      %p148 = scmp.ne.s32.totalorder %s139, %s140
      %p149 = scmp.eq.s32.totalorder %s35, 0
      %p150 = por %p148, %p149
      %p151 = scmp.ne.s32.totalorder %s139, %s140
      %p152 = scmp.eq.s32.totalorder %s36, 1
      %p153 = por %p151, %p152
      %p155 = scmp.ne.s32.totalorder %s140, %s154
      %p156 = scmp.eq.s32.totalorder %s36, 0
      %p157 = por %p155, %p156
      %s159 = sadd.s32 %s158, 1
      %p162 = scmp.eq.s32.totalorder %s30, 1
      %p163 = scmp.ne.s32.totalorder %s158, %s160
      %p164 = scmp.eq.s32.totalorder %s30, 0
      %p165 = por %p163, %p164
      %p166 = scmp.ne.s32.totalorder %s158, %s160
      %p167 = scmp.eq.s32.totalorder %s35, 1
      %p168 = por %p166, %p167
      %p169 = scmp.ne.s32.totalorder %s160, %s161
      %p170 = scmp.eq.s32.totalorder %s35, 0
      %p171 = por %p169, %p170
      %p172 = scmp.ne.s32.totalorder %s160, %s161
      %p173 = scmp.eq.s32.totalorder %s36, 1
      %p174 = por %p172, %p173
      %p176 = scmp.ne.s32.totalorder %s161, %s175
      %p177 = scmp.eq.s32.totalorder %s36, 0
      %p178 = por %p176, %p177
      %s180 = sadd.s32 %s179, 1
      %p183 = scmp.eq.s32.totalorder %s30, 1
      %p184 = scmp.ne.s32.totalorder %s179, %s181
      %p185 = scmp.eq.s32.totalorder %s30, 0
      %p186 = por %p184, %p185
      %p187 = scmp.ne.s32.totalorder %s179, %s181
      %p188 = scmp.eq.s32.totalorder %s35, 1
      %p189 = por %p187, %p188
      %p190 = scmp.ne.s32.totalorder %s181, %s182
      %p191 = scmp.eq.s32.totalorder %s35, 0
      %p192 = por %p190, %p191
      %p193 = scmp.ne.s32.totalorder %s181, %s182
      %p194 = scmp.eq.s32.totalorder %s36, 1
      %p195 = por %p193, %p194
      %p197 = scmp.ne.s32.totalorder %s182, %s196
      %p198 = scmp.eq.s32.totalorder %s36, 0
      %p199 = por %p197, %p198
      %s201 = sadd.s32 %s200, 1
      %p204 = scmp.eq.s32.totalorder %s30, 1
      %p205 = scmp.ne.s32.totalorder %s200, %s202
      %p206 = scmp.eq.s32.totalorder %s30, 0
      %p207 = por %p205, %p206
      %p208 = scmp.ne.s32.totalorder %s200, %s202
      %p209 = scmp.eq.s32.totalorder %s35, 1
      %p210 = por %p208, %p209
      %p211 = scmp.ne.s32.totalorder %s202, %s203
      %p212 = scmp.eq.s32.totalorder %s35, 0
      %p213 = por %p211, %p212
      %p214 = scmp.ne.s32.totalorder %s202, %s203
      %p215 = scmp.eq.s32.totalorder %s36, 1
      %p216 = por %p214, %p215
      %p218 = scmp.ne.s32.totalorder %s203, %s217
      %p219 = scmp.eq.s32.totalorder %s36, 0
      %p220 = por %p218, %p219
      %s222 = sadd.s32 %s221, 1
      %p225 = scmp.eq.s32.totalorder %s30, 1
      %p226 = scmp.ne.s32.totalorder %s221, %s223
      %p227 = scmp.eq.s32.totalorder %s30, 0
      %p228 = por %p226, %p227
      %p229 = scmp.ne.s32.totalorder %s221, %s223
      %p230 = scmp.eq.s32.totalorder %s35, 1
      %p231 = por %p229, %p230
      %p232 = scmp.ne.s32.totalorder %s223, %s224
      %p233 = scmp.eq.s32.totalorder %s35, 0
      %p234 = por %p232, %p233
      %p235 = scmp.ne.s32.totalorder %s223, %s224
      %p236 = scmp.eq.s32.totalorder %s36, 1
      %p237 = por %p235, %p236
      %p239 = scmp.ne.s32.totalorder %s224, %s238
      %p240 = scmp.eq.s32.totalorder %s36, 0
      %p241 = por %p239, %p240
      %s243 = sadd.s32 %s242, 1
      %p246 = scmp.eq.s32.totalorder %s30, 1
      %p247 = scmp.ne.s32.totalorder %s242, %s244
      %p248 = scmp.eq.s32.totalorder %s30, 0
      %p249 = por %p247, %p248
      %p250 = scmp.ne.s32.totalorder %s242, %s244
      %p251 = scmp.eq.s32.totalorder %s35, 1
      %p252 = por %p250, %p251
      %p253 = scmp.ne.s32.totalorder %s244, %s245
      %p254 = scmp.eq.s32.totalorder %s35, 0
      %p255 = por %p253, %p254
      %p256 = scmp.ne.s32.totalorder %s244, %s245
      %p257 = scmp.eq.s32.totalorder %s36, 1
      %p258 = por %p256, %p257
      %p260 = scmp.ne.s32.totalorder %s245, %s259
      %p261 = scmp.eq.s32.totalorder %s36, 0
      %p262 = por %p260, %p261
      %s264 = sadd.s32 %s263, 1
      %p267 = scmp.eq.s32.totalorder %s30, 1
      %p268 = scmp.ne.s32.totalorder %s263, %s265
      %p269 = scmp.eq.s32.totalorder %s30, 0
      %p270 = por %p268, %p269
      %p271 = scmp.ne.s32.totalorder %s263, %s265
      %p272 = scmp.eq.s32.totalorder %s35, 1
      %p273 = por %p271, %p272
      %p274 = scmp.ne.s32.totalorder %s265, %s266
      %p275 = scmp.eq.s32.totalorder %s35, 0
      %p276 = por %p274, %p275
      %p277 = scmp.ne.s32.totalorder %s265, %s266
      %p278 = scmp.eq.s32.totalorder %s36, 1
      %p279 = por %p277, %p278
      %p281 = scmp.ne.s32.totalorder %s266, %s280
      %p282 = scmp.eq.s32.totalorder %s36, 0
      %p283 = por %p281, %p282
      %s285 = sadd.s32 %s284, 1
      %p288 = scmp.eq.s32.totalorder %s30, 1
      %p289 = scmp.ne.s32.totalorder %s284, %s286
      %p290 = scmp.eq.s32.totalorder %s30, 0
      %p291 = por %p289, %p290
      %p292 = scmp.ne.s32.totalorder %s284, %s286
      %p293 = scmp.eq.s32.totalorder %s35, 1
      %p294 = por %p292, %p293
      %p295 = scmp.ne.s32.totalorder %s286, %s287
      %p296 = scmp.eq.s32.totalorder %s35, 0
      %p297 = por %p295, %p296
      %p298 = scmp.ne.s32.totalorder %s286, %s287
      %p299 = scmp.eq.s32.totalorder %s36, 1
      %p300 = por %p298, %p299
      %p302 = scmp.ne.s32.totalorder %s287, %s301
      %p303 = scmp.eq.s32.totalorder %s36, 0
      %p304 = por %p302, %p303
      %s306 = sadd.s32 %s305, 1
      %p309 = scmp.eq.s32.totalorder %s30, 1
      %p310 = scmp.ne.s32.totalorder %s305, %s307
      %p311 = scmp.eq.s32.totalorder %s30, 0
      %p312 = por %p310, %p311
      %p313 = scmp.ne.s32.totalorder %s305, %s307
      %p314 = scmp.eq.s32.totalorder %s35, 1
      %p315 = por %p313, %p314
      %p316 = scmp.ne.s32.totalorder %s307, %s308
      %p317 = scmp.eq.s32.totalorder %s35, 0
      %p318 = por %p316, %p317
      %p319 = scmp.ne.s32.totalorder %s307, %s308
      %p320 = scmp.eq.s32.totalorder %s36, 1
      %p321 = por %p319, %p320
      %p323 = scmp.ne.s32.totalorder %s308, %s322
      %p324 = scmp.eq.s32.totalorder %s36, 0
      %p325 = por %p323, %p324
      %s326 = ssub.s32 %s30, %s37
      %p327 = scmp.eq.s32.totalorder %s326, 0
      %s329 = sadd.s32 %s328, 1
      %s330 = scalar_select %p327, %s328, %s329
      %p333 = pneg %p327
      %p334 = scmp.eq.s32.totalorder %s30, 1
      %p335 = por %p333, %p334
      %p336 = scmp.ne.s32.totalorder %s328, %s331
      %p337 = scmp.eq.s32.totalorder %s30, 0
      %p338 = por %p336, %p337
      %p339 = scmp.ne.s32.totalorder %s328, %s331
      %p340 = scmp.eq.s32.totalorder %s35, 1
      %p341 = por %p339, %p340
      %p342 = scmp.ne.s32.totalorder %s331, %s332
      %p343 = scmp.eq.s32.totalorder %s35, 0
      %p344 = por %p342, %p343
      %p345 = scmp.ne.s32.totalorder %s331, %s332
      %p346 = scmp.eq.s32.totalorder %s36, 1
      %p347 = por %p345, %p346
      %p349 = scmp.ne.s32.totalorder %s332, %s348
      %p350 = scmp.eq.s32.totalorder %s36, 0
      %p351 = por %p349, %p350
      %p352 = scmp.le.s32.totalorder 1, %s30
      %p353 = scmp.lt.s32.totalorder %s30, 3
      %p354 = pnand %p352, %p353
      %p355 = pneg %p354
      // Predicated region
      $region9: #{tpu_custom_call.1} parent=5 // pred_check
        _
      $region10: #{tpu_custom_call.1} parent=5 // pred_check_branch
        %357 = sbr.rel (%p354) target = $region12
      $region11: #{tpu_custom_call.1} parent=5 // pred_region
        %s358 = ssub.s32 %s30, 1
        // Predicated region
        $region13: #{tpu_custom_call.1} parent=11 // pred_check
          %p359 = pneg %p129
        $region14: #{tpu_custom_call.1} parent=11 // pred_check_branch
          %361 = sbr.rel (%p359) target = $region16
        $region15: #{tpu_custom_call.1} parent=11 // pred_region
          %s363 = ssub.s32 64, 64
          %364 = vsyncadd [#allocation6], %s363
          %s366 = sshll.u32 %s3, 4
          %s367 = int_to_ptr.vmem [resolvable:$true] %s366
          %369 = dma.vmem_to_smem %s367, 64, [#allocation7], [#allocation6]
        $region16: #{tpu_custom_call.1} parent=11 // pred_fallthru
          _
        // Predicated region
        $region17: #{tpu_custom_call.1} parent=11 // pred_check
          %p370 = pneg %p150
        $region18: #{tpu_custom_call.1} parent=11 // pred_check_branch
          %372 = sbr.rel (%p370) target = $region20
        $region19: #{tpu_custom_call.1} parent=11 // pred_region
          %s374 = ssub.s32 16, 16
          %375 = vsyncadd [#allocation9], %s374
          %s377 = sshll.u32 %s4, 4
          %s378 = int_to_ptr.vmem [resolvable:$true] %s377
          %380 = dma.vmem_to_smem %s378, 16, [#allocation8], [#allocation9]
        $region20: #{tpu_custom_call.1} parent=11 // pred_fallthru
          _
        // Predicated region
        $region21: #{tpu_custom_call.1} parent=11 // pred_check
          %p381 = pneg %p171
        $region22: #{tpu_custom_call.1} parent=11 // pred_check_branch
          %383 = sbr.rel (%p381) target = $region24
        $region23: #{tpu_custom_call.1} parent=11 // pred_region
          _
        $region24: #{tpu_custom_call.1} parent=11 // pred_fallthru
          _
        // Predicated region
        $region25: #{tpu_custom_call.1} parent=11 // pred_check
          %p384 = pneg %p192
        $region26: #{tpu_custom_call.1} parent=11 // pred_check_branch
          %386 = sbr.rel (%p384) target = $region28
        $region27: #{tpu_custom_call.1} parent=11 // pred_region
          %s388 = ssub.s32 32768, 32768
          %389 = vsyncadd [#allocation11], %s388
          %s390 = sshll.u32 [#allocation10], 4
          %s391 = int_to_ptr.vmem [resolvable:$true] %s390
          %396 = dma.hbm_to_vmem [thread:$0]  %s6, 32768, %s391, [#allocation11], 512, 512, 32
        $region28: #{tpu_custom_call.1} parent=11 // pred_fallthru
          _
        // Predicated region
        $region29: #{tpu_custom_call.1} parent=11 // pred_check
          %p397 = pneg %p213
        $region30: #{tpu_custom_call.1} parent=11 // pred_check_branch
          %399 = sbr.rel (%p397) target = $region32
        $region31: #{tpu_custom_call.1} parent=11 // pred_region
          %s401 = ssub.s32 16384, 16384
          %402 = vsyncadd [#allocation11], %s401
          %s403 = sshll.u32 [#allocation12], 4
          %s404 = int_to_ptr.vmem [resolvable:$true] %s403
          %409 = dma.hbm_to_vmem [thread:$0]  %s7, 16384, %s404, [#allocation11], 256, 256, 16
        $region32: #{tpu_custom_call.1} parent=11 // pred_fallthru
          _
        // Predicated region
        $region33: #{tpu_custom_call.1} parent=11 // pred_check
          %p410 = pneg %p234
        $region34: #{tpu_custom_call.1} parent=11 // pred_check_branch
          %412 = sbr.rel (%p410) target = $region36
        $region35: #{tpu_custom_call.1} parent=11 // pred_region
          _
        $region36: #{tpu_custom_call.1} parent=11 // pred_fallthru
          _
        // Predicated region
        $region37: #{tpu_custom_call.1} parent=11 // pred_check
          %p413 = pneg %p255
        $region38: #{tpu_custom_call.1} parent=11 // pred_check_branch
          %415 = sbr.rel (%p413) target = $region40
        $region39: #{tpu_custom_call.1} parent=11 // pred_region
          %s417 = ssub.s32 16384, 16384
          %418 = vsyncadd [#allocation14], %s417
          %s419 = sshll.u32 [#allocation13], 4
          %s420 = int_to_ptr.vmem [resolvable:$true] %s419
          %425 = dma.hbm_to_vmem [thread:$0]  %s9, 16384, %s420, [#allocation14], 256, 256, 16
        $region40: #{tpu_custom_call.1} parent=11 // pred_fallthru
          _
        // Predicated region
        $region41: #{tpu_custom_call.1} parent=11 // pred_check
          %p426 = pneg %p276
        $region42: #{tpu_custom_call.1} parent=11 // pred_check_branch
          %428 = sbr.rel (%p426) target = $region44
        $region43: #{tpu_custom_call.1} parent=11 // pred_region
          _
        $region44: #{tpu_custom_call.1} parent=11 // pred_fallthru
          _
        // Predicated region
        $region45: #{tpu_custom_call.1} parent=11 // pred_check
          %p429 = pneg %p297
        $region46: #{tpu_custom_call.1} parent=11 // pred_check_branch
          %431 = sbr.rel (%p429) target = $region48
        $region47: #{tpu_custom_call.1} parent=11 // pred_region
          %s433 = ssub.s32 16384, 16384
          %434 = vsyncadd [#allocation14], %s433
          %s435 = sshll.u32 [#allocation15], 4
          %s436 = int_to_ptr.vmem [resolvable:$true] %s435
          %441 = dma.hbm_to_vmem [thread:$0]  %s11, 16384, %s436, [#allocation14], 256, 256, 16
        $region48: #{tpu_custom_call.1} parent=11 // pred_fallthru
          _
        // Predicated region
        $region49: #{tpu_custom_call.1} parent=11 // pred_check
          %p442 = pneg %p318
        $region50: #{tpu_custom_call.1} parent=11 // pred_check_branch
          %444 = sbr.rel (%p442) target = $region52
        $region51: #{tpu_custom_call.1} parent=11 // pred_region
          _
        $region52: #{tpu_custom_call.1} parent=11 // pred_fallthru
          _
      $region12: #{tpu_custom_call.1} parent=5 // pred_fallthru
        _
      %p445 = scmp.lt.s32.totalorder %s30, 2
      // Predicated region
      $region53: #{tpu_custom_call.1} parent=5 // pred_check
        %p446 = pneg %p445
      $region54: #{tpu_custom_call.1} parent=5 // pred_check_branch
        %448 = sbr.rel (%p446) target = $region56
      $region55: #{tpu_custom_call.1} parent=5 // pred_region
        // Predicated region
        $region57: #{tpu_custom_call.1} parent=55 // pred_check
          %p449 = pneg %p50
        $region58: #{tpu_custom_call.1} parent=55 // pred_check_branch
          %451 = sbr.rel (%p449) target = $region60
        $region59: #{tpu_custom_call.1} parent=55 // pred_region
          %s452 = sand.u32 %s40, 1
          %s453 = scalar_lea.sflag [#allocation4], %s452
          %s454 = sand.u32 %s40, 1
          %s455 = smul.addr %s454, 256
          %s456 = scalar_lea.vmem [#allocation3], %s455
          %s458 = ssub.s32 4096, 4096
          %459 = vsyncadd %s453, %s458
          %s460 = smul.addr %s30, 32
          %s461 = smul.addr %s460, 128
          %s462 = scalar_lea.hbm %s0, %s461
          %s463 = sshll.u32 %s456, 4
          %s464 = int_to_ptr.vmem [resolvable:$true] %s463
          %469 = dma.hbm_to_vmem [thread:$0]  %s462, 4096, %s464, %s453, 512, 512, 32
        $region60: #{tpu_custom_call.1} parent=55 // pred_fallthru
          _
        // Predicated region
        $region61: #{tpu_custom_call.1} parent=55 // pred_check
          %p470 = pneg %p76
        $region62: #{tpu_custom_call.1} parent=55 // pred_check_branch
          %472 = sbr.rel (%p470) target = $region64
        $region63: #{tpu_custom_call.1} parent=55 // pred_region
          %p473 = scmp.lt.s32.totalorder %s30, 1
          %s474 = scalar_select %p473, %s30, 1
          %s475 = smul.addr %s474, 8
          %s476 = smul.addr %s475, 8
          %s477 = scalar_lea.vmem %s1, %s476
        $region64: #{tpu_custom_call.1} parent=55 // pred_fallthru
          _
        // Predicated region
        $region65: #{tpu_custom_call.1} parent=55 // pred_check
          %p478 = pneg %p102
        $region66: #{tpu_custom_call.1} parent=55 // pred_check_branch
          %480 = sbr.rel (%p478) target = $region68
        $region67: #{tpu_custom_call.1} parent=55 // pred_region
          %p481 = scmp.lt.s32.totalorder %s30, 1
          %s482 = scalar_select %p481, %s30, 1
          %s483 = smul.addr %s482, 4
          %s484 = smul.addr %s483, 8
          %s485 = scalar_lea.vmem %s2, %s484
        $region68: #{tpu_custom_call.1} parent=55 // pred_fallthru
          _
      $region56: #{tpu_custom_call.1} parent=5 // pred_fallthru
        _
      %p486 = scmp.le.s32.totalorder 1, %s30
      %p487 = scmp.lt.s32.totalorder %s30, 3
      %p488 = pnand %p486, %p487
      %p489 = pneg %p488
      // Predicated region
      $region69: #{tpu_custom_call.1} parent=5 // pred_check
        _
      $region70: #{tpu_custom_call.1} parent=5 // pred_check_branch
        %491 = sbr.rel (%p488) target = $region72
      $region71: #{tpu_custom_call.1} parent=5 // pred_region
        %s492 = ssub.s32 %s30, 1
        %s493 = sand.u32 %s43, 1
        %s494 = scalar_lea.sflag [#allocation4], %s493
        %s495 = sand.u32 %s43, 1
        %s496 = smul.addr %s495, 256
        %s497 = scalar_lea.vmem [#allocation3], %s496
        // Predicated region
        $region73: #{tpu_custom_call.1} parent=71 // pred_check
          %p498 = pneg %p56
        $region74: #{tpu_custom_call.1} parent=71 // pred_check_branch
          %500 = sbr.rel (%p498) target = $region76
        $region75: #{tpu_custom_call.1} parent=71 // pred_region
          %501 = dma.done %s494, 4096
        $region76: #{tpu_custom_call.1} parent=71 // pred_fallthru
          _
        // Predicated region
        $region77: #{tpu_custom_call.1} parent=71 // pred_check
          %p502 = pneg %p129
        $region78: #{tpu_custom_call.1} parent=71 // pred_check_branch
          %504 = sbr.rel (%p502) target = $region80
        $region79: #{tpu_custom_call.1} parent=71 // pred_region
          %505 = dma.done [#allocation6], 64
        $region80: #{tpu_custom_call.1} parent=71 // pred_fallthru
          _
        // Predicated region
        $region81: #{tpu_custom_call.1} parent=71 // pred_check
          %p506 = pneg %p150
        $region82: #{tpu_custom_call.1} parent=71 // pred_check_branch
          %508 = sbr.rel (%p506) target = $region84
        $region83: #{tpu_custom_call.1} parent=71 // pred_region
          %509 = dma.done [#allocation9], 16
        $region84: #{tpu_custom_call.1} parent=71 // pred_fallthru
          _
        // Predicated region
        $region85: #{tpu_custom_call.1} parent=71 // pred_check
          %p510 = pneg %p192
        $region86: #{tpu_custom_call.1} parent=71 // pred_check_branch
          %512 = sbr.rel (%p510) target = $region88
        $region87: #{tpu_custom_call.1} parent=71 // pred_region
          %513 = dma.done [#allocation11], 32768
        $region88: #{tpu_custom_call.1} parent=71 // pred_fallthru
          _
        // Predicated region
        $region89: #{tpu_custom_call.1} parent=71 // pred_check
          %p514 = pneg %p213
        $region90: #{tpu_custom_call.1} parent=71 // pred_check_branch
          %516 = sbr.rel (%p514) target = $region92
        $region91: #{tpu_custom_call.1} parent=71 // pred_region
          %517 = dma.done [#allocation11], 16384
        $region92: #{tpu_custom_call.1} parent=71 // pred_fallthru
          _
        // Predicated region
        $region93: #{tpu_custom_call.1} parent=71 // pred_check
          %p518 = pneg %p255
        $region94: #{tpu_custom_call.1} parent=71 // pred_check_branch
          %520 = sbr.rel (%p518) target = $region96
        $region95: #{tpu_custom_call.1} parent=71 // pred_region
          %521 = dma.done [#allocation14], 16384
        $region96: #{tpu_custom_call.1} parent=71 // pred_fallthru
          _
        // Predicated region
        $region97: #{tpu_custom_call.1} parent=71 // pred_check
          %p522 = pneg %p297
        $region98: #{tpu_custom_call.1} parent=71 // pred_check_branch
          %524 = sbr.rel (%p522) target = $region100
        $region99: #{tpu_custom_call.1} parent=71 // pred_region
          %525 = dma.done [#allocation14], 16384
        $region100: #{tpu_custom_call.1} parent=71 // pred_fallthru
          _
        %526 = sfence
        %s527 = sand.u32 %s43, 1
        %s528 = scalar_lea.sflag [#allocation4], %s527
        %s529 = sand.u32 %s43, 1
        %s530 = smul.addr %s529, 256
        %s531 = scalar_lea.vmem [#allocation3], %s530
        %p532 = pneg %p56
        %p533 = pneg %p53
        %p534 = scmp.lt.s32.totalorder %s35, 1
        %s535 = scalar_select %p534, %s35, 1
        %s536 = smul.addr %s535, 8
        %s537 = smul.addr %s536, 8
        %s538 = scalar_lea.vmem %s1, %s537
        %p539 = pneg %p82
        %p540 = pneg %p79
        %p541 = scmp.lt.s32.totalorder %s35, 1
        %s542 = scalar_select %p541, %s35, 1
        %s543 = smul.addr %s542, 4
        %s544 = smul.addr %s543, 8
        %s545 = scalar_lea.vmem %s2, %s544
        %p546 = pneg %p108
        %p547 = pneg %p105
        %p548 = pneg %p129
        %p549 = pneg %p126
        %p550 = pneg %p150
        %p551 = pneg %p147
        %p552 = pneg %p171
        %p553 = pneg %p168
        %p554 = pneg %p192
        %p555 = pneg %p189
        %p556 = pneg %p213
        %p557 = pneg %p210
        %p558 = pneg %p234
        %p559 = pneg %p231
        %p560 = pneg %p255
        %p561 = pneg %p252
        %p562 = pneg %p276
        %p563 = pneg %p273
        %p564 = pneg %p297
        %p565 = pneg %p294
        %p566 = pneg %p318
        %p567 = pneg %p315
        %p568 = pneg %p344
        %p569 = pneg %p341
        %s570 = sand.u32 %s331, 1
        %s571 = scalar_lea.sflag [#allocation5], %s570
        %s572 = sand.u32 %s331, 1
        %s573 = smul.addr %s572, 128
        %s574 = scalar_lea.vmem [#allocation16], %s573
        %p575 = scmp.lt.s32.totalorder %s35, 1
        %s576 = scalar_select %p575, %s35, 1
        %s577 = smul.addr %s576, 8
        %s578 = smul.addr %s577, 8
        %s579 = scalar_lea.vmem %s1, %s578
        %p580 = scmp.lt.s32.totalorder %s35, 1
        %s581 = scalar_select %p580, %s35, 1
        %s582 = smul.addr %s581, 4
        %s583 = smul.addr %s582, 8
        %s584 = scalar_lea.vmem %s2, %s583
        %v585 = vld [vmem:[%s497] sm:$0xff]
        %v586 = vld [vmem:[%s497 + $0x8] sm:$0xff]
        %v587 = vld [vmem:[%s497 + $0x10] sm:$0xff]
        %v588 = vld [vmem:[%s497 + $0x18] sm:$0xff]
        %v589 = vld [vmem:[%s497 + $0x20] sm:$0xff]
        %v590 = vld [vmem:[%s497 + $0x28] sm:$0xff]
        %v591 = vld [vmem:[%s497 + $0x30] sm:$0xff]
        %v592 = vld [vmem:[%s497 + $0x38] sm:$0xff]
        %v593 = vld [vmem:[%s497 + $0x40] sm:$0xff]
        %v594 = vld [vmem:[%s497 + $0x48] sm:$0xff]
        %v595 = vld [vmem:[%s497 + $0x50] sm:$0xff]
        %v596 = vld [vmem:[%s497 + $0x58] sm:$0xff]
        %v597 = vld [vmem:[%s497 + $0x60] sm:$0xff]
        %v598 = vld [vmem:[%s497 + $0x68] sm:$0xff]
        %v599 = vld [vmem:[%s497 + $0x70] sm:$0xff]
        %v600 = vld [vmem:[%s497 + $0x78] sm:$0xff]
        %v601 = vld [vmem:[%s497 + $0x80] sm:$0xff]
        %v602 = vld [vmem:[%s497 + $0x88] sm:$0xff]
        %v603 = vld [vmem:[%s497 + $0x90] sm:$0xff]
        %v604 = vld [vmem:[%s497 + $0x98] sm:$0xff]
        %v605 = vld [vmem:[%s497 + $0xa0] sm:$0xff]
        %v606 = vld [vmem:[%s497 + $0xa8] sm:$0xff]
        %v607 = vld [vmem:[%s497 + $0xb0] sm:$0xff]
        %v608 = vld [vmem:[%s497 + $0xb8] sm:$0xff]
        %v609 = vld [vmem:[%s497 + $0xc0] sm:$0xff]
        %v610 = vld [vmem:[%s497 + $0xc8] sm:$0xff]
        %v611 = vld [vmem:[%s497 + $0xd0] sm:$0xff]
        %v612 = vld [vmem:[%s497 + $0xd8] sm:$0xff]
        %v613 = vld [vmem:[%s497 + $0xe0] sm:$0xff]
        %v614 = vld [vmem:[%s497 + $0xe8] sm:$0xff]
        %v615 = vld [vmem:[%s497 + $0xf0] sm:$0xff]
        %v616 = vld [vmem:[%s497 + $0xf8] sm:$0xff]
        %v617 = vld [vmem:[%s579] sm:$0xff]
        %v618 = vld [vmem:[%s579 + $0x8] sm:$0xff]
        %v619 = vld [vmem:[%s579 + $0x10] sm:$0xff]
        %v620 = vld [vmem:[%s579 + $0x18] sm:$0xff]
        %v621 = vld [vmem:[%s579 + $0x20] sm:$0xff]
        %v622 = vld [vmem:[%s579 + $0x28] sm:$0xff]
        %v623 = vld [vmem:[%s579 + $0x30] sm:$0xff]
        %v624 = vld [vmem:[%s579 + $0x38] sm:$0xff]
        %vm625 = vcmask 64512
        %v626 = vsel %vm625, %v617, -inf
        %v627 = vsel %vm625, %v618, -inf
        %v628 = vmax.f32 %v626, %v627
        %v629 = vrot.slane %v628, 4
        %v630 = vmax.f32 %v628, %v629
        %v631 = vrot.slane %v630, 2
        %v632 = vmax.f32 %v630, %v631
        %v633 = vrot.slane %v632, 1
        %v634 = vmax.f32 %v632, %v633
        %v635 = vsel %vm625, %v619, -inf
        %v636 = vsel %vm625, %v620, -inf
        %v637 = vmax.f32 %v635, %v636
        %v638 = vrot.slane %v637, 4
        %v639 = vmax.f32 %v637, %v638
        %v640 = vrot.slane %v639, 2
        %v641 = vmax.f32 %v639, %v640
        %v642 = vrot.slane %v641, 1
        %v643 = vmax.f32 %v641, %v642
        %v644 = vsel %vm625, %v621, -inf
        %v645 = vsel %vm625, %v622, -inf
        %v646 = vmax.f32 %v644, %v645
        %v647 = vrot.slane %v646, 4
        %v648 = vmax.f32 %v646, %v647
        %v649 = vrot.slane %v648, 2
        %v650 = vmax.f32 %v648, %v649
        %v651 = vrot.slane %v650, 1
        %v652 = vmax.f32 %v650, %v651
        %v653 = vsel %vm625, %v623, -inf
        %v654 = vsel %vm625, %v624, -inf
        %v655 = vmax.f32 %v653, %v654
        %v656 = vrot.slane %v655, 4
        %v657 = vmax.f32 %v655, %v656
        %v658 = vrot.slane %v657, 2
        %v659 = vmax.f32 %v657, %v658
        %v660 = vrot.slane %v659, 1
        %v661 = vmax.f32 %v659, %v660
        %v662 = vsub.f32 %v617, %v634
        %v663 = vsub.f32 %v618, %v634
        %v664 = vsub.f32 %v619, %v643
        %v665 = vsub.f32 %v620, %v643
        %v666 = vsub.f32 %v621, %v652
        %v667 = vsub.f32 %v622, %v652
        %v668 = vsub.f32 %v623, %v661
        %v669 = vsub.f32 %v624, %v661
        %v670 = vmul.f32 %v662, 1.442695
        %v671 = vpow.pop %v670
        %v672 = vmul.f32 %v663, 1.442695
        %v673 = vpow.pop %v672
        %v674 = vmul.f32 %v664, 1.442695
        %v675 = vpow.pop %v674
        %v676 = vmul.f32 %v665, 1.442695
        %v677 = vpow.pop %v676
        %v678 = vmul.f32 %v666, 1.442695
        %v679 = vpow.pop %v678
        %v680 = vmul.f32 %v667, 1.442695
        %v681 = vpow.pop %v680
        %v682 = vmul.f32 %v668, 1.442695
        %v683 = vpow.pop %v682
        %v684 = vmul.f32 %v669, 1.442695
        %v685 = vpow.pop %v684
        %v686 = vsel %vm625, %v671, 0.0
        %v687 = vsel %vm625, %v673, 0.0
        %v688 = vadd.f32 %v686, %v687
        %v689 = vrot.slane %v688, 4
        %v690 = vadd.f32 %v688, %v689
        %v691 = vrot.slane %v690, 2
        %v692 = vadd.f32 %v690, %v691
        %v693 = vrot.slane %v692, 1
        %v694 = vadd.f32 %v692, %v693
        %v695 = vsel %vm625, %v675, 0.0
        %v696 = vsel %vm625, %v677, 0.0
        %v697 = vadd.f32 %v695, %v696
        %v698 = vrot.slane %v697, 4
        %v699 = vadd.f32 %v697, %v698
        %v700 = vrot.slane %v699, 2
        %v701 = vadd.f32 %v699, %v700
        %v702 = vrot.slane %v701, 1
        %v703 = vadd.f32 %v701, %v702
        %v704 = vsel %vm625, %v679, 0.0
        %v705 = vsel %vm625, %v681, 0.0
        %v706 = vadd.f32 %v704, %v705
        %v707 = vrot.slane %v706, 4
        %v708 = vadd.f32 %v706, %v707
        %v709 = vrot.slane %v708, 2
        %v710 = vadd.f32 %v708, %v709
        %v711 = vrot.slane %v710, 1
        %v712 = vadd.f32 %v710, %v711
        %v713 = vsel %vm625, %v683, 0.0
        %v714 = vsel %vm625, %v685, 0.0
        %v715 = vadd.f32 %v713, %v714
        %v716 = vrot.slane %v715, 4
        %v717 = vadd.f32 %v715, %v716
        %v718 = vrot.slane %v717, 2
        %v719 = vadd.f32 %v717, %v718
        %v720 = vrot.slane %v719, 1
        %v721 = vadd.f32 %v719, %v720
        %v722 = vrcp.pop %v694
        %v723 = vrcp.pop %v703
        %v724 = vrcp.pop %v712
        %v725 = vrcp.pop %v721
        %v726 = vmul.f32 %v671, %v722
        %v727 = vmul.f32 %v673, %v722
        %v728 = vmul.f32 %v675, %v723
        %v729 = vmul.f32 %v677, %v723
        %v730 = vmul.f32 %v679, %v724
        %v731 = vmul.f32 %v681, %v724
        %v732 = vmul.f32 %v683, %v725
        %v733 = vmul.f32 %v685, %v725
        %734 = vxpose.xlu0.b32.start [1/16] %v726, 128
        %735 = vxpose.xlu0.b32.cont [2/16] %v727, 128
        %736 = vxpose.xlu0.b32.cont [3/16] 0.0, 128
        %737 = vxpose.xlu0.b32.cont [4/16] 0.0, 128
        %738 = vxpose.xlu0.b32.cont [5/16] 0.0, 128
        %739 = vxpose.xlu0.b32.cont [6/16] 0.0, 128
        %740 = vxpose.xlu0.b32.cont [7/16] 0.0, 128
        %741 = vxpose.xlu0.b32.cont [8/16] 0.0, 128
        %742 = vxpose.xlu0.b32.cont [9/16] 0.0, 128
        %743 = vxpose.xlu0.b32.cont [10/16] 0.0, 128
        %744 = vxpose.xlu0.b32.cont [11/16] 0.0, 128
        %745 = vxpose.xlu0.b32.cont [12/16] 0.0, 128
        %746 = vxpose.xlu0.b32.cont [13/16] 0.0, 128
        %747 = vxpose.xlu0.b32.cont [14/16] 0.0, 128
        %748 = vxpose.xlu0.b32.cont [15/16] 0.0, 128
        %749 = vxpose.xlu0.b32.end [16/16] 0.0, 128
        %v750 = vpop.trf.xlu0
        %v751 = vpop.trf.xlu0
        %v752 = vpop.trf.xlu0
        %v753 = vpop.trf.xlu0
        %v754 = vpop.trf.xlu0
        %v755 = vpop.trf.xlu0
        %v756 = vpop.trf.xlu0
        %v757 = vpop.trf.xlu0
        %v758 = vpop.trf.xlu0
        %v759 = vpop.trf.xlu0
        %v760 = vpop.trf.xlu0
        %v761 = vpop.trf.xlu0
        %v762 = vpop.trf.xlu0
        %v763 = vpop.trf.xlu0
        %v764 = vpop.trf.xlu0
        %v765 = vpop.trf.xlu0
        %vm766 = vcmask 130048
        %v768 = vsel %vm766, %v750, 0
        %770 = vmatprep.subr.mxu0 0.0
        %771 = vmatpush1.msra.mxu0 0.0
        %772 = vmatprep.subr.mxu0 0.0
        %773 = vmatpush1.msra.mxu0 0.0
        %774 = vmatprep.subr.mxu0 0.0
        %775 = vmatpush1.msra.mxu0 0.0
        %776 = vmatprep.subr.mxu0 0.0
        %777 = vmatpush1.msra.mxu0 0.0
        %778 = vmatprep.subr.mxu0 0.0
        %779 = vmatpush1.msra.mxu0 0.0
        %780 = vmatprep.subr.mxu0 0.0
        %781 = vmatpush1.msra.mxu0 0.0
        %782 = vmatprep.subr.mxu0 0.0
        %783 = vmatpush1.msra.mxu0 0.0
        %784 = vmatprep.subr.mxu0 0.0
        %785 = vmatpush1.msra.mxu0 0.0
        %786 = vmatprep.subr.mxu0 0.0
        %787 = vmatpush1.msra.mxu0 0.0
        %788 = vmatprep.subr.mxu0 0.0
        %789 = vmatpush1.msra.mxu0 0.0
        %790 = vmatprep.subr.mxu0 0.0
        %791 = vmatpush1.msra.mxu0 0.0
        %792 = vmatprep.subr.mxu0 0.0
        %793 = vmatpush1.msra.mxu0 0.0
        %794 = vmatprep.subr.mxu0 0.0
        %795 = vmatpush1.msra.mxu0 0.0
        %796 = vmatprep.subr.mxu0 0.0
        %797 = vmatpush1.msra.mxu0 0.0
        %798 = vmatprep.subr.mxu0 %v590
        %799 = vmatpush1.msra.mxu0 %v589
        %800 = vmatprep.subr.mxu0 %v586
        %801 = vmatpush1.msra.mxu0 %v585
        %802 = vmatprep.subr.mxu0 0.0
        %803 = vmatpush2.msra.mxu0 0.0
        %804 = vmatprep.subr.mxu0 0.0
        %805 = vmatpush2.msra.mxu0 0.0
        %806 = vmatprep.subr.mxu0 0.0
        %807 = vmatpush2.msra.mxu0 0.0
        %808 = vmatprep.subr.mxu0 0.0
        %809 = vmatpush2.msra.mxu0 0.0
        %810 = vmatprep.subr.mxu0 0.0
        %811 = vmatpush2.msra.mxu0 0.0
        %812 = vmatprep.subr.mxu0 0.0
        %813 = vmatpush2.msra.mxu0 0.0
        %814 = vmatprep.subr.mxu0 0.0
        %815 = vmatpush2.msra.mxu0 0.0
        %816 = vmatprep.subr.mxu0 0.0
        %817 = vmatpush2.msra.mxu0 0.0
        %818 = vmatprep.subr.mxu0 0.0
        %819 = vmatpush2.msra.mxu0 0.0
        %820 = vmatprep.subr.mxu0 0.0
        %821 = vmatpush2.msra.mxu0 0.0
        %822 = vmatprep.subr.mxu0 0.0
        %823 = vmatpush2.msra.mxu0 0.0
        %824 = vmatprep.subr.mxu0 0.0
        %825 = vmatpush2.msra.mxu0 0.0
        %826 = vmatprep.subr.mxu0 0.0
        %827 = vmatpush2.msra.mxu0 0.0
        %828 = vmatprep.subr.mxu0 0.0
        %829 = vmatpush2.msra.mxu0 0.0
        %830 = vmatprep.subr.mxu0 0.0
        %831 = vmatpush2.msra.mxu0 0.0
        %832 = vmatprep.subr.mxu0 0.0
        %833 = vmatpush2.msra.mxu0 0.0
        %834 = vmatprep.mubr.f32.mxu0 0.0
        %835 = vmatmul.mubr.f32.gmra.mxu0 %v768
        %v836 = vpop.f32.mrf.mxu0
        %v837 = vadd.f32 0.0, %v836
        %v838 = vpop.f32.mrf.mxu0
        %v839 = vadd.f32 0.0, %v838
        %840 = vdwg.mxu0
        %841 = vmatprep.subr.mxu0 0.0
        %842 = vmatpush1.msra.mxu0 0.0
        %843 = vmatprep.subr.mxu0 0.0
        %844 = vmatpush1.msra.mxu0 0.0
        %845 = vmatprep.subr.mxu0 0.0
        %846 = vmatpush1.msra.mxu0 0.0
        %847 = vmatprep.subr.mxu0 0.0
        %848 = vmatpush1.msra.mxu0 0.0
        %849 = vmatprep.subr.mxu0 0.0
        %850 = vmatpush1.msra.mxu0 0.0
        %851 = vmatprep.subr.mxu0 0.0
        %852 = vmatpush1.msra.mxu0 0.0
        %853 = vmatprep.subr.mxu0 0.0
        %854 = vmatpush1.msra.mxu0 0.0
        %855 = vmatprep.subr.mxu0 0.0
        %856 = vmatpush1.msra.mxu0 0.0
        %857 = vmatprep.subr.mxu0 0.0
        %858 = vmatpush1.msra.mxu0 0.0
        %859 = vmatprep.subr.mxu0 0.0
        %860 = vmatpush1.msra.mxu0 0.0
        %861 = vmatprep.subr.mxu0 0.0
        %862 = vmatpush1.msra.mxu0 0.0
        %863 = vmatprep.subr.mxu0 0.0
        %864 = vmatpush1.msra.mxu0 0.0
        %865 = vmatprep.subr.mxu0 0.0
        %866 = vmatpush1.msra.mxu0 0.0
        %867 = vmatprep.subr.mxu0 0.0
        %868 = vmatpush1.msra.mxu0 0.0
        %869 = vmatprep.subr.mxu0 %v592
        %870 = vmatpush1.msra.mxu0 %v591
        %871 = vmatprep.subr.mxu0 %v588
        %872 = vmatpush1.msra.mxu0 %v587
        %873 = vmatprep.subr.mxu0 0.0
        %874 = vmatpush2.msra.mxu0 0.0
        %875 = vmatprep.subr.mxu0 0.0
        %876 = vmatpush2.msra.mxu0 0.0
        %877 = vmatprep.subr.mxu0 0.0
        %878 = vmatpush2.msra.mxu0 0.0
        %879 = vmatprep.subr.mxu0 0.0
        %880 = vmatpush2.msra.mxu0 0.0
        %881 = vmatprep.subr.mxu0 0.0
        %882 = vmatpush2.msra.mxu0 0.0
        %883 = vmatprep.subr.mxu0 0.0
        %884 = vmatpush2.msra.mxu0 0.0
        %885 = vmatprep.subr.mxu0 0.0
        %886 = vmatpush2.msra.mxu0 0.0
        %887 = vmatprep.subr.mxu0 0.0
        %888 = vmatpush2.msra.mxu0 0.0
        %889 = vmatprep.subr.mxu0 0.0
        %890 = vmatpush2.msra.mxu0 0.0
        %891 = vmatprep.subr.mxu0 0.0
        %892 = vmatpush2.msra.mxu0 0.0
        %893 = vmatprep.subr.mxu0 0.0
        %894 = vmatpush2.msra.mxu0 0.0
        %895 = vmatprep.subr.mxu0 0.0
        %896 = vmatpush2.msra.mxu0 0.0
        %897 = vmatprep.subr.mxu0 0.0
        %898 = vmatpush2.msra.mxu0 0.0
        %899 = vmatprep.subr.mxu0 0.0
        %900 = vmatpush2.msra.mxu0 0.0
        %901 = vmatprep.subr.mxu0 0.0
        %902 = vmatpush2.msra.mxu0 0.0
        %903 = vmatprep.subr.mxu0 0.0
        %904 = vmatpush2.msra.mxu0 0.0
        %905 = vmatprep.mubr.f32.mxu0 0.0
        %906 = vmatmul.mubr.f32.gmra.mxu0 %v768
        %v907 = vpop.f32.mrf.mxu0
        %v908 = vadd.f32 0.0, %v907
        %v909 = vpop.f32.mrf.mxu0
        %v910 = vadd.f32 0.0, %v909
        %911 = vdwg.mxu0
        %912 = vxpose.xlu0.b32.start [1/16] %v728, 128
        %913 = vxpose.xlu0.b32.cont [2/16] %v729, 128
        %914 = vxpose.xlu0.b32.cont [3/16] 0.0, 128
        %915 = vxpose.xlu0.b32.cont [4/16] 0.0, 128
        %916 = vxpose.xlu0.b32.cont [5/16] 0.0, 128
        %917 = vxpose.xlu0.b32.cont [6/16] 0.0, 128
        %918 = vxpose.xlu0.b32.cont [7/16] 0.0, 128
        %919 = vxpose.xlu0.b32.cont [8/16] 0.0, 128
        %920 = vxpose.xlu0.b32.cont [9/16] 0.0, 128
        %921 = vxpose.xlu0.b32.cont [10/16] 0.0, 128
        %922 = vxpose.xlu0.b32.cont [11/16] 0.0, 128
        %923 = vxpose.xlu0.b32.cont [12/16] 0.0, 128
        %924 = vxpose.xlu0.b32.cont [13/16] 0.0, 128
        %925 = vxpose.xlu0.b32.cont [14/16] 0.0, 128
        %926 = vxpose.xlu0.b32.cont [15/16] 0.0, 128
        %927 = vxpose.xlu0.b32.end [16/16] 0.0, 128
        %v928 = vpop.trf.xlu0
        %v929 = vpop.trf.xlu0
        %v930 = vpop.trf.xlu0
        %v931 = vpop.trf.xlu0
        %v932 = vpop.trf.xlu0
        %v933 = vpop.trf.xlu0
        %v934 = vpop.trf.xlu0
        %v935 = vpop.trf.xlu0
        %v936 = vpop.trf.xlu0
        %v937 = vpop.trf.xlu0
        %v938 = vpop.trf.xlu0
        %v939 = vpop.trf.xlu0
        %v940 = vpop.trf.xlu0
        %v941 = vpop.trf.xlu0
        %v942 = vpop.trf.xlu0
        %v943 = vpop.trf.xlu0
        %v945 = vsel %vm766, %v928, 0
        %947 = vmatprep.subr.mxu0 0.0
        %948 = vmatpush1.msra.mxu0 0.0
        %949 = vmatprep.subr.mxu0 0.0
        %950 = vmatpush1.msra.mxu0 0.0
        %951 = vmatprep.subr.mxu0 0.0
        %952 = vmatpush1.msra.mxu0 0.0
        %953 = vmatprep.subr.mxu0 0.0
        %954 = vmatpush1.msra.mxu0 0.0
        %955 = vmatprep.subr.mxu0 0.0
        %956 = vmatpush1.msra.mxu0 0.0
        %957 = vmatprep.subr.mxu0 0.0
        %958 = vmatpush1.msra.mxu0 0.0
        %959 = vmatprep.subr.mxu0 0.0
        %960 = vmatpush1.msra.mxu0 0.0
        %961 = vmatprep.subr.mxu0 0.0
        %962 = vmatpush1.msra.mxu0 0.0
        %963 = vmatprep.subr.mxu0 0.0
        %964 = vmatpush1.msra.mxu0 0.0
        %965 = vmatprep.subr.mxu0 0.0
        %966 = vmatpush1.msra.mxu0 0.0
        %967 = vmatprep.subr.mxu0 0.0
        %968 = vmatpush1.msra.mxu0 0.0
        %969 = vmatprep.subr.mxu0 0.0
        %970 = vmatpush1.msra.mxu0 0.0
        %971 = vmatprep.subr.mxu0 0.0
        %972 = vmatpush1.msra.mxu0 0.0
        %973 = vmatprep.subr.mxu0 0.0
        %974 = vmatpush1.msra.mxu0 0.0
        %975 = vmatprep.subr.mxu0 %v598
        %976 = vmatpush1.msra.mxu0 %v597
        %977 = vmatprep.subr.mxu0 %v594
        %978 = vmatpush1.msra.mxu0 %v593
        %979 = vmatprep.subr.mxu0 0.0
        %980 = vmatpush2.msra.mxu0 0.0
        %981 = vmatprep.subr.mxu0 0.0
        %982 = vmatpush2.msra.mxu0 0.0
        %983 = vmatprep.subr.mxu0 0.0
        %984 = vmatpush2.msra.mxu0 0.0
        %985 = vmatprep.subr.mxu0 0.0
        %986 = vmatpush2.msra.mxu0 0.0
        %987 = vmatprep.subr.mxu0 0.0
        %988 = vmatpush2.msra.mxu0 0.0
        %989 = vmatprep.subr.mxu0 0.0
        %990 = vmatpush2.msra.mxu0 0.0
        %991 = vmatprep.subr.mxu0 0.0
        %992 = vmatpush2.msra.mxu0 0.0
        %993 = vmatprep.subr.mxu0 0.0
        %994 = vmatpush2.msra.mxu0 0.0
        %995 = vmatprep.subr.mxu0 0.0
        %996 = vmatpush2.msra.mxu0 0.0
        %997 = vmatprep.subr.mxu0 0.0
        %998 = vmatpush2.msra.mxu0 0.0
        %999 = vmatprep.subr.mxu0 0.0
        %1000 = vmatpush2.msra.mxu0 0.0
        %1001 = vmatprep.subr.mxu0 0.0
        %1002 = vmatpush2.msra.mxu0 0.0
        %1003 = vmatprep.subr.mxu0 0.0
        %1004 = vmatpush2.msra.mxu0 0.0
        %1005 = vmatprep.subr.mxu0 0.0
        %1006 = vmatpush2.msra.mxu0 0.0
        %1007 = vmatprep.subr.mxu0 0.0
        %1008 = vmatpush2.msra.mxu0 0.0
        %1009 = vmatprep.subr.mxu0 0.0
        %1010 = vmatpush2.msra.mxu0 0.0
        %1011 = vmatprep.mubr.f32.mxu0 0.0
        %1012 = vmatmul.mubr.f32.gmra.mxu0 %v945
        %v1013 = vpop.f32.mrf.mxu0
        %v1014 = vadd.f32 0.0, %v1013
        %v1015 = vpop.f32.mrf.mxu0
        %v1016 = vadd.f32 0.0, %v1015
        %1017 = vdwg.mxu0
        %1018 = vmatprep.subr.mxu0 0.0
        %1019 = vmatpush1.msra.mxu0 0.0
        %1020 = vmatprep.subr.mxu0 0.0
        %1021 = vmatpush1.msra.mxu0 0.0
        %1022 = vmatprep.subr.mxu0 0.0
        %1023 = vmatpush1.msra.mxu0 0.0
        %1024 = vmatprep.subr.mxu0 0.0
        %1025 = vmatpush1.msra.mxu0 0.0
        %1026 = vmatprep.subr.mxu0 0.0
        %1027 = vmatpush1.msra.mxu0 0.0
        %1028 = vmatprep.subr.mxu0 0.0
        %1029 = vmatpush1.msra.mxu0 0.0
        %1030 = vmatprep.subr.mxu0 0.0
        %1031 = vmatpush1.msra.mxu0 0.0
        %1032 = vmatprep.subr.mxu0 0.0
        %1033 = vmatpush1.msra.mxu0 0.0
        %1034 = vmatprep.subr.mxu0 0.0
        %1035 = vmatpush1.msra.mxu0 0.0
        %1036 = vmatprep.subr.mxu0 0.0
        %1037 = vmatpush1.msra.mxu0 0.0
        %1038 = vmatprep.subr.mxu0 0.0
        %1039 = vmatpush1.msra.mxu0 0.0
        %1040 = vmatprep.subr.mxu0 0.0
        %1041 = vmatpush1.msra.mxu0 0.0
        %1042 = vmatprep.subr.mxu0 0.0
        %1043 = vmatpush1.msra.mxu0 0.0
        %1044 = vmatprep.subr.mxu0 0.0
        %1045 = vmatpush1.msra.mxu0 0.0
        %1046 = vmatprep.subr.mxu0 %v600
        %1047 = vmatpush1.msra.mxu0 %v599
        %1048 = vmatprep.subr.mxu0 %v596
        %1049 = vmatpush1.msra.mxu0 %v595
        %1050 = vmatprep.subr.mxu0 0.0
        %1051 = vmatpush2.msra.mxu0 0.0
        %1052 = vmatprep.subr.mxu0 0.0
        %1053 = vmatpush2.msra.mxu0 0.0
        %1054 = vmatprep.subr.mxu0 0.0
        %1055 = vmatpush2.msra.mxu0 0.0
        %1056 = vmatprep.subr.mxu0 0.0
        %1057 = vmatpush2.msra.mxu0 0.0
        %1058 = vmatprep.subr.mxu0 0.0
        %1059 = vmatpush2.msra.mxu0 0.0
        %1060 = vmatprep.subr.mxu0 0.0
        %1061 = vmatpush2.msra.mxu0 0.0
        %1062 = vmatprep.subr.mxu0 0.0
        %1063 = vmatpush2.msra.mxu0 0.0
        %1064 = vmatprep.subr.mxu0 0.0
        %1065 = vmatpush2.msra.mxu0 0.0
        %1066 = vmatprep.subr.mxu0 0.0
        %1067 = vmatpush2.msra.mxu0 0.0
        %1068 = vmatprep.subr.mxu0 0.0
        %1069 = vmatpush2.msra.mxu0 0.0
        %1070 = vmatprep.subr.mxu0 0.0
        %1071 = vmatpush2.msra.mxu0 0.0
        %1072 = vmatprep.subr.mxu0 0.0
        %1073 = vmatpush2.msra.mxu0 0.0
        %1074 = vmatprep.subr.mxu0 0.0
        %1075 = vmatpush2.msra.mxu0 0.0
        %1076 = vmatprep.subr.mxu0 0.0
        %1077 = vmatpush2.msra.mxu0 0.0
        %1078 = vmatprep.subr.mxu0 0.0
        %1079 = vmatpush2.msra.mxu0 0.0
        %1080 = vmatprep.subr.mxu0 0.0
        %1081 = vmatpush2.msra.mxu0 0.0
        %1082 = vmatprep.mubr.f32.mxu0 0.0
        %1083 = vmatmul.mubr.f32.gmra.mxu0 %v945
        %v1084 = vpop.f32.mrf.mxu0
        %v1085 = vadd.f32 0.0, %v1084
        %v1086 = vpop.f32.mrf.mxu0
        %v1087 = vadd.f32 0.0, %v1086
        %1088 = vdwg.mxu0
        %1089 = vxpose.xlu0.b32.start [1/16] %v730, 128
        %1090 = vxpose.xlu0.b32.cont [2/16] %v731, 128
        %1091 = vxpose.xlu0.b32.cont [3/16] 0.0, 128
        %1092 = vxpose.xlu0.b32.cont [4/16] 0.0, 128
        %1093 = vxpose.xlu0.b32.cont [5/16] 0.0, 128
        %1094 = vxpose.xlu0.b32.cont [6/16] 0.0, 128
        %1095 = vxpose.xlu0.b32.cont [7/16] 0.0, 128
        %1096 = vxpose.xlu0.b32.cont [8/16] 0.0, 128
        %1097 = vxpose.xlu0.b32.cont [9/16] 0.0, 128
        %1098 = vxpose.xlu0.b32.cont [10/16] 0.0, 128
        %1099 = vxpose.xlu0.b32.cont [11/16] 0.0, 128
        %1100 = vxpose.xlu0.b32.cont [12/16] 0.0, 128
        %1101 = vxpose.xlu0.b32.cont [13/16] 0.0, 128
        %1102 = vxpose.xlu0.b32.cont [14/16] 0.0, 128
        %1103 = vxpose.xlu0.b32.cont [15/16] 0.0, 128
        %1104 = vxpose.xlu0.b32.end [16/16] 0.0, 128
        %v1105 = vpop.trf.xlu0
        %v1106 = vpop.trf.xlu0
        %v1107 = vpop.trf.xlu0
        %v1108 = vpop.trf.xlu0
        %v1109 = vpop.trf.xlu0
        %v1110 = vpop.trf.xlu0
        %v1111 = vpop.trf.xlu0
        %v1112 = vpop.trf.xlu0
        %v1113 = vpop.trf.xlu0
        %v1114 = vpop.trf.xlu0
        %v1115 = vpop.trf.xlu0
        %v1116 = vpop.trf.xlu0
        %v1117 = vpop.trf.xlu0
        %v1118 = vpop.trf.xlu0
        %v1119 = vpop.trf.xlu0
        %v1120 = vpop.trf.xlu0
        %v1122 = vsel %vm766, %v1105, 0
        %1124 = vmatprep.subr.mxu0 0.0
        %1125 = vmatpush1.msra.mxu0 0.0
        %1126 = vmatprep.subr.mxu0 0.0
        %1127 = vmatpush1.msra.mxu0 0.0
        %1128 = vmatprep.subr.mxu0 0.0
        %1129 = vmatpush1.msra.mxu0 0.0
        %1130 = vmatprep.subr.mxu0 0.0
        %1131 = vmatpush1.msra.mxu0 0.0
        %1132 = vmatprep.subr.mxu0 0.0
        %1133 = vmatpush1.msra.mxu0 0.0
        %1134 = vmatprep.subr.mxu0 0.0
        %1135 = vmatpush1.msra.mxu0 0.0
        %1136 = vmatprep.subr.mxu0 0.0
        %1137 = vmatpush1.msra.mxu0 0.0
        %1138 = vmatprep.subr.mxu0 0.0
        %1139 = vmatpush1.msra.mxu0 0.0
        %1140 = vmatprep.subr.mxu0 0.0
        %1141 = vmatpush1.msra.mxu0 0.0
        %1142 = vmatprep.subr.mxu0 0.0
        %1143 = vmatpush1.msra.mxu0 0.0
        %1144 = vmatprep.subr.mxu0 0.0
        %1145 = vmatpush1.msra.mxu0 0.0
        %1146 = vmatprep.subr.mxu0 0.0
        %1147 = vmatpush1.msra.mxu0 0.0
        %1148 = vmatprep.subr.mxu0 0.0
        %1149 = vmatpush1.msra.mxu0 0.0
        %1150 = vmatprep.subr.mxu0 0.0
        %1151 = vmatpush1.msra.mxu0 0.0
        %1152 = vmatprep.subr.mxu0 %v606
        %1153 = vmatpush1.msra.mxu0 %v605
        %1154 = vmatprep.subr.mxu0 %v602
        %1155 = vmatpush1.msra.mxu0 %v601
        %1156 = vmatprep.subr.mxu0 0.0
        %1157 = vmatpush2.msra.mxu0 0.0
        %1158 = vmatprep.subr.mxu0 0.0
        %1159 = vmatpush2.msra.mxu0 0.0
        %1160 = vmatprep.subr.mxu0 0.0
        %1161 = vmatpush2.msra.mxu0 0.0
        %1162 = vmatprep.subr.mxu0 0.0
        %1163 = vmatpush2.msra.mxu0 0.0
        %1164 = vmatprep.subr.mxu0 0.0
        %1165 = vmatpush2.msra.mxu0 0.0
        %1166 = vmatprep.subr.mxu0 0.0
        %1167 = vmatpush2.msra.mxu0 0.0
        %1168 = vmatprep.subr.mxu0 0.0
        %1169 = vmatpush2.msra.mxu0 0.0
        %1170 = vmatprep.subr.mxu0 0.0
        %1171 = vmatpush2.msra.mxu0 0.0
        %1172 = vmatprep.subr.mxu0 0.0
        %1173 = vmatpush2.msra.mxu0 0.0
        %1174 = vmatprep.subr.mxu0 0.0
        %1175 = vmatpush2.msra.mxu0 0.0
        %1176 = vmatprep.subr.mxu0 0.0
        %1177 = vmatpush2.msra.mxu0 0.0
        %1178 = vmatprep.subr.mxu0 0.0
        %1179 = vmatpush2.msra.mxu0 0.0
        %1180 = vmatprep.subr.mxu0 0.0
        %1181 = vmatpush2.msra.mxu0 0.0
        %1182 = vmatprep.subr.mxu0 0.0
        %1183 = vmatpush2.msra.mxu0 0.0
        %1184 = vmatprep.subr.mxu0 0.0
        %1185 = vmatpush2.msra.mxu0 0.0
        %1186 = vmatprep.subr.mxu0 0.0
        %1187 = vmatpush2.msra.mxu0 0.0
        %1188 = vmatprep.mubr.f32.mxu0 0.0
        %1189 = vmatmul.mubr.f32.gmra.mxu0 %v1122
        %v1190 = vpop.f32.mrf.mxu0
        %v1191 = vadd.f32 0.0, %v1190
        %v1192 = vpop.f32.mrf.mxu0
        %v1193 = vadd.f32 0.0, %v1192
        %1194 = vdwg.mxu0
        %1195 = vmatprep.subr.mxu0 0.0
        %1196 = vmatpush1.msra.mxu0 0.0
        %1197 = vmatprep.subr.mxu0 0.0
        %1198 = vmatpush1.msra.mxu0 0.0
        %1199 = vmatprep.subr.mxu0 0.0
        %1200 = vmatpush1.msra.mxu0 0.0
        %1201 = vmatprep.subr.mxu0 0.0
        %1202 = vmatpush1.msra.mxu0 0.0
        %1203 = vmatprep.subr.mxu0 0.0
        %1204 = vmatpush1.msra.mxu0 0.0
        %1205 = vmatprep.subr.mxu0 0.0
        %1206 = vmatpush1.msra.mxu0 0.0
        %1207 = vmatprep.subr.mxu0 0.0
        %1208 = vmatpush1.msra.mxu0 0.0
        %1209 = vmatprep.subr.mxu0 0.0
        %1210 = vmatpush1.msra.mxu0 0.0
        %1211 = vmatprep.subr.mxu0 0.0
        %1212 = vmatpush1.msra.mxu0 0.0
        %1213 = vmatprep.subr.mxu0 0.0
        %1214 = vmatpush1.msra.mxu0 0.0
        %1215 = vmatprep.subr.mxu0 0.0
        %1216 = vmatpush1.msra.mxu0 0.0
        %1217 = vmatprep.subr.mxu0 0.0
        %1218 = vmatpush1.msra.mxu0 0.0
        %1219 = vmatprep.subr.mxu0 0.0
        %1220 = vmatpush1.msra.mxu0 0.0
        %1221 = vmatprep.subr.mxu0 0.0
        %1222 = vmatpush1.msra.mxu0 0.0
        %1223 = vmatprep.subr.mxu0 %v608
        %1224 = vmatpush1.msra.mxu0 %v607
        %1225 = vmatprep.subr.mxu0 %v604
        %1226 = vmatpush1.msra.mxu0 %v603
        %1227 = vmatprep.subr.mxu0 0.0
        %1228 = vmatpush2.msra.mxu0 0.0
        %1229 = vmatprep.subr.mxu0 0.0
        %1230 = vmatpush2.msra.mxu0 0.0
        %1231 = vmatprep.subr.mxu0 0.0
        %1232 = vmatpush2.msra.mxu0 0.0
        %1233 = vmatprep.subr.mxu0 0.0
        %1234 = vmatpush2.msra.mxu0 0.0
        %1235 = vmatprep.subr.mxu0 0.0
        %1236 = vmatpush2.msra.mxu0 0.0
        %1237 = vmatprep.subr.mxu0 0.0
        %1238 = vmatpush2.msra.mxu0 0.0
        %1239 = vmatprep.subr.mxu0 0.0
        %1240 = vmatpush2.msra.mxu0 0.0
        %1241 = vmatprep.subr.mxu0 0.0
        %1242 = vmatpush2.msra.mxu0 0.0
        %1243 = vmatprep.subr.mxu0 0.0
        %1244 = vmatpush2.msra.mxu0 0.0
        %1245 = vmatprep.subr.mxu0 0.0
        %1246 = vmatpush2.msra.mxu0 0.0
        %1247 = vmatprep.subr.mxu0 0.0
        %1248 = vmatpush2.msra.mxu0 0.0
        %1249 = vmatprep.subr.mxu0 0.0
        %1250 = vmatpush2.msra.mxu0 0.0
        %1251 = vmatprep.subr.mxu0 0.0
        %1252 = vmatpush2.msra.mxu0 0.0
        %1253 = vmatprep.subr.mxu0 0.0
        %1254 = vmatpush2.msra.mxu0 0.0
        %1255 = vmatprep.subr.mxu0 0.0
        %1256 = vmatpush2.msra.mxu0 0.0
        %1257 = vmatprep.subr.mxu0 0.0
        %1258 = vmatpush2.msra.mxu0 0.0
        %1259 = vmatprep.mubr.f32.mxu0 0.0
        %1260 = vmatmul.mubr.f32.gmra.mxu0 %v1122
        %v1261 = vpop.f32.mrf.mxu0
        %v1262 = vadd.f32 0.0, %v1261
        %v1263 = vpop.f32.mrf.mxu0
        %v1264 = vadd.f32 0.0, %v1263
        %1265 = vdwg.mxu0
        %1266 = vxpose.xlu0.b32.start [1/16] %v732, 128
        %1267 = vxpose.xlu0.b32.cont [2/16] %v733, 128
        %1268 = vxpose.xlu0.b32.cont [3/16] 0.0, 128
        %1269 = vxpose.xlu0.b32.cont [4/16] 0.0, 128
        %1270 = vxpose.xlu0.b32.cont [5/16] 0.0, 128
        %1271 = vxpose.xlu0.b32.cont [6/16] 0.0, 128
        %1272 = vxpose.xlu0.b32.cont [7/16] 0.0, 128
        %1273 = vxpose.xlu0.b32.cont [8/16] 0.0, 128
        %1274 = vxpose.xlu0.b32.cont [9/16] 0.0, 128
        %1275 = vxpose.xlu0.b32.cont [10/16] 0.0, 128
        %1276 = vxpose.xlu0.b32.cont [11/16] 0.0, 128
        %1277 = vxpose.xlu0.b32.cont [12/16] 0.0, 128
        %1278 = vxpose.xlu0.b32.cont [13/16] 0.0, 128
        %1279 = vxpose.xlu0.b32.cont [14/16] 0.0, 128
        %1280 = vxpose.xlu0.b32.cont [15/16] 0.0, 128
        %1281 = vxpose.xlu0.b32.end [16/16] 0.0, 128
        %v1282 = vpop.trf.xlu0
        %v1283 = vpop.trf.xlu0
        %v1284 = vpop.trf.xlu0
        %v1285 = vpop.trf.xlu0
        %v1286 = vpop.trf.xlu0
        %v1287 = vpop.trf.xlu0
        %v1288 = vpop.trf.xlu0
        %v1289 = vpop.trf.xlu0
        %v1290 = vpop.trf.xlu0
        %v1291 = vpop.trf.xlu0
        %v1292 = vpop.trf.xlu0
        %v1293 = vpop.trf.xlu0
        %v1294 = vpop.trf.xlu0
        %v1295 = vpop.trf.xlu0
        %v1296 = vpop.trf.xlu0
        %v1297 = vpop.trf.xlu0
        %v1299 = vsel %vm766, %v1282, 0
        %1301 = vmatprep.subr.mxu0 0.0
        %1302 = vmatpush1.msra.mxu0 0.0
        %1303 = vmatprep.subr.mxu0 0.0
        %1304 = vmatpush1.msra.mxu0 0.0
        %1305 = vmatprep.subr.mxu0 0.0
        %1306 = vmatpush1.msra.mxu0 0.0
        %1307 = vmatprep.subr.mxu0 0.0
        %1308 = vmatpush1.msra.mxu0 0.0
        %1309 = vmatprep.subr.mxu0 0.0
        %1310 = vmatpush1.msra.mxu0 0.0
        %1311 = vmatprep.subr.mxu0 0.0
        %1312 = vmatpush1.msra.mxu0 0.0
        %1313 = vmatprep.subr.mxu0 0.0
        %1314 = vmatpush1.msra.mxu0 0.0
        %1315 = vmatprep.subr.mxu0 0.0
        %1316 = vmatpush1.msra.mxu0 0.0
        %1317 = vmatprep.subr.mxu0 0.0
        %1318 = vmatpush1.msra.mxu0 0.0
        %1319 = vmatprep.subr.mxu0 0.0
        %1320 = vmatpush1.msra.mxu0 0.0
        %1321 = vmatprep.subr.mxu0 0.0
        %1322 = vmatpush1.msra.mxu0 0.0
        %1323 = vmatprep.subr.mxu0 0.0
        %1324 = vmatpush1.msra.mxu0 0.0
        %1325 = vmatprep.subr.mxu0 0.0
        %1326 = vmatpush1.msra.mxu0 0.0
        %1327 = vmatprep.subr.mxu0 0.0
        %1328 = vmatpush1.msra.mxu0 0.0
        %1329 = vmatprep.subr.mxu0 %v614
        %1330 = vmatpush1.msra.mxu0 %v613
        %1331 = vmatprep.subr.mxu0 %v610
        %1332 = vmatpush1.msra.mxu0 %v609
        %1333 = vmatprep.subr.mxu0 0.0
        %1334 = vmatpush2.msra.mxu0 0.0
        %1335 = vmatprep.subr.mxu0 0.0
        %1336 = vmatpush2.msra.mxu0 0.0
        %1337 = vmatprep.subr.mxu0 0.0
        %1338 = vmatpush2.msra.mxu0 0.0
        %1339 = vmatprep.subr.mxu0 0.0
        %1340 = vmatpush2.msra.mxu0 0.0
        %1341 = vmatprep.subr.mxu0 0.0
        %1342 = vmatpush2.msra.mxu0 0.0
        %1343 = vmatprep.subr.mxu0 0.0
        %1344 = vmatpush2.msra.mxu0 0.0
        %1345 = vmatprep.subr.mxu0 0.0
        %1346 = vmatpush2.msra.mxu0 0.0
        %1347 = vmatprep.subr.mxu0 0.0
        %1348 = vmatpush2.msra.mxu0 0.0
        %1349 = vmatprep.subr.mxu0 0.0
        %1350 = vmatpush2.msra.mxu0 0.0
        %1351 = vmatprep.subr.mxu0 0.0
        %1352 = vmatpush2.msra.mxu0 0.0
        %1353 = vmatprep.subr.mxu0 0.0
        %1354 = vmatpush2.msra.mxu0 0.0
        %1355 = vmatprep.subr.mxu0 0.0
        %1356 = vmatpush2.msra.mxu0 0.0
        %1357 = vmatprep.subr.mxu0 0.0
        %1358 = vmatpush2.msra.mxu0 0.0
        %1359 = vmatprep.subr.mxu0 0.0
        %1360 = vmatpush2.msra.mxu0 0.0
        %1361 = vmatprep.subr.mxu0 0.0
        %1362 = vmatpush2.msra.mxu0 0.0
        %1363 = vmatprep.subr.mxu0 0.0
        %1364 = vmatpush2.msra.mxu0 0.0
        %1365 = vmatprep.mubr.f32.mxu0 0.0
        %1366 = vmatmul.mubr.f32.gmra.mxu0 %v1299
        %v1367 = vpop.f32.mrf.mxu0
        %v1368 = vadd.f32 0.0, %v1367
        %v1369 = vpop.f32.mrf.mxu0
        %v1370 = vadd.f32 0.0, %v1369
        %1371 = vdwg.mxu0
        %1372 = vmatprep.subr.mxu0 0.0
        %1373 = vmatpush1.msra.mxu0 0.0
        %1374 = vmatprep.subr.mxu0 0.0
        %1375 = vmatpush1.msra.mxu0 0.0
        %1376 = vmatprep.subr.mxu0 0.0
        %1377 = vmatpush1.msra.mxu0 0.0
        %1378 = vmatprep.subr.mxu0 0.0
        %1379 = vmatpush1.msra.mxu0 0.0
        %1380 = vmatprep.subr.mxu0 0.0
        %1381 = vmatpush1.msra.mxu0 0.0
        %1382 = vmatprep.subr.mxu0 0.0
        %1383 = vmatpush1.msra.mxu0 0.0
        %1384 = vmatprep.subr.mxu0 0.0
        %1385 = vmatpush1.msra.mxu0 0.0
        %1386 = vmatprep.subr.mxu0 0.0
        %1387 = vmatpush1.msra.mxu0 0.0
        %1388 = vmatprep.subr.mxu0 0.0
        %1389 = vmatpush1.msra.mxu0 0.0
        %1390 = vmatprep.subr.mxu0 0.0
        %1391 = vmatpush1.msra.mxu0 0.0
        %1392 = vmatprep.subr.mxu0 0.0
        %1393 = vmatpush1.msra.mxu0 0.0
        %1394 = vmatprep.subr.mxu0 0.0
        %1395 = vmatpush1.msra.mxu0 0.0
        %1396 = vmatprep.subr.mxu0 0.0
        %1397 = vmatpush1.msra.mxu0 0.0
        %1398 = vmatprep.subr.mxu0 0.0
        %1399 = vmatpush1.msra.mxu0 0.0
        %1400 = vmatprep.subr.mxu0 %v616
        %1401 = vmatpush1.msra.mxu0 %v615
        %1402 = vmatprep.subr.mxu0 %v612
        %1403 = vmatpush1.msra.mxu0 %v611
        %1404 = vmatprep.subr.mxu0 0.0
        %1405 = vmatpush2.msra.mxu0 0.0
        %1406 = vmatprep.subr.mxu0 0.0
        %1407 = vmatpush2.msra.mxu0 0.0
        %1408 = vmatprep.subr.mxu0 0.0
        %1409 = vmatpush2.msra.mxu0 0.0
        %1410 = vmatprep.subr.mxu0 0.0
        %1411 = vmatpush2.msra.mxu0 0.0
        %1412 = vmatprep.subr.mxu0 0.0
        %1413 = vmatpush2.msra.mxu0 0.0
        %1414 = vmatprep.subr.mxu0 0.0
        %1415 = vmatpush2.msra.mxu0 0.0
        %1416 = vmatprep.subr.mxu0 0.0
        %1417 = vmatpush2.msra.mxu0 0.0
        %1418 = vmatprep.subr.mxu0 0.0
        %1419 = vmatpush2.msra.mxu0 0.0
        %1420 = vmatprep.subr.mxu0 0.0
        %1421 = vmatpush2.msra.mxu0 0.0
        %1422 = vmatprep.subr.mxu0 0.0
        %1423 = vmatpush2.msra.mxu0 0.0
        %1424 = vmatprep.subr.mxu0 0.0
        %1425 = vmatpush2.msra.mxu0 0.0
        %1426 = vmatprep.subr.mxu0 0.0
        %1427 = vmatpush2.msra.mxu0 0.0
        %1428 = vmatprep.subr.mxu0 0.0
        %1429 = vmatpush2.msra.mxu0 0.0
        %1430 = vmatprep.subr.mxu0 0.0
        %1431 = vmatpush2.msra.mxu0 0.0
        %1432 = vmatprep.subr.mxu0 0.0
        %1433 = vmatpush2.msra.mxu0 0.0
        %1434 = vmatprep.subr.mxu0 0.0
        %1435 = vmatpush2.msra.mxu0 0.0
        %1436 = vmatprep.mubr.f32.mxu0 0.0
        %1437 = vmatmul.mubr.f32.gmra.mxu0 %v1299
        %v1438 = vpop.f32.mrf.mxu0
        %v1439 = vadd.f32 0.0, %v1438
        %v1440 = vpop.f32.mrf.mxu0
        %v1441 = vadd.f32 0.0, %v1440
        %1442 = vdwg.mxu0
        %v1443 = vld [vmem:[%s584] sm:$0xff]
        %v1444 = vld [vmem:[%s584 + $0x8] sm:$0xff]
        %v1445 = vld [vmem:[%s584 + $0x10] sm:$0xff]
        %v1446 = vld [vmem:[%s584 + $0x18] sm:$0xff]
        %1448 = vset.pattern.permute.xlu0 0
        %1449 = vperm.xlu0 %1448, %v1443
        %v1450 = vpop.permute.xlu0 %1449
        %1453 = vset.pattern.permute.xlu0 0
        %1454 = vperm.xlu0 %1453, %v1444
        %v1455 = vpop.permute.xlu0 %1454
        %1458 = vset.pattern.permute.xlu0 0
        %1459 = vperm.xlu0 %1458, %v1445
        %v1460 = vpop.permute.xlu0 %1459
        %1463 = vset.pattern.permute.xlu0 0
        %1464 = vperm.xlu0 %1463, %v1446
        %v1465 = vpop.permute.xlu0 %1464
        %v1467 = vmul.f32 %v837, %v1450
        %v1468 = vmul.f32 %v839, %v1450
        %v1469 = vmul.f32 %v908, %v1450
        %v1470 = vmul.f32 %v910, %v1450
        %v1471 = vmul.f32 %v1014, %v1455
        %v1472 = vmul.f32 %v1016, %v1455
        %v1473 = vmul.f32 %v1085, %v1455
        %v1474 = vmul.f32 %v1087, %v1455
        %v1475 = vmul.f32 %v1191, %v1460
        %v1476 = vmul.f32 %v1193, %v1460
        %v1477 = vmul.f32 %v1262, %v1460
        %v1478 = vmul.f32 %v1264, %v1460
        %v1479 = vmul.f32 %v1368, %v1465
        %v1480 = vmul.f32 %v1370, %v1465
        %v1481 = vmul.f32 %v1439, %v1465
        %v1482 = vmul.f32 %v1441, %v1465
        %s1483 = sld [smem:[#allocation7]]
        %v1484 = vstv %s1483
        %v1485 = vmul.f32 %v1484, %v1467
        %v1486 = vmul.f32 %v1484, %v1468
        %v1487 = vmul.f32 %v1484, %v1469
        %v1488 = vmul.f32 %v1484, %v1470
        %s1489 = sld [smem:[#allocation7 + $0x1]]
        %v1490 = vstv %s1489
        %v1491 = vmul.f32 %v1490, %v1471
        %v1492 = vmul.f32 %v1490, %v1472
        %v1493 = vmul.f32 %v1490, %v1473
        %v1494 = vmul.f32 %v1490, %v1474
        %v1495 = vadd.f32 %v1485, %v1491
        %v1496 = vadd.f32 %v1486, %v1492
        %v1497 = vadd.f32 %v1487, %v1493
        %v1498 = vadd.f32 %v1488, %v1494
        %s1499 = sld [smem:[#allocation7 + $0x2]]
        %v1500 = vstv %s1499
        %v1501 = vmul.f32 %v1500, %v1475
        %v1502 = vmul.f32 %v1500, %v1476
        %v1503 = vmul.f32 %v1500, %v1477
        %v1504 = vmul.f32 %v1500, %v1478
        %v1505 = vadd.f32 %v1495, %v1501
        %v1506 = vadd.f32 %v1496, %v1502
        %v1507 = vadd.f32 %v1497, %v1503
        %v1508 = vadd.f32 %v1498, %v1504
        %s1509 = sld [smem:[#allocation7 + $0x3]]
        %v1510 = vstv %s1509
        %v1511 = vmul.f32 %v1510, %v1479
        %v1512 = vmul.f32 %v1510, %v1480
        %v1513 = vmul.f32 %v1510, %v1481
        %v1514 = vmul.f32 %v1510, %v1482
        %v1515 = vadd.f32 %v1505, %v1511
        %v1516 = vadd.f32 %v1506, %v1512
        %v1517 = vadd.f32 %v1507, %v1513
        %v1518 = vadd.f32 %v1508, %v1514
        %s1519 = sld [smem:[#allocation7 + $0x80]]
        %v1520 = vstv %s1519
        %v1521 = vmul.f32 %v1520, %v1467
        %v1522 = vmul.f32 %v1520, %v1468
        %v1523 = vmul.f32 %v1520, %v1469
        %v1524 = vmul.f32 %v1520, %v1470
        %s1525 = sld [smem:[#allocation7 + $0x81]]
        %v1526 = vstv %s1525
        %v1527 = vmul.f32 %v1526, %v1471
        %v1528 = vmul.f32 %v1526, %v1472
        %v1529 = vmul.f32 %v1526, %v1473
        %v1530 = vmul.f32 %v1526, %v1474
        %v1531 = vadd.f32 %v1521, %v1527
        %v1532 = vadd.f32 %v1522, %v1528
        %v1533 = vadd.f32 %v1523, %v1529
        %v1534 = vadd.f32 %v1524, %v1530
        %s1535 = sld [smem:[#allocation7 + $0x82]]
        %v1536 = vstv %s1535
        %v1537 = vmul.f32 %v1536, %v1475
        %v1538 = vmul.f32 %v1536, %v1476
        %v1539 = vmul.f32 %v1536, %v1477
        %v1540 = vmul.f32 %v1536, %v1478
        %v1541 = vadd.f32 %v1531, %v1537
        %v1542 = vadd.f32 %v1532, %v1538
        %v1543 = vadd.f32 %v1533, %v1539
        %v1544 = vadd.f32 %v1534, %v1540
        %s1545 = sld [smem:[#allocation7 + $0x83]]
        %v1546 = vstv %s1545
        %v1547 = vmul.f32 %v1546, %v1479
        %v1548 = vmul.f32 %v1546, %v1480
        %v1549 = vmul.f32 %v1546, %v1481
        %v1550 = vmul.f32 %v1546, %v1482
        %v1551 = vadd.f32 %v1541, %v1547
        %v1552 = vadd.f32 %v1542, %v1548
        %v1553 = vadd.f32 %v1543, %v1549
        %v1554 = vadd.f32 %v1544, %v1550
        %s1555 = sld [smem:[#allocation7 + $0x100]]
        %v1556 = vstv %s1555
        %v1557 = vmul.f32 %v1556, %v1467
        %v1558 = vmul.f32 %v1556, %v1468
        %v1559 = vmul.f32 %v1556, %v1469
        %v1560 = vmul.f32 %v1556, %v1470
        %s1561 = sld [smem:[#allocation7 + $0x101]]
        %v1562 = vstv %s1561
        %v1563 = vmul.f32 %v1562, %v1471
        %v1564 = vmul.f32 %v1562, %v1472
        %v1565 = vmul.f32 %v1562, %v1473
        %v1566 = vmul.f32 %v1562, %v1474
        %v1567 = vadd.f32 %v1557, %v1563
        %v1568 = vadd.f32 %v1558, %v1564
        %v1569 = vadd.f32 %v1559, %v1565
        %v1570 = vadd.f32 %v1560, %v1566
        %s1571 = sld [smem:[#allocation7 + $0x102]]
        %v1572 = vstv %s1571
        %v1573 = vmul.f32 %v1572, %v1475
        %v1574 = vmul.f32 %v1572, %v1476
        %v1575 = vmul.f32 %v1572, %v1477
        %v1576 = vmul.f32 %v1572, %v1478
        %v1577 = vadd.f32 %v1567, %v1573
        %v1578 = vadd.f32 %v1568, %v1574
        %v1579 = vadd.f32 %v1569, %v1575
        %v1580 = vadd.f32 %v1570, %v1576
        %s1581 = sld [smem:[#allocation7 + $0x103]]
        %v1582 = vstv %s1581
        %v1583 = vmul.f32 %v1582, %v1479
        %v1584 = vmul.f32 %v1582, %v1480
        %v1585 = vmul.f32 %v1582, %v1481
        %v1586 = vmul.f32 %v1582, %v1482
        %v1587 = vadd.f32 %v1577, %v1583
        %v1588 = vadd.f32 %v1578, %v1584
        %v1589 = vadd.f32 %v1579, %v1585
        %v1590 = vadd.f32 %v1580, %v1586
        %s1591 = sld [smem:[#allocation7 + $0x180]]
        %v1592 = vstv %s1591
        %v1593 = vmul.f32 %v1592, %v1467
        %v1594 = vmul.f32 %v1592, %v1468
        %v1595 = vmul.f32 %v1592, %v1469
        %v1596 = vmul.f32 %v1592, %v1470
        %s1597 = sld [smem:[#allocation7 + $0x181]]
        %v1598 = vstv %s1597
        %v1599 = vmul.f32 %v1598, %v1471
        %v1600 = vmul.f32 %v1598, %v1472
        %v1601 = vmul.f32 %v1598, %v1473
        %v1602 = vmul.f32 %v1598, %v1474
        %v1603 = vadd.f32 %v1593, %v1599
        %v1604 = vadd.f32 %v1594, %v1600
        %v1605 = vadd.f32 %v1595, %v1601
        %v1606 = vadd.f32 %v1596, %v1602
        %s1607 = sld [smem:[#allocation7 + $0x182]]
        %v1608 = vstv %s1607
        %v1609 = vmul.f32 %v1608, %v1475
        %v1610 = vmul.f32 %v1608, %v1476
        %v1611 = vmul.f32 %v1608, %v1477
        %v1612 = vmul.f32 %v1608, %v1478
        %v1613 = vadd.f32 %v1603, %v1609
        %v1614 = vadd.f32 %v1604, %v1610
        %v1615 = vadd.f32 %v1605, %v1611
        %v1616 = vadd.f32 %v1606, %v1612
        %s1617 = sld [smem:[#allocation7 + $0x183]]
        %v1618 = vstv %s1617
        %v1619 = vmul.f32 %v1618, %v1479
        %v1620 = vmul.f32 %v1618, %v1480
        %v1621 = vmul.f32 %v1618, %v1481
        %v1622 = vmul.f32 %v1618, %v1482
        %v1623 = vadd.f32 %v1613, %v1619
        %v1624 = vadd.f32 %v1614, %v1620
        %v1625 = vadd.f32 %v1615, %v1621
        %v1626 = vadd.f32 %v1616, %v1622
        %v1627 = vadd.f32 %v1515, %v1467
        %v1628 = vadd.f32 %v1516, %v1468
        %v1629 = vadd.f32 %v1517, %v1469
        %v1630 = vadd.f32 %v1518, %v1470
        %v1631 = vadd.f32 %v1551, %v1471
        %v1632 = vadd.f32 %v1552, %v1472
        %v1633 = vadd.f32 %v1553, %v1473
        %v1634 = vadd.f32 %v1554, %v1474
        %v1635 = vadd.f32 %v1587, %v1475
        %v1636 = vadd.f32 %v1588, %v1476
        %v1637 = vadd.f32 %v1589, %v1477
        %v1638 = vadd.f32 %v1590, %v1478
        %v1639 = vadd.f32 %v1623, %v1479
        %v1640 = vadd.f32 %v1624, %v1480
        %v1641 = vadd.f32 %v1625, %v1481
        %v1642 = vadd.f32 %v1626, %v1482
        %v1643 = vmax.f32 %v1627, 0.0
        %v1644 = vmax.f32 %v1628, 0.0
        %v1645 = vmax.f32 %v1629, 0.0
        %v1646 = vmax.f32 %v1630, 0.0
        %v1647 = vmax.f32 %v1631, 0.0
        %v1648 = vmax.f32 %v1632, 0.0
        %v1649 = vmax.f32 %v1633, 0.0
        %v1650 = vmax.f32 %v1634, 0.0
        %v1651 = vmax.f32 %v1635, 0.0
        %v1652 = vmax.f32 %v1636, 0.0
        %v1653 = vmax.f32 %v1637, 0.0
        %v1654 = vmax.f32 %v1638, 0.0
        %v1655 = vmax.f32 %v1639, 0.0
        %v1656 = vmax.f32 %v1640, 0.0
        %v1657 = vmax.f32 %v1641, 0.0
        %v1658 = vmax.f32 %v1642, 0.0
        %v1659 = vld [vmem:[#allocation10] sm:$0xff]
        %v1660 = vld [vmem:[#allocation10 + $0x8] sm:$0xff]
        %v1661 = vld [vmem:[#allocation10 + $0x10] sm:$0xff]
        %v1662 = vld [vmem:[#allocation10 + $0x18] sm:$0xff]
        %v1663 = vld [vmem:[#allocation10 + $0x20] sm:$0xff]
        %v1664 = vld [vmem:[#allocation10 + $0x28] sm:$0xff]
        %v1665 = vld [vmem:[#allocation10 + $0x30] sm:$0xff]
        %v1666 = vld [vmem:[#allocation10 + $0x38] sm:$0xff]
        %v1667 = vld [vmem:[#allocation10 + $0x40] sm:$0xff]
        %v1668 = vld [vmem:[#allocation10 + $0x48] sm:$0xff]
        %v1669 = vld [vmem:[#allocation10 + $0x50] sm:$0xff]
        %v1670 = vld [vmem:[#allocation10 + $0x58] sm:$0xff]
        %v1671 = vld [vmem:[#allocation10 + $0x60] sm:$0xff]
        %v1672 = vld [vmem:[#allocation10 + $0x68] sm:$0xff]
        %v1673 = vld [vmem:[#allocation10 + $0x70] sm:$0xff]
        %v1674 = vld [vmem:[#allocation10 + $0x78] sm:$0xff]
        %v1675 = vld [vmem:[#allocation10 + $0x80] sm:$0xff]
        %v1676 = vld [vmem:[#allocation10 + $0x88] sm:$0xff]
        %v1677 = vld [vmem:[#allocation10 + $0x90] sm:$0xff]
        %v1678 = vld [vmem:[#allocation10 + $0x98] sm:$0xff]
        %v1679 = vld [vmem:[#allocation10 + $0xa0] sm:$0xff]
        %v1680 = vld [vmem:[#allocation10 + $0xa8] sm:$0xff]
        %v1681 = vld [vmem:[#allocation10 + $0xb0] sm:$0xff]
        %v1682 = vld [vmem:[#allocation10 + $0xb8] sm:$0xff]
        %v1683 = vld [vmem:[#allocation10 + $0xc0] sm:$0xff]
        %v1684 = vld [vmem:[#allocation10 + $0xc8] sm:$0xff]
        %v1685 = vld [vmem:[#allocation10 + $0xd0] sm:$0xff]
        %v1686 = vld [vmem:[#allocation10 + $0xd8] sm:$0xff]
        %v1687 = vld [vmem:[#allocation10 + $0xe0] sm:$0xff]
        %v1688 = vld [vmem:[#allocation10 + $0xe8] sm:$0xff]
        %v1689 = vld [vmem:[#allocation10 + $0xf0] sm:$0xff]
        %v1690 = vld [vmem:[#allocation10 + $0xf8] sm:$0xff]
        %v1691 = vld [vmem:[#allocation10 + $0x100] sm:$0xff]
        %v1692 = vld [vmem:[#allocation10 + $0x108] sm:$0xff]
        %v1693 = vld [vmem:[#allocation10 + $0x110] sm:$0xff]
        %v1694 = vld [vmem:[#allocation10 + $0x118] sm:$0xff]
        %v1695 = vld [vmem:[#allocation10 + $0x120] sm:$0xff]
        %v1696 = vld [vmem:[#allocation10 + $0x128] sm:$0xff]
        %v1697 = vld [vmem:[#allocation10 + $0x130] sm:$0xff]
        %v1698 = vld [vmem:[#allocation10 + $0x138] sm:$0xff]
        %v1699 = vld [vmem:[#allocation10 + $0x140] sm:$0xff]
        %v1700 = vld [vmem:[#allocation10 + $0x148] sm:$0xff]
        %v1701 = vld [vmem:[#allocation10 + $0x150] sm:$0xff]
        %v1702 = vld [vmem:[#allocation10 + $0x158] sm:$0xff]
        %v1703 = vld [vmem:[#allocation10 + $0x160] sm:$0xff]
        %v1704 = vld [vmem:[#allocation10 + $0x168] sm:$0xff]
        %v1705 = vld [vmem:[#allocation10 + $0x170] sm:$0xff]
        %v1706 = vld [vmem:[#allocation10 + $0x178] sm:$0xff]
        %v1707 = vld [vmem:[#allocation10 + $0x180] sm:$0xff]
        %v1708 = vld [vmem:[#allocation10 + $0x188] sm:$0xff]
        %v1709 = vld [vmem:[#allocation10 + $0x190] sm:$0xff]
        %v1710 = vld [vmem:[#allocation10 + $0x198] sm:$0xff]
        %v1711 = vld [vmem:[#allocation10 + $0x1a0] sm:$0xff]
        %v1712 = vld [vmem:[#allocation10 + $0x1a8] sm:$0xff]
        %v1713 = vld [vmem:[#allocation10 + $0x1b0] sm:$0xff]
        %v1714 = vld [vmem:[#allocation10 + $0x1b8] sm:$0xff]
        %v1715 = vld [vmem:[#allocation10 + $0x1c0] sm:$0xff]
        %v1716 = vld [vmem:[#allocation10 + $0x1c8] sm:$0xff]
        %v1717 = vld [vmem:[#allocation10 + $0x1d0] sm:$0xff]
        %v1718 = vld [vmem:[#allocation10 + $0x1d8] sm:$0xff]
        %v1719 = vld [vmem:[#allocation10 + $0x1e0] sm:$0xff]
        %v1720 = vld [vmem:[#allocation10 + $0x1e8] sm:$0xff]
        %v1721 = vld [vmem:[#allocation10 + $0x1f0] sm:$0xff]
        %v1722 = vld [vmem:[#allocation10 + $0x1f8] sm:$0xff]
        %v1723 = vld [vmem:[#allocation10 + $0x200] sm:$0xff]
        %v1724 = vld [vmem:[#allocation10 + $0x208] sm:$0xff]
        %v1725 = vld [vmem:[#allocation10 + $0x210] sm:$0xff]
        %v1726 = vld [vmem:[#allocation10 + $0x218] sm:$0xff]
        %v1727 = vld [vmem:[#allocation10 + $0x220] sm:$0xff]
        %v1728 = vld [vmem:[#allocation10 + $0x228] sm:$0xff]
        %v1729 = vld [vmem:[#allocation10 + $0x230] sm:$0xff]
        %v1730 = vld [vmem:[#allocation10 + $0x238] sm:$0xff]
        %v1731 = vld [vmem:[#allocation10 + $0x240] sm:$0xff]
        %v1732 = vld [vmem:[#allocation10 + $0x248] sm:$0xff]
        %v1733 = vld [vmem:[#allocation10 + $0x250] sm:$0xff]
        %v1734 = vld [vmem:[#allocation10 + $0x258] sm:$0xff]
        %v1735 = vld [vmem:[#allocation10 + $0x260] sm:$0xff]
        %v1736 = vld [vmem:[#allocation10 + $0x268] sm:$0xff]
        %v1737 = vld [vmem:[#allocation10 + $0x270] sm:$0xff]
        %v1738 = vld [vmem:[#allocation10 + $0x278] sm:$0xff]
        %v1739 = vld [vmem:[#allocation10 + $0x280] sm:$0xff]
        %v1740 = vld [vmem:[#allocation10 + $0x288] sm:$0xff]
        %v1741 = vld [vmem:[#allocation10 + $0x290] sm:$0xff]
        %v1742 = vld [vmem:[#allocation10 + $0x298] sm:$0xff]
        %v1743 = vld [vmem:[#allocation10 + $0x2a0] sm:$0xff]
        %v1744 = vld [vmem:[#allocation10 + $0x2a8] sm:$0xff]
        %v1745 = vld [vmem:[#allocation10 + $0x2b0] sm:$0xff]
        %v1746 = vld [vmem:[#allocation10 + $0x2b8] sm:$0xff]
        %v1747 = vld [vmem:[#allocation10 + $0x2c0] sm:$0xff]
        %v1748 = vld [vmem:[#allocation10 + $0x2c8] sm:$0xff]
        %v1749 = vld [vmem:[#allocation10 + $0x2d0] sm:$0xff]
        %v1750 = vld [vmem:[#allocation10 + $0x2d8] sm:$0xff]
        %v1751 = vld [vmem:[#allocation10 + $0x2e0] sm:$0xff]
        %v1752 = vld [vmem:[#allocation10 + $0x2e8] sm:$0xff]
        %v1753 = vld [vmem:[#allocation10 + $0x2f0] sm:$0xff]
        %v1754 = vld [vmem:[#allocation10 + $0x2f8] sm:$0xff]
        %v1755 = vld [vmem:[#allocation10 + $0x300] sm:$0xff]
        %v1756 = vld [vmem:[#allocation10 + $0x308] sm:$0xff]
        %v1757 = vld [vmem:[#allocation10 + $0x310] sm:$0xff]
        %v1758 = vld [vmem:[#allocation10 + $0x318] sm:$0xff]
        %v1759 = vld [vmem:[#allocation10 + $0x320] sm:$0xff]
        %v1760 = vld [vmem:[#allocation10 + $0x328] sm:$0xff]
        %v1761 = vld [vmem:[#allocation10 + $0x330] sm:$0xff]
        %v1762 = vld [vmem:[#allocation10 + $0x338] sm:$0xff]
        %v1763 = vld [vmem:[#allocation10 + $0x340] sm:$0xff]
        %v1764 = vld [vmem:[#allocation10 + $0x348] sm:$0xff]
        %v1765 = vld [vmem:[#allocation10 + $0x350] sm:$0xff]
        %v1766 = vld [vmem:[#allocation10 + $0x358] sm:$0xff]
        %v1767 = vld [vmem:[#allocation10 + $0x360] sm:$0xff]
        %v1768 = vld [vmem:[#allocation10 + $0x368] sm:$0xff]
        %v1769 = vld [vmem:[#allocation10 + $0x370] sm:$0xff]
        %v1770 = vld [vmem:[#allocation10 + $0x378] sm:$0xff]
        %v1771 = vld [vmem:[#allocation10 + $0x380] sm:$0xff]
        %v1772 = vld [vmem:[#allocation10 + $0x388] sm:$0xff]
        %v1773 = vld [vmem:[#allocation10 + $0x390] sm:$0xff]
        %v1774 = vld [vmem:[#allocation10 + $0x398] sm:$0xff]
        %v1775 = vld [vmem:[#allocation10 + $0x3a0] sm:$0xff]
        %v1776 = vld [vmem:[#allocation10 + $0x3a8] sm:$0xff]
        %v1777 = vld [vmem:[#allocation10 + $0x3b0] sm:$0xff]
        %v1778 = vld [vmem:[#allocation10 + $0x3b8] sm:$0xff]
        %v1779 = vld [vmem:[#allocation10 + $0x3c0] sm:$0xff]
        %v1780 = vld [vmem:[#allocation10 + $0x3c8] sm:$0xff]
        %v1781 = vld [vmem:[#allocation10 + $0x3d0] sm:$0xff]
        %v1782 = vld [vmem:[#allocation10 + $0x3d8] sm:$0xff]
        %v1783 = vld [vmem:[#allocation10 + $0x3e0] sm:$0xff]
        %v1784 = vld [vmem:[#allocation10 + $0x3e8] sm:$0xff]
        %v1785 = vld [vmem:[#allocation10 + $0x3f0] sm:$0xff]
        %v1786 = vld [vmem:[#allocation10 + $0x3f8] sm:$0xff]
        %v1787 = vld [vmem:[#allocation10 + $0x400] sm:$0xff]
        %v1788 = vld [vmem:[#allocation10 + $0x408] sm:$0xff]
        %v1789 = vld [vmem:[#allocation10 + $0x410] sm:$0xff]
        %v1790 = vld [vmem:[#allocation10 + $0x418] sm:$0xff]
        %v1791 = vld [vmem:[#allocation10 + $0x420] sm:$0xff]
        %v1792 = vld [vmem:[#allocation10 + $0x428] sm:$0xff]
        %v1793 = vld [vmem:[#allocation10 + $0x430] sm:$0xff]
        %v1794 = vld [vmem:[#allocation10 + $0x438] sm:$0xff]
        %v1795 = vld [vmem:[#allocation10 + $0x440] sm:$0xff]
        %v1796 = vld [vmem:[#allocation10 + $0x448] sm:$0xff]
        %v1797 = vld [vmem:[#allocation10 + $0x450] sm:$0xff]
        %v1798 = vld [vmem:[#allocation10 + $0x458] sm:$0xff]
        %v1799 = vld [vmem:[#allocation10 + $0x460] sm:$0xff]
        %v1800 = vld [vmem:[#allocation10 + $0x468] sm:$0xff]
        %v1801 = vld [vmem:[#allocation10 + $0x470] sm:$0xff]
        %v1802 = vld [vmem:[#allocation10 + $0x478] sm:$0xff]
        %v1803 = vld [vmem:[#allocation10 + $0x480] sm:$0xff]
        %v1804 = vld [vmem:[#allocation10 + $0x488] sm:$0xff]
        %v1805 = vld [vmem:[#allocation10 + $0x490] sm:$0xff]
        %v1806 = vld [vmem:[#allocation10 + $0x498] sm:$0xff]
        %v1807 = vld [vmem:[#allocation10 + $0x4a0] sm:$0xff]
        %v1808 = vld [vmem:[#allocation10 + $0x4a8] sm:$0xff]
        %v1809 = vld [vmem:[#allocation10 + $0x4b0] sm:$0xff]
        %v1810 = vld [vmem:[#allocation10 + $0x4b8] sm:$0xff]
        %v1811 = vld [vmem:[#allocation10 + $0x4c0] sm:$0xff]
        %v1812 = vld [vmem:[#allocation10 + $0x4c8] sm:$0xff]
        %v1813 = vld [vmem:[#allocation10 + $0x4d0] sm:$0xff]
        %v1814 = vld [vmem:[#allocation10 + $0x4d8] sm:$0xff]
        %v1815 = vld [vmem:[#allocation10 + $0x4e0] sm:$0xff]
        %v1816 = vld [vmem:[#allocation10 + $0x4e8] sm:$0xff]
        %v1817 = vld [vmem:[#allocation10 + $0x4f0] sm:$0xff]
        %v1818 = vld [vmem:[#allocation10 + $0x4f8] sm:$0xff]
        %v1819 = vld [vmem:[#allocation10 + $0x500] sm:$0xff]
        %v1820 = vld [vmem:[#allocation10 + $0x508] sm:$0xff]
        %v1821 = vld [vmem:[#allocation10 + $0x510] sm:$0xff]
        %v1822 = vld [vmem:[#allocation10 + $0x518] sm:$0xff]
        %v1823 = vld [vmem:[#allocation10 + $0x520] sm:$0xff]
        %v1824 = vld [vmem:[#allocation10 + $0x528] sm:$0xff]
        %v1825 = vld [vmem:[#allocation10 + $0x530] sm:$0xff]
        %v1826 = vld [vmem:[#allocation10 + $0x538] sm:$0xff]
        %v1827 = vld [vmem:[#allocation10 + $0x540] sm:$0xff]
        %v1828 = vld [vmem:[#allocation10 + $0x548] sm:$0xff]
        %v1829 = vld [vmem:[#allocation10 + $0x550] sm:$0xff]
        %v1830 = vld [vmem:[#allocation10 + $0x558] sm:$0xff]
        %v1831 = vld [vmem:[#allocation10 + $0x560] sm:$0xff]
        %v1832 = vld [vmem:[#allocation10 + $0x568] sm:$0xff]
        %v1833 = vld [vmem:[#allocation10 + $0x570] sm:$0xff]
        %v1834 = vld [vmem:[#allocation10 + $0x578] sm:$0xff]
        %v1835 = vld [vmem:[#allocation10 + $0x580] sm:$0xff]
        %v1836 = vld [vmem:[#allocation10 + $0x588] sm:$0xff]
        %v1837 = vld [vmem:[#allocation10 + $0x590] sm:$0xff]
        %v1838 = vld [vmem:[#allocation10 + $0x598] sm:$0xff]
        %v1839 = vld [vmem:[#allocation10 + $0x5a0] sm:$0xff]
        %v1840 = vld [vmem:[#allocation10 + $0x5a8] sm:$0xff]
        %v1841 = vld [vmem:[#allocation10 + $0x5b0] sm:$0xff]
        %v1842 = vld [vmem:[#allocation10 + $0x5b8] sm:$0xff]
        %v1843 = vld [vmem:[#allocation10 + $0x5c0] sm:$0xff]
        %v1844 = vld [vmem:[#allocation10 + $0x5c8] sm:$0xff]
        %v1845 = vld [vmem:[#allocation10 + $0x5d0] sm:$0xff]
        %v1846 = vld [vmem:[#allocation10 + $0x5d8] sm:$0xff]
        %v1847 = vld [vmem:[#allocation10 + $0x5e0] sm:$0xff]
        %v1848 = vld [vmem:[#allocation10 + $0x5e8] sm:$0xff]
        %v1849 = vld [vmem:[#allocation10 + $0x5f0] sm:$0xff]
        %v1850 = vld [vmem:[#allocation10 + $0x5f8] sm:$0xff]
        %v1851 = vld [vmem:[#allocation10 + $0x600] sm:$0xff]
        %v1852 = vld [vmem:[#allocation10 + $0x608] sm:$0xff]
        %v1853 = vld [vmem:[#allocation10 + $0x610] sm:$0xff]
        %v1854 = vld [vmem:[#allocation10 + $0x618] sm:$0xff]
        %v1855 = vld [vmem:[#allocation10 + $0x620] sm:$0xff]
        %v1856 = vld [vmem:[#allocation10 + $0x628] sm:$0xff]
        %v1857 = vld [vmem:[#allocation10 + $0x630] sm:$0xff]
        %v1858 = vld [vmem:[#allocation10 + $0x638] sm:$0xff]
        %v1859 = vld [vmem:[#allocation10 + $0x640] sm:$0xff]
        %v1860 = vld [vmem:[#allocation10 + $0x648] sm:$0xff]
        %v1861 = vld [vmem:[#allocation10 + $0x650] sm:$0xff]
        %v1862 = vld [vmem:[#allocation10 + $0x658] sm:$0xff]
        %v1863 = vld [vmem:[#allocation10 + $0x660] sm:$0xff]
        %v1864 = vld [vmem:[#allocation10 + $0x668] sm:$0xff]
        %v1865 = vld [vmem:[#allocation10 + $0x670] sm:$0xff]
        %v1866 = vld [vmem:[#allocation10 + $0x678] sm:$0xff]
        %v1867 = vld [vmem:[#allocation10 + $0x680] sm:$0xff]
        %v1868 = vld [vmem:[#allocation10 + $0x688] sm:$0xff]
        %v1869 = vld [vmem:[#allocation10 + $0x690] sm:$0xff]
        %v1870 = vld [vmem:[#allocation10 + $0x698] sm:$0xff]
        %v1871 = vld [vmem:[#allocation10 + $0x6a0] sm:$0xff]
        %v1872 = vld [vmem:[#allocation10 + $0x6a8] sm:$0xff]
        %v1873 = vld [vmem:[#allocation10 + $0x6b0] sm:$0xff]
        %v1874 = vld [vmem:[#allocation10 + $0x6b8] sm:$0xff]
        %v1875 = vld [vmem:[#allocation10 + $0x6c0] sm:$0xff]
        %v1876 = vld [vmem:[#allocation10 + $0x6c8] sm:$0xff]
        %v1877 = vld [vmem:[#allocation10 + $0x6d0] sm:$0xff]
        %v1878 = vld [vmem:[#allocation10 + $0x6d8] sm:$0xff]
        %v1879 = vld [vmem:[#allocation10 + $0x6e0] sm:$0xff]
        %v1880 = vld [vmem:[#allocation10 + $0x6e8] sm:$0xff]
        %v1881 = vld [vmem:[#allocation10 + $0x6f0] sm:$0xff]
        %v1882 = vld [vmem:[#allocation10 + $0x6f8] sm:$0xff]
        %v1883 = vld [vmem:[#allocation10 + $0x700] sm:$0xff]
        %v1884 = vld [vmem:[#allocation10 + $0x708] sm:$0xff]
        %v1885 = vld [vmem:[#allocation10 + $0x710] sm:$0xff]
        %v1886 = vld [vmem:[#allocation10 + $0x718] sm:$0xff]
        %v1887 = vld [vmem:[#allocation10 + $0x720] sm:$0xff]
        %v1888 = vld [vmem:[#allocation10 + $0x728] sm:$0xff]
        %v1889 = vld [vmem:[#allocation10 + $0x730] sm:$0xff]
        %v1890 = vld [vmem:[#allocation10 + $0x738] sm:$0xff]
        %v1891 = vld [vmem:[#allocation10 + $0x740] sm:$0xff]
        %v1892 = vld [vmem:[#allocation10 + $0x748] sm:$0xff]
        %v1893 = vld [vmem:[#allocation10 + $0x750] sm:$0xff]
        %v1894 = vld [vmem:[#allocation10 + $0x758] sm:$0xff]
        %v1895 = vld [vmem:[#allocation10 + $0x760] sm:$0xff]
        %v1896 = vld [vmem:[#allocation10 + $0x768] sm:$0xff]
        %v1897 = vld [vmem:[#allocation10 + $0x770] sm:$0xff]
        %v1898 = vld [vmem:[#allocation10 + $0x778] sm:$0xff]
        %v1899 = vld [vmem:[#allocation10 + $0x780] sm:$0xff]
        %v1900 = vld [vmem:[#allocation10 + $0x788] sm:$0xff]
        %v1901 = vld [vmem:[#allocation10 + $0x790] sm:$0xff]
        %v1902 = vld [vmem:[#allocation10 + $0x798] sm:$0xff]
        %v1903 = vld [vmem:[#allocation10 + $0x7a0] sm:$0xff]
        %v1904 = vld [vmem:[#allocation10 + $0x7a8] sm:$0xff]
        %v1905 = vld [vmem:[#allocation10 + $0x7b0] sm:$0xff]
        %v1906 = vld [vmem:[#allocation10 + $0x7b8] sm:$0xff]
        %v1907 = vld [vmem:[#allocation10 + $0x7c0] sm:$0xff]
        %v1908 = vld [vmem:[#allocation10 + $0x7c8] sm:$0xff]
        %v1909 = vld [vmem:[#allocation10 + $0x7d0] sm:$0xff]
        %v1910 = vld [vmem:[#allocation10 + $0x7d8] sm:$0xff]
        %v1911 = vld [vmem:[#allocation10 + $0x7e0] sm:$0xff]
        %v1912 = vld [vmem:[#allocation10 + $0x7e8] sm:$0xff]
        %v1913 = vld [vmem:[#allocation10 + $0x7f0] sm:$0xff]
        %v1914 = vld [vmem:[#allocation10 + $0x7f8] sm:$0xff]
        %1915 = vmatprep.subr.mxu0 %v1720
        %1916 = vmatpush1.msra.mxu0 %v1719
        %1917 = vmatprep.subr.mxu0 %v1716
        %1918 = vmatpush1.msra.mxu0 %v1715
        %1919 = vmatprep.subr.mxu0 %v1712
        %1920 = vmatpush1.msra.mxu0 %v1711
        %1921 = vmatprep.subr.mxu0 %v1708
        %1922 = vmatpush1.msra.mxu0 %v1707
        %1923 = vmatprep.subr.mxu0 %v1704
        %1924 = vmatpush1.msra.mxu0 %v1703
        %1925 = vmatprep.subr.mxu0 %v1700
        %1926 = vmatpush1.msra.mxu0 %v1699
        %1927 = vmatprep.subr.mxu0 %v1696
        %1928 = vmatpush1.msra.mxu0 %v1695
        %1929 = vmatprep.subr.mxu0 %v1692
        %1930 = vmatpush1.msra.mxu0 %v1691
        %1931 = vmatprep.subr.mxu0 %v1688
        %1932 = vmatpush1.msra.mxu0 %v1687
        %1933 = vmatprep.subr.mxu0 %v1684
        %1934 = vmatpush1.msra.mxu0 %v1683
        %1935 = vmatprep.subr.mxu0 %v1680
        %1936 = vmatpush1.msra.mxu0 %v1679
        %1937 = vmatprep.subr.mxu0 %v1676
        %1938 = vmatpush1.msra.mxu0 %v1675
        %1939 = vmatprep.subr.mxu0 %v1672
        %1940 = vmatpush1.msra.mxu0 %v1671
        %1941 = vmatprep.subr.mxu0 %v1668
        %1942 = vmatpush1.msra.mxu0 %v1667
        %1943 = vmatprep.subr.mxu0 %v1664
        %1944 = vmatpush1.msra.mxu0 %v1663
        %1945 = vmatprep.subr.mxu0 %v1660
        %1946 = vmatpush1.msra.mxu0 %v1659
        %1947 = vmatprep.subr.mxu0 %v1784
        %1948 = vmatpush2.msra.mxu0 %v1783
        %1949 = vmatprep.subr.mxu0 %v1780
        %1950 = vmatpush2.msra.mxu0 %v1779
        %1951 = vmatprep.subr.mxu0 %v1776
        %1952 = vmatpush2.msra.mxu0 %v1775
        %1953 = vmatprep.subr.mxu0 %v1772
        %1954 = vmatpush2.msra.mxu0 %v1771
        %1955 = vmatprep.subr.mxu0 %v1768
        %1956 = vmatpush2.msra.mxu0 %v1767
        %1957 = vmatprep.subr.mxu0 %v1764
        %1958 = vmatpush2.msra.mxu0 %v1763
        %1959 = vmatprep.subr.mxu0 %v1760
        %1960 = vmatpush2.msra.mxu0 %v1759
        %1961 = vmatprep.subr.mxu0 %v1756
        %1962 = vmatpush2.msra.mxu0 %v1755
        %1963 = vmatprep.subr.mxu0 %v1752
        %1964 = vmatpush2.msra.mxu0 %v1751
        %1965 = vmatprep.subr.mxu0 %v1748
        %1966 = vmatpush2.msra.mxu0 %v1747
        %1967 = vmatprep.subr.mxu0 %v1744
        %1968 = vmatpush2.msra.mxu0 %v1743
        %1969 = vmatprep.subr.mxu0 %v1740
        %1970 = vmatpush2.msra.mxu0 %v1739
        %1971 = vmatprep.subr.mxu0 %v1736
        %1972 = vmatpush2.msra.mxu0 %v1735
        %1973 = vmatprep.subr.mxu0 %v1732
        %1974 = vmatpush2.msra.mxu0 %v1731
        %1975 = vmatprep.subr.mxu0 %v1728
        %1976 = vmatpush2.msra.mxu0 %v1727
        %1977 = vmatprep.subr.mxu0 %v1724
        %1978 = vmatpush2.msra.mxu0 %v1723
        %1979 = vmatprep.mubr.f32.mxu0 %v1644
        %1980 = vmatmul.mubr.f32.gmra.mxu0 %v1643
        %v1981 = vpop.f32.mrf.mxu0
        %v1982 = vadd.f32 0.0, %v1981
        %v1983 = vpop.f32.mrf.mxu0
        %v1984 = vadd.f32 0.0, %v1983
        %1985 = vmatprep.mubr.f32.mxu0 %v1648
        %1986 = vmatmul.mubr.f32.gmra.mxu0 %v1647
        %v1987 = vpop.f32.mrf.mxu0
        %v1988 = vadd.f32 0.0, %v1987
        %v1989 = vpop.f32.mrf.mxu0
        %v1990 = vadd.f32 0.0, %v1989
        %1991 = vmatprep.mubr.f32.mxu0 %v1652
        %1992 = vmatmul.mubr.f32.gmra.mxu0 %v1651
        %v1993 = vpop.f32.mrf.mxu0
        %v1994 = vadd.f32 0.0, %v1993
        %v1995 = vpop.f32.mrf.mxu0
        %v1996 = vadd.f32 0.0, %v1995
        %1997 = vmatprep.mubr.f32.mxu0 %v1656
        %1998 = vmatmul.mubr.f32.gmra.mxu0 %v1655
        %v1999 = vpop.f32.mrf.mxu0
        %v2000 = vadd.f32 0.0, %v1999
        %v2001 = vpop.f32.mrf.mxu0
        %v2002 = vadd.f32 0.0, %v2001
        %2003 = vdwg.mxu0
        %2004 = vmatprep.subr.mxu0 %v1848
        %2005 = vmatpush1.msra.mxu0 %v1847
        %2006 = vmatprep.subr.mxu0 %v1844
        %2007 = vmatpush1.msra.mxu0 %v1843
        %2008 = vmatprep.subr.mxu0 %v1840
        %2009 = vmatpush1.msra.mxu0 %v1839
        %2010 = vmatprep.subr.mxu0 %v1836
        %2011 = vmatpush1.msra.mxu0 %v1835
        %2012 = vmatprep.subr.mxu0 %v1832
        %2013 = vmatpush1.msra.mxu0 %v1831
        %2014 = vmatprep.subr.mxu0 %v1828
        %2015 = vmatpush1.msra.mxu0 %v1827
        %2016 = vmatprep.subr.mxu0 %v1824
        %2017 = vmatpush1.msra.mxu0 %v1823
        %2018 = vmatprep.subr.mxu0 %v1820
        %2019 = vmatpush1.msra.mxu0 %v1819
        %2020 = vmatprep.subr.mxu0 %v1816
        %2021 = vmatpush1.msra.mxu0 %v1815
        %2022 = vmatprep.subr.mxu0 %v1812
        %2023 = vmatpush1.msra.mxu0 %v1811
        %2024 = vmatprep.subr.mxu0 %v1808
        %2025 = vmatpush1.msra.mxu0 %v1807
        %2026 = vmatprep.subr.mxu0 %v1804
        %2027 = vmatpush1.msra.mxu0 %v1803
        %2028 = vmatprep.subr.mxu0 %v1800
        %2029 = vmatpush1.msra.mxu0 %v1799
        %2030 = vmatprep.subr.mxu0 %v1796
        %2031 = vmatpush1.msra.mxu0 %v1795
        %2032 = vmatprep.subr.mxu0 %v1792
        %2033 = vmatpush1.msra.mxu0 %v1791
        %2034 = vmatprep.subr.mxu0 %v1788
        %2035 = vmatpush1.msra.mxu0 %v1787
        %2036 = vmatprep.subr.mxu0 %v1912
        %2037 = vmatpush2.msra.mxu0 %v1911
        %2038 = vmatprep.subr.mxu0 %v1908
        %2039 = vmatpush2.msra.mxu0 %v1907
        %2040 = vmatprep.subr.mxu0 %v1904
        %2041 = vmatpush2.msra.mxu0 %v1903
        %2042 = vmatprep.subr.mxu0 %v1900
        %2043 = vmatpush2.msra.mxu0 %v1899
        %2044 = vmatprep.subr.mxu0 %v1896
        %2045 = vmatpush2.msra.mxu0 %v1895
        %2046 = vmatprep.subr.mxu0 %v1892
        %2047 = vmatpush2.msra.mxu0 %v1891
        %2048 = vmatprep.subr.mxu0 %v1888
        %2049 = vmatpush2.msra.mxu0 %v1887
        %2050 = vmatprep.subr.mxu0 %v1884
        %2051 = vmatpush2.msra.mxu0 %v1883
        %2052 = vmatprep.subr.mxu0 %v1880
        %2053 = vmatpush2.msra.mxu0 %v1879
        %2054 = vmatprep.subr.mxu0 %v1876
        %2055 = vmatpush2.msra.mxu0 %v1875
        %2056 = vmatprep.subr.mxu0 %v1872
        %2057 = vmatpush2.msra.mxu0 %v1871
        %2058 = vmatprep.subr.mxu0 %v1868
        %2059 = vmatpush2.msra.mxu0 %v1867
        %2060 = vmatprep.subr.mxu0 %v1864
        %2061 = vmatpush2.msra.mxu0 %v1863
        %2062 = vmatprep.subr.mxu0 %v1860
        %2063 = vmatpush2.msra.mxu0 %v1859
        %2064 = vmatprep.subr.mxu0 %v1856
        %2065 = vmatpush2.msra.mxu0 %v1855
        %2066 = vmatprep.subr.mxu0 %v1852
        %2067 = vmatpush2.msra.mxu0 %v1851
        %2068 = vmatprep.mubr.f32.mxu0 %v1646
        %2069 = vmatmul.mubr.f32.gmra.mxu0 %v1645
        %v2070 = vpop.f32.mrf.mxu0
        %v2071 = vadd.f32 %v1982, %v2070
        %v2072 = vpop.f32.mrf.mxu0
        %v2073 = vadd.f32 %v1984, %v2072
        %2074 = vmatprep.mubr.f32.mxu0 %v1650
        %2075 = vmatmul.mubr.f32.gmra.mxu0 %v1649
        %v2076 = vpop.f32.mrf.mxu0
        %v2077 = vadd.f32 %v1988, %v2076
        %v2078 = vpop.f32.mrf.mxu0
        %v2079 = vadd.f32 %v1990, %v2078
        %2080 = vmatprep.mubr.f32.mxu0 %v1654
        %2081 = vmatmul.mubr.f32.gmra.mxu0 %v1653
        %v2082 = vpop.f32.mrf.mxu0
        %v2083 = vadd.f32 %v1994, %v2082
        %v2084 = vpop.f32.mrf.mxu0
        %v2085 = vadd.f32 %v1996, %v2084
        %2086 = vmatprep.mubr.f32.mxu0 %v1658
        %2087 = vmatmul.mubr.f32.gmra.mxu0 %v1657
        %v2088 = vpop.f32.mrf.mxu0
        %v2089 = vadd.f32 %v2000, %v2088
        %v2090 = vpop.f32.mrf.mxu0
        %v2091 = vadd.f32 %v2002, %v2090
        %2092 = vdwg.mxu0
        %2093 = vmatprep.subr.mxu0 %v1722
        %2094 = vmatpush1.msra.mxu0 %v1721
        %2095 = vmatprep.subr.mxu0 %v1718
        %2096 = vmatpush1.msra.mxu0 %v1717
        %2097 = vmatprep.subr.mxu0 %v1714
        %2098 = vmatpush1.msra.mxu0 %v1713
        %2099 = vmatprep.subr.mxu0 %v1710
        %2100 = vmatpush1.msra.mxu0 %v1709
        %2101 = vmatprep.subr.mxu0 %v1706
        %2102 = vmatpush1.msra.mxu0 %v1705
        %2103 = vmatprep.subr.mxu0 %v1702
        %2104 = vmatpush1.msra.mxu0 %v1701
        %2105 = vmatprep.subr.mxu0 %v1698
        %2106 = vmatpush1.msra.mxu0 %v1697
        %2107 = vmatprep.subr.mxu0 %v1694
        %2108 = vmatpush1.msra.mxu0 %v1693
        %2109 = vmatprep.subr.mxu0 %v1690
        %2110 = vmatpush1.msra.mxu0 %v1689
        %2111 = vmatprep.subr.mxu0 %v1686
        %2112 = vmatpush1.msra.mxu0 %v1685
        %2113 = vmatprep.subr.mxu0 %v1682
        %2114 = vmatpush1.msra.mxu0 %v1681
        %2115 = vmatprep.subr.mxu0 %v1678
        %2116 = vmatpush1.msra.mxu0 %v1677
        %2117 = vmatprep.subr.mxu0 %v1674
        %2118 = vmatpush1.msra.mxu0 %v1673
        %2119 = vmatprep.subr.mxu0 %v1670
        %2120 = vmatpush1.msra.mxu0 %v1669
        %2121 = vmatprep.subr.mxu0 %v1666
        %2122 = vmatpush1.msra.mxu0 %v1665
        %2123 = vmatprep.subr.mxu0 %v1662
        %2124 = vmatpush1.msra.mxu0 %v1661
        %2125 = vmatprep.subr.mxu0 %v1786
        %2126 = vmatpush2.msra.mxu0 %v1785
        %2127 = vmatprep.subr.mxu0 %v1782
        %2128 = vmatpush2.msra.mxu0 %v1781
        %2129 = vmatprep.subr.mxu0 %v1778
        %2130 = vmatpush2.msra.mxu0 %v1777
        %2131 = vmatprep.subr.mxu0 %v1774
        %2132 = vmatpush2.msra.mxu0 %v1773
        %2133 = vmatprep.subr.mxu0 %v1770
        %2134 = vmatpush2.msra.mxu0 %v1769
        %2135 = vmatprep.subr.mxu0 %v1766
        %2136 = vmatpush2.msra.mxu0 %v1765
        %2137 = vmatprep.subr.mxu0 %v1762
        %2138 = vmatpush2.msra.mxu0 %v1761
        %2139 = vmatprep.subr.mxu0 %v1758
        %2140 = vmatpush2.msra.mxu0 %v1757
        %2141 = vmatprep.subr.mxu0 %v1754
        %2142 = vmatpush2.msra.mxu0 %v1753
        %2143 = vmatprep.subr.mxu0 %v1750
        %2144 = vmatpush2.msra.mxu0 %v1749
        %2145 = vmatprep.subr.mxu0 %v1746
        %2146 = vmatpush2.msra.mxu0 %v1745
        %2147 = vmatprep.subr.mxu0 %v1742
        %2148 = vmatpush2.msra.mxu0 %v1741
        %2149 = vmatprep.subr.mxu0 %v1738
        %2150 = vmatpush2.msra.mxu0 %v1737
        %2151 = vmatprep.subr.mxu0 %v1734
        %2152 = vmatpush2.msra.mxu0 %v1733
        %2153 = vmatprep.subr.mxu0 %v1730
        %2154 = vmatpush2.msra.mxu0 %v1729
        %2155 = vmatprep.subr.mxu0 %v1726
        %2156 = vmatpush2.msra.mxu0 %v1725
        %2157 = vmatprep.mubr.f32.mxu0 %v1644
        %2158 = vmatmul.mubr.f32.gmra.mxu0 %v1643
        %v2159 = vpop.f32.mrf.mxu0
        %v2160 = vadd.f32 0.0, %v2159
        %v2161 = vpop.f32.mrf.mxu0
        %v2162 = vadd.f32 0.0, %v2161
        %2163 = vmatprep.mubr.f32.mxu0 %v1648
        %2164 = vmatmul.mubr.f32.gmra.mxu0 %v1647
        %v2165 = vpop.f32.mrf.mxu0
        %v2166 = vadd.f32 0.0, %v2165
        %v2167 = vpop.f32.mrf.mxu0
        %v2168 = vadd.f32 0.0, %v2167
        %2169 = vmatprep.mubr.f32.mxu0 %v1652
        %2170 = vmatmul.mubr.f32.gmra.mxu0 %v1651
        %v2171 = vpop.f32.mrf.mxu0
        %v2172 = vadd.f32 0.0, %v2171
        %v2173 = vpop.f32.mrf.mxu0
        %v2174 = vadd.f32 0.0, %v2173
        %2175 = vmatprep.mubr.f32.mxu0 %v1656
        %2176 = vmatmul.mubr.f32.gmra.mxu0 %v1655
        %v2177 = vpop.f32.mrf.mxu0
        %v2178 = vadd.f32 0.0, %v2177
        %v2179 = vpop.f32.mrf.mxu0
        %v2180 = vadd.f32 0.0, %v2179
        %2181 = vdwg.mxu0
        %2182 = vmatprep.subr.mxu0 %v1850
        %2183 = vmatpush1.msra.mxu0 %v1849
        %2184 = vmatprep.subr.mxu0 %v1846
        %2185 = vmatpush1.msra.mxu0 %v1845
        %2186 = vmatprep.subr.mxu0 %v1842
        %2187 = vmatpush1.msra.mxu0 %v1841
        %2188 = vmatprep.subr.mxu0 %v1838
        %2189 = vmatpush1.msra.mxu0 %v1837
        %2190 = vmatprep.subr.mxu0 %v1834
        %2191 = vmatpush1.msra.mxu0 %v1833
        %2192 = vmatprep.subr.mxu0 %v1830
        %2193 = vmatpush1.msra.mxu0 %v1829
        %2194 = vmatprep.subr.mxu0 %v1826
        %2195 = vmatpush1.msra.mxu0 %v1825
        %2196 = vmatprep.subr.mxu0 %v1822
        %2197 = vmatpush1.msra.mxu0 %v1821
        %2198 = vmatprep.subr.mxu0 %v1818
        %2199 = vmatpush1.msra.mxu0 %v1817
        %2200 = vmatprep.subr.mxu0 %v1814
        %2201 = vmatpush1.msra.mxu0 %v1813
        %2202 = vmatprep.subr.mxu0 %v1810
        %2203 = vmatpush1.msra.mxu0 %v1809
        %2204 = vmatprep.subr.mxu0 %v1806
        %2205 = vmatpush1.msra.mxu0 %v1805
        %2206 = vmatprep.subr.mxu0 %v1802
        %2207 = vmatpush1.msra.mxu0 %v1801
        %2208 = vmatprep.subr.mxu0 %v1798
        %2209 = vmatpush1.msra.mxu0 %v1797
        %2210 = vmatprep.subr.mxu0 %v1794
        %2211 = vmatpush1.msra.mxu0 %v1793
        %2212 = vmatprep.subr.mxu0 %v1790
        %2213 = vmatpush1.msra.mxu0 %v1789
        %2214 = vmatprep.subr.mxu0 %v1914
        %2215 = vmatpush2.msra.mxu0 %v1913
        %2216 = vmatprep.subr.mxu0 %v1910
        %2217 = vmatpush2.msra.mxu0 %v1909
        %2218 = vmatprep.subr.mxu0 %v1906
        %2219 = vmatpush2.msra.mxu0 %v1905
        %2220 = vmatprep.subr.mxu0 %v1902
        %2221 = vmatpush2.msra.mxu0 %v1901
        %2222 = vmatprep.subr.mxu0 %v1898
        %2223 = vmatpush2.msra.mxu0 %v1897
        %2224 = vmatprep.subr.mxu0 %v1894
        %2225 = vmatpush2.msra.mxu0 %v1893
        %2226 = vmatprep.subr.mxu0 %v1890
        %2227 = vmatpush2.msra.mxu0 %v1889
        %2228 = vmatprep.subr.mxu0 %v1886
        %2229 = vmatpush2.msra.mxu0 %v1885
        %2230 = vmatprep.subr.mxu0 %v1882
        %2231 = vmatpush2.msra.mxu0 %v1881
        %2232 = vmatprep.subr.mxu0 %v1878
        %2233 = vmatpush2.msra.mxu0 %v1877
        %2234 = vmatprep.subr.mxu0 %v1874
        %2235 = vmatpush2.msra.mxu0 %v1873
        %2236 = vmatprep.subr.mxu0 %v1870
        %2237 = vmatpush2.msra.mxu0 %v1869
        %2238 = vmatprep.subr.mxu0 %v1866
        %2239 = vmatpush2.msra.mxu0 %v1865
        %2240 = vmatprep.subr.mxu0 %v1862
        %2241 = vmatpush2.msra.mxu0 %v1861
        %2242 = vmatprep.subr.mxu0 %v1858
        %2243 = vmatpush2.msra.mxu0 %v1857
        %2244 = vmatprep.subr.mxu0 %v1854
        %2245 = vmatpush2.msra.mxu0 %v1853
        %2246 = vmatprep.mubr.f32.mxu0 %v1646
        %2247 = vmatmul.mubr.f32.gmra.mxu0 %v1645
        %v2248 = vpop.f32.mrf.mxu0
        %v2249 = vadd.f32 %v2160, %v2248
        %v2250 = vpop.f32.mrf.mxu0
        %v2251 = vadd.f32 %v2162, %v2250
        %2252 = vmatprep.mubr.f32.mxu0 %v1650
        %2253 = vmatmul.mubr.f32.gmra.mxu0 %v1649
        %v2254 = vpop.f32.mrf.mxu0
        %v2255 = vadd.f32 %v2166, %v2254
        %v2256 = vpop.f32.mrf.mxu0
        %v2257 = vadd.f32 %v2168, %v2256
        %2258 = vmatprep.mubr.f32.mxu0 %v1654
        %2259 = vmatmul.mubr.f32.gmra.mxu0 %v1653
        %v2260 = vpop.f32.mrf.mxu0
        %v2261 = vadd.f32 %v2172, %v2260
        %v2262 = vpop.f32.mrf.mxu0
        %v2263 = vadd.f32 %v2174, %v2262
        %2264 = vmatprep.mubr.f32.mxu0 %v1658
        %2265 = vmatmul.mubr.f32.gmra.mxu0 %v1657
        %v2266 = vpop.f32.mrf.mxu0
        %v2267 = vadd.f32 %v2178, %v2266
        %v2268 = vpop.f32.mrf.mxu0
        %v2269 = vadd.f32 %v2180, %v2268
        %2270 = vdwg.mxu0
        %s2271 = sld [smem:[#allocation8]]
        %v2272 = vstv %s2271
        %v2273 = vmul.f32 %v2272, %v2071
        %v2274 = vmul.f32 %v2272, %v2073
        %v2275 = vmul.f32 %v2272, %v2249
        %v2276 = vmul.f32 %v2272, %v2251
        %s2277 = sld [smem:[#allocation8 + $0x1]]
        %v2278 = vstv %s2277
        %v2279 = vmul.f32 %v2278, %v2077
        %v2280 = vmul.f32 %v2278, %v2079
        %v2281 = vmul.f32 %v2278, %v2255
        %v2282 = vmul.f32 %v2278, %v2257
        %v2283 = vadd.f32 %v2273, %v2279
        %v2284 = vadd.f32 %v2274, %v2280
        %v2285 = vadd.f32 %v2275, %v2281
        %v2286 = vadd.f32 %v2276, %v2282
        %s2287 = sld [smem:[#allocation8 + $0x2]]
        %v2288 = vstv %s2287
        %v2289 = vmul.f32 %v2288, %v2083
        %v2290 = vmul.f32 %v2288, %v2085
        %v2291 = vmul.f32 %v2288, %v2261
        %v2292 = vmul.f32 %v2288, %v2263
        %v2293 = vadd.f32 %v2283, %v2289
        %v2294 = vadd.f32 %v2284, %v2290
        %v2295 = vadd.f32 %v2285, %v2291
        %v2296 = vadd.f32 %v2286, %v2292
        %s2297 = sld [smem:[#allocation8 + $0x3]]
        %v2298 = vstv %s2297
        %v2299 = vmul.f32 %v2298, %v2089
        %v2300 = vmul.f32 %v2298, %v2091
        %v2301 = vmul.f32 %v2298, %v2267
        %v2302 = vmul.f32 %v2298, %v2269
        %v2303 = vadd.f32 %v2293, %v2299
        %v2304 = vadd.f32 %v2294, %v2300
        %v2305 = vadd.f32 %v2295, %v2301
        %v2306 = vadd.f32 %v2296, %v2302
        %s2307 = sld [smem:[#allocation2]]
        %v2308 = vstv %s2307
        %v2309 = vadd.f32 %v2303, %v2308
        %v2310 = vadd.f32 %v2304, %v2308
        %v2311 = vadd.f32 %v2305, %v2308
        %v2312 = vadd.f32 %v2306, %v2308
        %v2313 = vld [vmem:[#allocation15] sm:$0xff]
        %v2314 = vld [vmem:[#allocation15 + $0x8] sm:$0xff]
        %v2315 = vld [vmem:[#allocation15 + $0x10] sm:$0xff]
        %v2316 = vld [vmem:[#allocation15 + $0x18] sm:$0xff]
        %v2317 = vld [vmem:[#allocation15 + $0x20] sm:$0xff]
        %v2318 = vld [vmem:[#allocation15 + $0x28] sm:$0xff]
        %v2319 = vld [vmem:[#allocation15 + $0x30] sm:$0xff]
        %v2320 = vld [vmem:[#allocation15 + $0x38] sm:$0xff]
        %v2321 = vld [vmem:[#allocation15 + $0x40] sm:$0xff]
        %v2322 = vld [vmem:[#allocation15 + $0x48] sm:$0xff]
        %v2323 = vld [vmem:[#allocation15 + $0x50] sm:$0xff]
        %v2324 = vld [vmem:[#allocation15 + $0x58] sm:$0xff]
        %v2325 = vld [vmem:[#allocation15 + $0x60] sm:$0xff]
        %v2326 = vld [vmem:[#allocation15 + $0x68] sm:$0xff]
        %v2327 = vld [vmem:[#allocation15 + $0x70] sm:$0xff]
        %v2328 = vld [vmem:[#allocation15 + $0x78] sm:$0xff]
        %v2329 = vld [vmem:[#allocation15 + $0x80] sm:$0xff]
        %v2330 = vld [vmem:[#allocation15 + $0x88] sm:$0xff]
        %v2331 = vld [vmem:[#allocation15 + $0x90] sm:$0xff]
        %v2332 = vld [vmem:[#allocation15 + $0x98] sm:$0xff]
        %v2333 = vld [vmem:[#allocation15 + $0xa0] sm:$0xff]
        %v2334 = vld [vmem:[#allocation15 + $0xa8] sm:$0xff]
        %v2335 = vld [vmem:[#allocation15 + $0xb0] sm:$0xff]
        %v2336 = vld [vmem:[#allocation15 + $0xb8] sm:$0xff]
        %v2337 = vld [vmem:[#allocation15 + $0xc0] sm:$0xff]
        %v2338 = vld [vmem:[#allocation15 + $0xc8] sm:$0xff]
        %v2339 = vld [vmem:[#allocation15 + $0xd0] sm:$0xff]
        %v2340 = vld [vmem:[#allocation15 + $0xd8] sm:$0xff]
        %v2341 = vld [vmem:[#allocation15 + $0xe0] sm:$0xff]
        %v2342 = vld [vmem:[#allocation15 + $0xe8] sm:$0xff]
        %v2343 = vld [vmem:[#allocation15 + $0xf0] sm:$0xff]
        %v2344 = vld [vmem:[#allocation15 + $0xf8] sm:$0xff]
        %v2345 = vld [vmem:[#allocation15 + $0x100] sm:$0xff]
        %v2346 = vld [vmem:[#allocation15 + $0x108] sm:$0xff]
        %v2347 = vld [vmem:[#allocation15 + $0x110] sm:$0xff]
        %v2348 = vld [vmem:[#allocation15 + $0x118] sm:$0xff]
        %v2349 = vld [vmem:[#allocation15 + $0x120] sm:$0xff]
        %v2350 = vld [vmem:[#allocation15 + $0x128] sm:$0xff]
        %v2351 = vld [vmem:[#allocation15 + $0x130] sm:$0xff]
        %v2352 = vld [vmem:[#allocation15 + $0x138] sm:$0xff]
        %v2353 = vld [vmem:[#allocation15 + $0x140] sm:$0xff]
        %v2354 = vld [vmem:[#allocation15 + $0x148] sm:$0xff]
        %v2355 = vld [vmem:[#allocation15 + $0x150] sm:$0xff]
        %v2356 = vld [vmem:[#allocation15 + $0x158] sm:$0xff]
        %v2357 = vld [vmem:[#allocation15 + $0x160] sm:$0xff]
        %v2358 = vld [vmem:[#allocation15 + $0x168] sm:$0xff]
        %v2359 = vld [vmem:[#allocation15 + $0x170] sm:$0xff]
        %v2360 = vld [vmem:[#allocation15 + $0x178] sm:$0xff]
        %v2361 = vld [vmem:[#allocation15 + $0x180] sm:$0xff]
        %v2362 = vld [vmem:[#allocation15 + $0x188] sm:$0xff]
        %v2363 = vld [vmem:[#allocation15 + $0x190] sm:$0xff]
        %v2364 = vld [vmem:[#allocation15 + $0x198] sm:$0xff]
        %v2365 = vld [vmem:[#allocation15 + $0x1a0] sm:$0xff]
        %v2366 = vld [vmem:[#allocation15 + $0x1a8] sm:$0xff]
        %v2367 = vld [vmem:[#allocation15 + $0x1b0] sm:$0xff]
        %v2368 = vld [vmem:[#allocation15 + $0x1b8] sm:$0xff]
        %v2369 = vld [vmem:[#allocation15 + $0x1c0] sm:$0xff]
        %v2370 = vld [vmem:[#allocation15 + $0x1c8] sm:$0xff]
        %v2371 = vld [vmem:[#allocation15 + $0x1d0] sm:$0xff]
        %v2372 = vld [vmem:[#allocation15 + $0x1d8] sm:$0xff]
        %v2373 = vld [vmem:[#allocation15 + $0x1e0] sm:$0xff]
        %v2374 = vld [vmem:[#allocation15 + $0x1e8] sm:$0xff]
        %v2375 = vld [vmem:[#allocation15 + $0x1f0] sm:$0xff]
        %v2376 = vld [vmem:[#allocation15 + $0x1f8] sm:$0xff]
        %v2377 = vld [vmem:[#allocation15 + $0x200] sm:$0xff]
        %v2378 = vld [vmem:[#allocation15 + $0x208] sm:$0xff]
        %v2379 = vld [vmem:[#allocation15 + $0x210] sm:$0xff]
        %v2380 = vld [vmem:[#allocation15 + $0x218] sm:$0xff]
        %v2381 = vld [vmem:[#allocation15 + $0x220] sm:$0xff]
        %v2382 = vld [vmem:[#allocation15 + $0x228] sm:$0xff]
        %v2383 = vld [vmem:[#allocation15 + $0x230] sm:$0xff]
        %v2384 = vld [vmem:[#allocation15 + $0x238] sm:$0xff]
        %v2385 = vld [vmem:[#allocation15 + $0x240] sm:$0xff]
        %v2386 = vld [vmem:[#allocation15 + $0x248] sm:$0xff]
        %v2387 = vld [vmem:[#allocation15 + $0x250] sm:$0xff]
        %v2388 = vld [vmem:[#allocation15 + $0x258] sm:$0xff]
        %v2389 = vld [vmem:[#allocation15 + $0x260] sm:$0xff]
        %v2390 = vld [vmem:[#allocation15 + $0x268] sm:$0xff]
        %v2391 = vld [vmem:[#allocation15 + $0x270] sm:$0xff]
        %v2392 = vld [vmem:[#allocation15 + $0x278] sm:$0xff]
        %v2393 = vld [vmem:[#allocation15 + $0x280] sm:$0xff]
        %v2394 = vld [vmem:[#allocation15 + $0x288] sm:$0xff]
        %v2395 = vld [vmem:[#allocation15 + $0x290] sm:$0xff]
        %v2396 = vld [vmem:[#allocation15 + $0x298] sm:$0xff]
        %v2397 = vld [vmem:[#allocation15 + $0x2a0] sm:$0xff]
        %v2398 = vld [vmem:[#allocation15 + $0x2a8] sm:$0xff]
        %v2399 = vld [vmem:[#allocation15 + $0x2b0] sm:$0xff]
        %v2400 = vld [vmem:[#allocation15 + $0x2b8] sm:$0xff]
        %v2401 = vld [vmem:[#allocation15 + $0x2c0] sm:$0xff]
        %v2402 = vld [vmem:[#allocation15 + $0x2c8] sm:$0xff]
        %v2403 = vld [vmem:[#allocation15 + $0x2d0] sm:$0xff]
        %v2404 = vld [vmem:[#allocation15 + $0x2d8] sm:$0xff]
        %v2405 = vld [vmem:[#allocation15 + $0x2e0] sm:$0xff]
        %v2406 = vld [vmem:[#allocation15 + $0x2e8] sm:$0xff]
        %v2407 = vld [vmem:[#allocation15 + $0x2f0] sm:$0xff]
        %v2408 = vld [vmem:[#allocation15 + $0x2f8] sm:$0xff]
        %v2409 = vld [vmem:[#allocation15 + $0x300] sm:$0xff]
        %v2410 = vld [vmem:[#allocation15 + $0x308] sm:$0xff]
        %v2411 = vld [vmem:[#allocation15 + $0x310] sm:$0xff]
        %v2412 = vld [vmem:[#allocation15 + $0x318] sm:$0xff]
        %v2413 = vld [vmem:[#allocation15 + $0x320] sm:$0xff]
        %v2414 = vld [vmem:[#allocation15 + $0x328] sm:$0xff]
        %v2415 = vld [vmem:[#allocation15 + $0x330] sm:$0xff]
        %v2416 = vld [vmem:[#allocation15 + $0x338] sm:$0xff]
        %v2417 = vld [vmem:[#allocation15 + $0x340] sm:$0xff]
        %v2418 = vld [vmem:[#allocation15 + $0x348] sm:$0xff]
        %v2419 = vld [vmem:[#allocation15 + $0x350] sm:$0xff]
        %v2420 = vld [vmem:[#allocation15 + $0x358] sm:$0xff]
        %v2421 = vld [vmem:[#allocation15 + $0x360] sm:$0xff]
        %v2422 = vld [vmem:[#allocation15 + $0x368] sm:$0xff]
        %v2423 = vld [vmem:[#allocation15 + $0x370] sm:$0xff]
        %v2424 = vld [vmem:[#allocation15 + $0x378] sm:$0xff]
        %v2425 = vld [vmem:[#allocation15 + $0x380] sm:$0xff]
        %v2426 = vld [vmem:[#allocation15 + $0x388] sm:$0xff]
        %v2427 = vld [vmem:[#allocation15 + $0x390] sm:$0xff]
        %v2428 = vld [vmem:[#allocation15 + $0x398] sm:$0xff]
        %v2429 = vld [vmem:[#allocation15 + $0x3a0] sm:$0xff]
        %v2430 = vld [vmem:[#allocation15 + $0x3a8] sm:$0xff]
        %v2431 = vld [vmem:[#allocation15 + $0x3b0] sm:$0xff]
        %v2432 = vld [vmem:[#allocation15 + $0x3b8] sm:$0xff]
        %v2433 = vld [vmem:[#allocation15 + $0x3c0] sm:$0xff]
        %v2434 = vld [vmem:[#allocation15 + $0x3c8] sm:$0xff]
        %v2435 = vld [vmem:[#allocation15 + $0x3d0] sm:$0xff]
        %v2436 = vld [vmem:[#allocation15 + $0x3d8] sm:$0xff]
        %v2437 = vld [vmem:[#allocation15 + $0x3e0] sm:$0xff]
        %v2438 = vld [vmem:[#allocation15 + $0x3e8] sm:$0xff]
        %v2439 = vld [vmem:[#allocation15 + $0x3f0] sm:$0xff]
        %v2440 = vld [vmem:[#allocation15 + $0x3f8] sm:$0xff]
        %v2441 = vld [vmem:[%s12] sm:$0x3]
        %v2443 = vlaneseq
        %v2444 = vshrl.u32 %v2443, 7
        %v2445 = vsub.s32 0, %v2444
        %v2446 = vrot.slane %v2441, %v2445
        %v2447 = vlaneseq
        %v2448 = vshrl.u32 %v2447, 7
        %v2449 = vsub.s32 1, %v2448
        %v2450 = vrot.slane %v2441, %v2449
        %2453 = vmatprep.subr.mxu0 %v2344
        %2454 = vmatpush1.msra.mxu0 %v2343
        %2455 = vmatprep.subr.mxu0 %v2342
        %2456 = vmatpush1.msra.mxu0 %v2341
        %2457 = vmatprep.subr.mxu0 %v2340
        %2458 = vmatpush1.msra.mxu0 %v2339
        %2459 = vmatprep.subr.mxu0 %v2338
        %2460 = vmatpush1.msra.mxu0 %v2337
        %2461 = vmatprep.subr.mxu0 %v2336
        %2462 = vmatpush1.msra.mxu0 %v2335
        %2463 = vmatprep.subr.mxu0 %v2334
        %2464 = vmatpush1.msra.mxu0 %v2333
        %2465 = vmatprep.subr.mxu0 %v2332
        %2466 = vmatpush1.msra.mxu0 %v2331
        %2467 = vmatprep.subr.mxu0 %v2330
        %2468 = vmatpush1.msra.mxu0 %v2329
        %2469 = vmatprep.subr.mxu0 %v2328
        %2470 = vmatpush1.msra.mxu0 %v2327
        %2471 = vmatprep.subr.mxu0 %v2326
        %2472 = vmatpush1.msra.mxu0 %v2325
        %2473 = vmatprep.subr.mxu0 %v2324
        %2474 = vmatpush1.msra.mxu0 %v2323
        %2475 = vmatprep.subr.mxu0 %v2322
        %2476 = vmatpush1.msra.mxu0 %v2321
        %2477 = vmatprep.subr.mxu0 %v2320
        %2478 = vmatpush1.msra.mxu0 %v2319
        %2479 = vmatprep.subr.mxu0 %v2318
        %2480 = vmatpush1.msra.mxu0 %v2317
        %2481 = vmatprep.subr.mxu0 %v2316
        %2482 = vmatpush1.msra.mxu0 %v2315
        %2483 = vmatprep.subr.mxu0 %v2314
        %2484 = vmatpush1.msra.mxu0 %v2313
        %2485 = vmatprep.subr.mxu0 %v2376
        %2486 = vmatpush2.msra.mxu0 %v2375
        %2487 = vmatprep.subr.mxu0 %v2374
        %2488 = vmatpush2.msra.mxu0 %v2373
        %2489 = vmatprep.subr.mxu0 %v2372
        %2490 = vmatpush2.msra.mxu0 %v2371
        %2491 = vmatprep.subr.mxu0 %v2370
        %2492 = vmatpush2.msra.mxu0 %v2369
        %2493 = vmatprep.subr.mxu0 %v2368
        %2494 = vmatpush2.msra.mxu0 %v2367
        %2495 = vmatprep.subr.mxu0 %v2366
        %2496 = vmatpush2.msra.mxu0 %v2365
        %2497 = vmatprep.subr.mxu0 %v2364
        %2498 = vmatpush2.msra.mxu0 %v2363
        %2499 = vmatprep.subr.mxu0 %v2362
        %2500 = vmatpush2.msra.mxu0 %v2361
        %2501 = vmatprep.subr.mxu0 %v2360
        %2502 = vmatpush2.msra.mxu0 %v2359
        %2503 = vmatprep.subr.mxu0 %v2358
        %2504 = vmatpush2.msra.mxu0 %v2357
        %2505 = vmatprep.subr.mxu0 %v2356
        %2506 = vmatpush2.msra.mxu0 %v2355
        %2507 = vmatprep.subr.mxu0 %v2354
        %2508 = vmatpush2.msra.mxu0 %v2353
        %2509 = vmatprep.subr.mxu0 %v2352
        %2510 = vmatpush2.msra.mxu0 %v2351
        %2511 = vmatprep.subr.mxu0 %v2350
        %2512 = vmatpush2.msra.mxu0 %v2349
        %2513 = vmatprep.subr.mxu0 %v2348
        %2514 = vmatpush2.msra.mxu0 %v2347
        %2515 = vmatprep.subr.mxu0 %v2346
        %2516 = vmatpush2.msra.mxu0 %v2345
        %2517 = vmatprep.mubr.f32.mxu0 %v2310
        %2518 = vmatmul.mubr.f32.gmra.mxu0 %v2309
        %v2519 = vpop.f32.mrf.mxu0
        %v2520 = vadd.f32 %v2446, %v2519
        %v2521 = vpop.f32.mrf.mxu0
        %v2522 = vadd.f32 %v2450, %v2521
        %2523 = vdwg.mxu0
        %2524 = vmatprep.subr.mxu0 %v2408
        %2525 = vmatpush1.msra.mxu0 %v2407
        %2526 = vmatprep.subr.mxu0 %v2406
        %2527 = vmatpush1.msra.mxu0 %v2405
        %2528 = vmatprep.subr.mxu0 %v2404
        %2529 = vmatpush1.msra.mxu0 %v2403
        %2530 = vmatprep.subr.mxu0 %v2402
        %2531 = vmatpush1.msra.mxu0 %v2401
        %2532 = vmatprep.subr.mxu0 %v2400
        %2533 = vmatpush1.msra.mxu0 %v2399
        %2534 = vmatprep.subr.mxu0 %v2398
        %2535 = vmatpush1.msra.mxu0 %v2397
        %2536 = vmatprep.subr.mxu0 %v2396
        %2537 = vmatpush1.msra.mxu0 %v2395
        %2538 = vmatprep.subr.mxu0 %v2394
        %2539 = vmatpush1.msra.mxu0 %v2393
        %2540 = vmatprep.subr.mxu0 %v2392
        %2541 = vmatpush1.msra.mxu0 %v2391
        %2542 = vmatprep.subr.mxu0 %v2390
        %2543 = vmatpush1.msra.mxu0 %v2389
        %2544 = vmatprep.subr.mxu0 %v2388
        %2545 = vmatpush1.msra.mxu0 %v2387
        %2546 = vmatprep.subr.mxu0 %v2386
        %2547 = vmatpush1.msra.mxu0 %v2385
        %2548 = vmatprep.subr.mxu0 %v2384
        %2549 = vmatpush1.msra.mxu0 %v2383
        %2550 = vmatprep.subr.mxu0 %v2382
        %2551 = vmatpush1.msra.mxu0 %v2381
        %2552 = vmatprep.subr.mxu0 %v2380
        %2553 = vmatpush1.msra.mxu0 %v2379
        %2554 = vmatprep.subr.mxu0 %v2378
        %2555 = vmatpush1.msra.mxu0 %v2377
        %2556 = vmatprep.subr.mxu0 %v2440
        %2557 = vmatpush2.msra.mxu0 %v2439
        %2558 = vmatprep.subr.mxu0 %v2438
        %2559 = vmatpush2.msra.mxu0 %v2437
        %2560 = vmatprep.subr.mxu0 %v2436
        %2561 = vmatpush2.msra.mxu0 %v2435
        %2562 = vmatprep.subr.mxu0 %v2434
        %2563 = vmatpush2.msra.mxu0 %v2433
        %2564 = vmatprep.subr.mxu0 %v2432
        %2565 = vmatpush2.msra.mxu0 %v2431
        %2566 = vmatprep.subr.mxu0 %v2430
        %2567 = vmatpush2.msra.mxu0 %v2429
        %2568 = vmatprep.subr.mxu0 %v2428
        %2569 = vmatpush2.msra.mxu0 %v2427
        %2570 = vmatprep.subr.mxu0 %v2426
        %2571 = vmatpush2.msra.mxu0 %v2425
        %2572 = vmatprep.subr.mxu0 %v2424
        %2573 = vmatpush2.msra.mxu0 %v2423
        %2574 = vmatprep.subr.mxu0 %v2422
        %2575 = vmatpush2.msra.mxu0 %v2421
        %2576 = vmatprep.subr.mxu0 %v2420
        %2577 = vmatpush2.msra.mxu0 %v2419
        %2578 = vmatprep.subr.mxu0 %v2418
        %2579 = vmatpush2.msra.mxu0 %v2417
        %2580 = vmatprep.subr.mxu0 %v2416
        %2581 = vmatpush2.msra.mxu0 %v2415
        %2582 = vmatprep.subr.mxu0 %v2414
        %2583 = vmatpush2.msra.mxu0 %v2413
        %2584 = vmatprep.subr.mxu0 %v2412
        %2585 = vmatpush2.msra.mxu0 %v2411
        %2586 = vmatprep.subr.mxu0 %v2410
        %2587 = vmatpush2.msra.mxu0 %v2409
        %2588 = vmatprep.mubr.f32.mxu0 %v2312
        %2589 = vmatmul.mubr.f32.gmra.mxu0 %v2311
        %v2590 = vpop.f32.mrf.mxu0
        %v2591 = vadd.f32 %v2520, %v2590
        %v2592 = vpop.f32.mrf.mxu0
        %v2593 = vadd.f32 %v2522, %v2592
        %2594 = vdwg.mxu0
        %v2595 = vld [vmem:[#allocation12] sm:$0xff]
        %v2596 = vld [vmem:[#allocation12 + $0x8] sm:$0xff]
        %v2597 = vld [vmem:[#allocation12 + $0x10] sm:$0xff]
        %v2598 = vld [vmem:[#allocation12 + $0x18] sm:$0xff]
        %v2599 = vld [vmem:[#allocation12 + $0x20] sm:$0xff]
        %v2600 = vld [vmem:[#allocation12 + $0x28] sm:$0xff]
        %v2601 = vld [vmem:[#allocation12 + $0x30] sm:$0xff]
        %v2602 = vld [vmem:[#allocation12 + $0x38] sm:$0xff]
        %v2603 = vld [vmem:[#allocation12 + $0x40] sm:$0xff]
        %v2604 = vld [vmem:[#allocation12 + $0x48] sm:$0xff]
        %v2605 = vld [vmem:[#allocation12 + $0x50] sm:$0xff]
        %v2606 = vld [vmem:[#allocation12 + $0x58] sm:$0xff]
        %v2607 = vld [vmem:[#allocation12 + $0x60] sm:$0xff]
        %v2608 = vld [vmem:[#allocation12 + $0x68] sm:$0xff]
        %v2609 = vld [vmem:[#allocation12 + $0x70] sm:$0xff]
        %v2610 = vld [vmem:[#allocation12 + $0x78] sm:$0xff]
        %v2611 = vld [vmem:[#allocation12 + $0x80] sm:$0xff]
        %v2612 = vld [vmem:[#allocation12 + $0x88] sm:$0xff]
        %v2613 = vld [vmem:[#allocation12 + $0x90] sm:$0xff]
        %v2614 = vld [vmem:[#allocation12 + $0x98] sm:$0xff]
        %v2615 = vld [vmem:[#allocation12 + $0xa0] sm:$0xff]
        %v2616 = vld [vmem:[#allocation12 + $0xa8] sm:$0xff]
        %v2617 = vld [vmem:[#allocation12 + $0xb0] sm:$0xff]
        %v2618 = vld [vmem:[#allocation12 + $0xb8] sm:$0xff]
        %v2619 = vld [vmem:[#allocation12 + $0xc0] sm:$0xff]
        %v2620 = vld [vmem:[#allocation12 + $0xc8] sm:$0xff]
        %v2621 = vld [vmem:[#allocation12 + $0xd0] sm:$0xff]
        %v2622 = vld [vmem:[#allocation12 + $0xd8] sm:$0xff]
        %v2623 = vld [vmem:[#allocation12 + $0xe0] sm:$0xff]
        %v2624 = vld [vmem:[#allocation12 + $0xe8] sm:$0xff]
        %v2625 = vld [vmem:[#allocation12 + $0xf0] sm:$0xff]
        %v2626 = vld [vmem:[#allocation12 + $0xf8] sm:$0xff]
        %v2627 = vld [vmem:[#allocation12 + $0x100] sm:$0xff]
        %v2628 = vld [vmem:[#allocation12 + $0x108] sm:$0xff]
        %v2629 = vld [vmem:[#allocation12 + $0x110] sm:$0xff]
        %v2630 = vld [vmem:[#allocation12 + $0x118] sm:$0xff]
        %v2631 = vld [vmem:[#allocation12 + $0x120] sm:$0xff]
        %v2632 = vld [vmem:[#allocation12 + $0x128] sm:$0xff]
        %v2633 = vld [vmem:[#allocation12 + $0x130] sm:$0xff]
        %v2634 = vld [vmem:[#allocation12 + $0x138] sm:$0xff]
        %v2635 = vld [vmem:[#allocation12 + $0x140] sm:$0xff]
        %v2636 = vld [vmem:[#allocation12 + $0x148] sm:$0xff]
        %v2637 = vld [vmem:[#allocation12 + $0x150] sm:$0xff]
        %v2638 = vld [vmem:[#allocation12 + $0x158] sm:$0xff]
        %v2639 = vld [vmem:[#allocation12 + $0x160] sm:$0xff]
        %v2640 = vld [vmem:[#allocation12 + $0x168] sm:$0xff]
        %v2641 = vld [vmem:[#allocation12 + $0x170] sm:$0xff]
        %v2642 = vld [vmem:[#allocation12 + $0x178] sm:$0xff]
        %v2643 = vld [vmem:[#allocation12 + $0x180] sm:$0xff]
        %v2644 = vld [vmem:[#allocation12 + $0x188] sm:$0xff]
        %v2645 = vld [vmem:[#allocation12 + $0x190] sm:$0xff]
        %v2646 = vld [vmem:[#allocation12 + $0x198] sm:$0xff]
        %v2647 = vld [vmem:[#allocation12 + $0x1a0] sm:$0xff]
        %v2648 = vld [vmem:[#allocation12 + $0x1a8] sm:$0xff]
        %v2649 = vld [vmem:[#allocation12 + $0x1b0] sm:$0xff]
        %v2650 = vld [vmem:[#allocation12 + $0x1b8] sm:$0xff]
        %v2651 = vld [vmem:[#allocation12 + $0x1c0] sm:$0xff]
        %v2652 = vld [vmem:[#allocation12 + $0x1c8] sm:$0xff]
        %v2653 = vld [vmem:[#allocation12 + $0x1d0] sm:$0xff]
        %v2654 = vld [vmem:[#allocation12 + $0x1d8] sm:$0xff]
        %v2655 = vld [vmem:[#allocation12 + $0x1e0] sm:$0xff]
        %v2656 = vld [vmem:[#allocation12 + $0x1e8] sm:$0xff]
        %v2657 = vld [vmem:[#allocation12 + $0x1f0] sm:$0xff]
        %v2658 = vld [vmem:[#allocation12 + $0x1f8] sm:$0xff]
        %v2659 = vld [vmem:[#allocation12 + $0x200] sm:$0xff]
        %v2660 = vld [vmem:[#allocation12 + $0x208] sm:$0xff]
        %v2661 = vld [vmem:[#allocation12 + $0x210] sm:$0xff]
        %v2662 = vld [vmem:[#allocation12 + $0x218] sm:$0xff]
        %v2663 = vld [vmem:[#allocation12 + $0x220] sm:$0xff]
        %v2664 = vld [vmem:[#allocation12 + $0x228] sm:$0xff]
        %v2665 = vld [vmem:[#allocation12 + $0x230] sm:$0xff]
        %v2666 = vld [vmem:[#allocation12 + $0x238] sm:$0xff]
        %v2667 = vld [vmem:[#allocation12 + $0x240] sm:$0xff]
        %v2668 = vld [vmem:[#allocation12 + $0x248] sm:$0xff]
        %v2669 = vld [vmem:[#allocation12 + $0x250] sm:$0xff]
        %v2670 = vld [vmem:[#allocation12 + $0x258] sm:$0xff]
        %v2671 = vld [vmem:[#allocation12 + $0x260] sm:$0xff]
        %v2672 = vld [vmem:[#allocation12 + $0x268] sm:$0xff]
        %v2673 = vld [vmem:[#allocation12 + $0x270] sm:$0xff]
        %v2674 = vld [vmem:[#allocation12 + $0x278] sm:$0xff]
        %v2675 = vld [vmem:[#allocation12 + $0x280] sm:$0xff]
        %v2676 = vld [vmem:[#allocation12 + $0x288] sm:$0xff]
        %v2677 = vld [vmem:[#allocation12 + $0x290] sm:$0xff]
        %v2678 = vld [vmem:[#allocation12 + $0x298] sm:$0xff]
        %v2679 = vld [vmem:[#allocation12 + $0x2a0] sm:$0xff]
        %v2680 = vld [vmem:[#allocation12 + $0x2a8] sm:$0xff]
        %v2681 = vld [vmem:[#allocation12 + $0x2b0] sm:$0xff]
        %v2682 = vld [vmem:[#allocation12 + $0x2b8] sm:$0xff]
        %v2683 = vld [vmem:[#allocation12 + $0x2c0] sm:$0xff]
        %v2684 = vld [vmem:[#allocation12 + $0x2c8] sm:$0xff]
        %v2685 = vld [vmem:[#allocation12 + $0x2d0] sm:$0xff]
        %v2686 = vld [vmem:[#allocation12 + $0x2d8] sm:$0xff]
        %v2687 = vld [vmem:[#allocation12 + $0x2e0] sm:$0xff]
        %v2688 = vld [vmem:[#allocation12 + $0x2e8] sm:$0xff]
        %v2689 = vld [vmem:[#allocation12 + $0x2f0] sm:$0xff]
        %v2690 = vld [vmem:[#allocation12 + $0x2f8] sm:$0xff]
        %v2691 = vld [vmem:[#allocation12 + $0x300] sm:$0xff]
        %v2692 = vld [vmem:[#allocation12 + $0x308] sm:$0xff]
        %v2693 = vld [vmem:[#allocation12 + $0x310] sm:$0xff]
        %v2694 = vld [vmem:[#allocation12 + $0x318] sm:$0xff]
        %v2695 = vld [vmem:[#allocation12 + $0x320] sm:$0xff]
        %v2696 = vld [vmem:[#allocation12 + $0x328] sm:$0xff]
        %v2697 = vld [vmem:[#allocation12 + $0x330] sm:$0xff]
        %v2698 = vld [vmem:[#allocation12 + $0x338] sm:$0xff]
        %v2699 = vld [vmem:[#allocation12 + $0x340] sm:$0xff]
        %v2700 = vld [vmem:[#allocation12 + $0x348] sm:$0xff]
        %v2701 = vld [vmem:[#allocation12 + $0x350] sm:$0xff]
        %v2702 = vld [vmem:[#allocation12 + $0x358] sm:$0xff]
        %v2703 = vld [vmem:[#allocation12 + $0x360] sm:$0xff]
        %v2704 = vld [vmem:[#allocation12 + $0x368] sm:$0xff]
        %v2705 = vld [vmem:[#allocation12 + $0x370] sm:$0xff]
        %v2706 = vld [vmem:[#allocation12 + $0x378] sm:$0xff]
        %v2707 = vld [vmem:[#allocation12 + $0x380] sm:$0xff]
        %v2708 = vld [vmem:[#allocation12 + $0x388] sm:$0xff]
        %v2709 = vld [vmem:[#allocation12 + $0x390] sm:$0xff]
        %v2710 = vld [vmem:[#allocation12 + $0x398] sm:$0xff]
        %v2711 = vld [vmem:[#allocation12 + $0x3a0] sm:$0xff]
        %v2712 = vld [vmem:[#allocation12 + $0x3a8] sm:$0xff]
        %v2713 = vld [vmem:[#allocation12 + $0x3b0] sm:$0xff]
        %v2714 = vld [vmem:[#allocation12 + $0x3b8] sm:$0xff]
        %v2715 = vld [vmem:[#allocation12 + $0x3c0] sm:$0xff]
        %v2716 = vld [vmem:[#allocation12 + $0x3c8] sm:$0xff]
        %v2717 = vld [vmem:[#allocation12 + $0x3d0] sm:$0xff]
        %v2718 = vld [vmem:[#allocation12 + $0x3d8] sm:$0xff]
        %v2719 = vld [vmem:[#allocation12 + $0x3e0] sm:$0xff]
        %v2720 = vld [vmem:[#allocation12 + $0x3e8] sm:$0xff]
        %v2721 = vld [vmem:[#allocation12 + $0x3f0] sm:$0xff]
        %v2722 = vld [vmem:[#allocation12 + $0x3f8] sm:$0xff]
        %v2723 = vld [vmem:[%s8] sm:$0x3]
        %v2725 = vlaneseq
        %v2726 = vshrl.u32 %v2725, 7
        %v2727 = vsub.s32 0, %v2726
        %v2728 = vrot.slane %v2723, %v2727
        %v2729 = vlaneseq
        %v2730 = vshrl.u32 %v2729, 7
        %v2731 = vsub.s32 1, %v2730
        %v2732 = vrot.slane %v2723, %v2731
        %2735 = vmatprep.subr.mxu0 %v2626
        %2736 = vmatpush1.msra.mxu0 %v2625
        %2737 = vmatprep.subr.mxu0 %v2624
        %2738 = vmatpush1.msra.mxu0 %v2623
        %2739 = vmatprep.subr.mxu0 %v2622
        %2740 = vmatpush1.msra.mxu0 %v2621
        %2741 = vmatprep.subr.mxu0 %v2620
        %2742 = vmatpush1.msra.mxu0 %v2619
        %2743 = vmatprep.subr.mxu0 %v2618
        %2744 = vmatpush1.msra.mxu0 %v2617
        %2745 = vmatprep.subr.mxu0 %v2616
        %2746 = vmatpush1.msra.mxu0 %v2615
        %2747 = vmatprep.subr.mxu0 %v2614
        %2748 = vmatpush1.msra.mxu0 %v2613
        %2749 = vmatprep.subr.mxu0 %v2612
        %2750 = vmatpush1.msra.mxu0 %v2611
        %2751 = vmatprep.subr.mxu0 %v2610
        %2752 = vmatpush1.msra.mxu0 %v2609
        %2753 = vmatprep.subr.mxu0 %v2608
        %2754 = vmatpush1.msra.mxu0 %v2607
        %2755 = vmatprep.subr.mxu0 %v2606
        %2756 = vmatpush1.msra.mxu0 %v2605
        %2757 = vmatprep.subr.mxu0 %v2604
        %2758 = vmatpush1.msra.mxu0 %v2603
        %2759 = vmatprep.subr.mxu0 %v2602
        %2760 = vmatpush1.msra.mxu0 %v2601
        %2761 = vmatprep.subr.mxu0 %v2600
        %2762 = vmatpush1.msra.mxu0 %v2599
        %2763 = vmatprep.subr.mxu0 %v2598
        %2764 = vmatpush1.msra.mxu0 %v2597
        %2765 = vmatprep.subr.mxu0 %v2596
        %2766 = vmatpush1.msra.mxu0 %v2595
        %2767 = vmatprep.subr.mxu0 %v2658
        %2768 = vmatpush2.msra.mxu0 %v2657
        %2769 = vmatprep.subr.mxu0 %v2656
        %2770 = vmatpush2.msra.mxu0 %v2655
        %2771 = vmatprep.subr.mxu0 %v2654
        %2772 = vmatpush2.msra.mxu0 %v2653
        %2773 = vmatprep.subr.mxu0 %v2652
        %2774 = vmatpush2.msra.mxu0 %v2651
        %2775 = vmatprep.subr.mxu0 %v2650
        %2776 = vmatpush2.msra.mxu0 %v2649
        %2777 = vmatprep.subr.mxu0 %v2648
        %2778 = vmatpush2.msra.mxu0 %v2647
        %2779 = vmatprep.subr.mxu0 %v2646
        %2780 = vmatpush2.msra.mxu0 %v2645
        %2781 = vmatprep.subr.mxu0 %v2644
        %2782 = vmatpush2.msra.mxu0 %v2643
        %2783 = vmatprep.subr.mxu0 %v2642
        %2784 = vmatpush2.msra.mxu0 %v2641
        %2785 = vmatprep.subr.mxu0 %v2640
        %2786 = vmatpush2.msra.mxu0 %v2639
        %2787 = vmatprep.subr.mxu0 %v2638
        %2788 = vmatpush2.msra.mxu0 %v2637
        %2789 = vmatprep.subr.mxu0 %v2636
        %2790 = vmatpush2.msra.mxu0 %v2635
        %2791 = vmatprep.subr.mxu0 %v2634
        %2792 = vmatpush2.msra.mxu0 %v2633
        %2793 = vmatprep.subr.mxu0 %v2632
        %2794 = vmatpush2.msra.mxu0 %v2631
        %2795 = vmatprep.subr.mxu0 %v2630
        %2796 = vmatpush2.msra.mxu0 %v2629
        %2797 = vmatprep.subr.mxu0 %v2628
        %2798 = vmatpush2.msra.mxu0 %v2627
        %2799 = vmatprep.mubr.f32.mxu0 %v586
        %2800 = vmatmul.mubr.f32.gmra.mxu0 %v585
        %v2801 = vpop.f32.mrf.mxu0
        %v2802 = vadd.f32 %v2728, %v2801
        %v2803 = vpop.f32.mrf.mxu0
        %v2804 = vadd.f32 %v2732, %v2803
        %2805 = vmatprep.mubr.f32.mxu0 %v590
        %2806 = vmatmul.mubr.f32.gmra.mxu0 %v589
        %v2807 = vpop.f32.mrf.mxu0
        %v2808 = vadd.f32 %v2728, %v2807
        %v2809 = vpop.f32.mrf.mxu0
        %v2810 = vadd.f32 %v2732, %v2809
        %2811 = vmatprep.mubr.f32.mxu0 %v594
        %2812 = vmatmul.mubr.f32.gmra.mxu0 %v593
        %v2813 = vpop.f32.mrf.mxu0
        %v2814 = vadd.f32 %v2728, %v2813
        %v2815 = vpop.f32.mrf.mxu0
        %v2816 = vadd.f32 %v2732, %v2815
        %2817 = vmatprep.mubr.f32.mxu0 %v598
        %2818 = vmatmul.mubr.f32.gmra.mxu0 %v597
        %v2819 = vpop.f32.mrf.mxu0
        %v2820 = vadd.f32 %v2728, %v2819
        %v2821 = vpop.f32.mrf.mxu0
        %v2822 = vadd.f32 %v2732, %v2821
        %2823 = vmatprep.mubr.f32.mxu0 %v602
        %2824 = vmatmul.mubr.f32.gmra.mxu0 %v601
        %v2825 = vpop.f32.mrf.mxu0
        %v2826 = vadd.f32 %v2728, %v2825
        %v2827 = vpop.f32.mrf.mxu0
        %v2828 = vadd.f32 %v2732, %v2827
        %2829 = vmatprep.mubr.f32.mxu0 %v606
        %2830 = vmatmul.mubr.f32.gmra.mxu0 %v605
        %v2831 = vpop.f32.mrf.mxu0
        %v2832 = vadd.f32 %v2728, %v2831
        %v2833 = vpop.f32.mrf.mxu0
        %v2834 = vadd.f32 %v2732, %v2833
        %2835 = vmatprep.mubr.f32.mxu0 %v610
        %2836 = vmatmul.mubr.f32.gmra.mxu0 %v609
        %v2837 = vpop.f32.mrf.mxu0
        %v2838 = vadd.f32 %v2728, %v2837
        %v2839 = vpop.f32.mrf.mxu0
        %v2840 = vadd.f32 %v2732, %v2839
        %2841 = vmatprep.mubr.f32.mxu0 %v614
        %2842 = vmatmul.mubr.f32.gmra.mxu0 %v613
        %v2843 = vpop.f32.mrf.mxu0
        %v2844 = vadd.f32 %v2728, %v2843
        %v2845 = vpop.f32.mrf.mxu0
        %v2846 = vadd.f32 %v2732, %v2845
        %2847 = vdwg.mxu0
        %2848 = vmatprep.subr.mxu0 %v2690
        %2849 = vmatpush1.msra.mxu0 %v2689
        %2850 = vmatprep.subr.mxu0 %v2688
        %2851 = vmatpush1.msra.mxu0 %v2687
        %2852 = vmatprep.subr.mxu0 %v2686
        %2853 = vmatpush1.msra.mxu0 %v2685
        %2854 = vmatprep.subr.mxu0 %v2684
        %2855 = vmatpush1.msra.mxu0 %v2683
        %2856 = vmatprep.subr.mxu0 %v2682
        %2857 = vmatpush1.msra.mxu0 %v2681
        %2858 = vmatprep.subr.mxu0 %v2680
        %2859 = vmatpush1.msra.mxu0 %v2679
        %2860 = vmatprep.subr.mxu0 %v2678
        %2861 = vmatpush1.msra.mxu0 %v2677
        %2862 = vmatprep.subr.mxu0 %v2676
        %2863 = vmatpush1.msra.mxu0 %v2675
        %2864 = vmatprep.subr.mxu0 %v2674
        %2865 = vmatpush1.msra.mxu0 %v2673
        %2866 = vmatprep.subr.mxu0 %v2672
        %2867 = vmatpush1.msra.mxu0 %v2671
        %2868 = vmatprep.subr.mxu0 %v2670
        %2869 = vmatpush1.msra.mxu0 %v2669
        %2870 = vmatprep.subr.mxu0 %v2668
        %2871 = vmatpush1.msra.mxu0 %v2667
        %2872 = vmatprep.subr.mxu0 %v2666
        %2873 = vmatpush1.msra.mxu0 %v2665
        %2874 = vmatprep.subr.mxu0 %v2664
        %2875 = vmatpush1.msra.mxu0 %v2663
        %2876 = vmatprep.subr.mxu0 %v2662
        %2877 = vmatpush1.msra.mxu0 %v2661
        %2878 = vmatprep.subr.mxu0 %v2660
        %2879 = vmatpush1.msra.mxu0 %v2659
        %2880 = vmatprep.subr.mxu0 %v2722
        %2881 = vmatpush2.msra.mxu0 %v2721
        %2882 = vmatprep.subr.mxu0 %v2720
        %2883 = vmatpush2.msra.mxu0 %v2719
        %2884 = vmatprep.subr.mxu0 %v2718
        %2885 = vmatpush2.msra.mxu0 %v2717
        %2886 = vmatprep.subr.mxu0 %v2716
        %2887 = vmatpush2.msra.mxu0 %v2715
        %2888 = vmatprep.subr.mxu0 %v2714
        %2889 = vmatpush2.msra.mxu0 %v2713
        %2890 = vmatprep.subr.mxu0 %v2712
        %2891 = vmatpush2.msra.mxu0 %v2711
        %2892 = vmatprep.subr.mxu0 %v2710
        %2893 = vmatpush2.msra.mxu0 %v2709
        %2894 = vmatprep.subr.mxu0 %v2708
        %2895 = vmatpush2.msra.mxu0 %v2707
        %2896 = vmatprep.subr.mxu0 %v2706
        %2897 = vmatpush2.msra.mxu0 %v2705
        %2898 = vmatprep.subr.mxu0 %v2704
        %2899 = vmatpush2.msra.mxu0 %v2703
        %2900 = vmatprep.subr.mxu0 %v2702
        %2901 = vmatpush2.msra.mxu0 %v2701
        %2902 = vmatprep.subr.mxu0 %v2700
        %2903 = vmatpush2.msra.mxu0 %v2699
        %2904 = vmatprep.subr.mxu0 %v2698
        %2905 = vmatpush2.msra.mxu0 %v2697
        %2906 = vmatprep.subr.mxu0 %v2696
        %2907 = vmatpush2.msra.mxu0 %v2695
        %2908 = vmatprep.subr.mxu0 %v2694
        %2909 = vmatpush2.msra.mxu0 %v2693
        %2910 = vmatprep.subr.mxu0 %v2692
        %2911 = vmatpush2.msra.mxu0 %v2691
        %2912 = vmatprep.mubr.f32.mxu0 %v588
        %2913 = vmatmul.mubr.f32.gmra.mxu0 %v587
        %v2914 = vpop.f32.mrf.mxu0
        %v2915 = vadd.f32 %v2802, %v2914
        %v2916 = vpop.f32.mrf.mxu0
        %v2917 = vadd.f32 %v2804, %v2916
        %2918 = vmatprep.mubr.f32.mxu0 %v592
        %2919 = vmatmul.mubr.f32.gmra.mxu0 %v591
        %v2920 = vpop.f32.mrf.mxu0
        %v2921 = vadd.f32 %v2808, %v2920
        %v2922 = vpop.f32.mrf.mxu0
        %v2923 = vadd.f32 %v2810, %v2922
        %2924 = vmatprep.mubr.f32.mxu0 %v596
        %2925 = vmatmul.mubr.f32.gmra.mxu0 %v595
        %v2926 = vpop.f32.mrf.mxu0
        %v2927 = vadd.f32 %v2814, %v2926
        %v2928 = vpop.f32.mrf.mxu0
        %v2929 = vadd.f32 %v2816, %v2928
        %2930 = vmatprep.mubr.f32.mxu0 %v600
        %2931 = vmatmul.mubr.f32.gmra.mxu0 %v599
        %v2932 = vpop.f32.mrf.mxu0
        %v2933 = vadd.f32 %v2820, %v2932
        %v2934 = vpop.f32.mrf.mxu0
        %v2935 = vadd.f32 %v2822, %v2934
        %2936 = vmatprep.mubr.f32.mxu0 %v604
        %2937 = vmatmul.mubr.f32.gmra.mxu0 %v603
        %v2938 = vpop.f32.mrf.mxu0
        %v2939 = vadd.f32 %v2826, %v2938
        %v2940 = vpop.f32.mrf.mxu0
        %v2941 = vadd.f32 %v2828, %v2940
        %2942 = vmatprep.mubr.f32.mxu0 %v608
        %2943 = vmatmul.mubr.f32.gmra.mxu0 %v607
        %v2944 = vpop.f32.mrf.mxu0
        %v2945 = vadd.f32 %v2832, %v2944
        %v2946 = vpop.f32.mrf.mxu0
        %v2947 = vadd.f32 %v2834, %v2946
        %2948 = vmatprep.mubr.f32.mxu0 %v612
        %2949 = vmatmul.mubr.f32.gmra.mxu0 %v611
        %v2950 = vpop.f32.mrf.mxu0
        %v2951 = vadd.f32 %v2838, %v2950
        %v2952 = vpop.f32.mrf.mxu0
        %v2953 = vadd.f32 %v2840, %v2952
        %2954 = vmatprep.mubr.f32.mxu0 %v616
        %2955 = vmatmul.mubr.f32.gmra.mxu0 %v615
        %v2956 = vpop.f32.mrf.mxu0
        %v2957 = vadd.f32 %v2844, %v2956
        %v2958 = vpop.f32.mrf.mxu0
        %v2959 = vadd.f32 %v2846, %v2958
        %2960 = vdwg.mxu0
        %v2961 = vld [vmem:[#allocation13] sm:$0xff]
        %v2962 = vld [vmem:[#allocation13 + $0x8] sm:$0xff]
        %v2963 = vld [vmem:[#allocation13 + $0x10] sm:$0xff]
        %v2964 = vld [vmem:[#allocation13 + $0x18] sm:$0xff]
        %v2965 = vld [vmem:[#allocation13 + $0x20] sm:$0xff]
        %v2966 = vld [vmem:[#allocation13 + $0x28] sm:$0xff]
        %v2967 = vld [vmem:[#allocation13 + $0x30] sm:$0xff]
        %v2968 = vld [vmem:[#allocation13 + $0x38] sm:$0xff]
        %v2969 = vld [vmem:[#allocation13 + $0x40] sm:$0xff]
        %v2970 = vld [vmem:[#allocation13 + $0x48] sm:$0xff]
        %v2971 = vld [vmem:[#allocation13 + $0x50] sm:$0xff]
        %v2972 = vld [vmem:[#allocation13 + $0x58] sm:$0xff]
        %v2973 = vld [vmem:[#allocation13 + $0x60] sm:$0xff]
        %v2974 = vld [vmem:[#allocation13 + $0x68] sm:$0xff]
        %v2975 = vld [vmem:[#allocation13 + $0x70] sm:$0xff]
        %v2976 = vld [vmem:[#allocation13 + $0x78] sm:$0xff]
        %v2977 = vld [vmem:[#allocation13 + $0x80] sm:$0xff]
        %v2978 = vld [vmem:[#allocation13 + $0x88] sm:$0xff]
        %v2979 = vld [vmem:[#allocation13 + $0x90] sm:$0xff]
        %v2980 = vld [vmem:[#allocation13 + $0x98] sm:$0xff]
        %v2981 = vld [vmem:[#allocation13 + $0xa0] sm:$0xff]
        %v2982 = vld [vmem:[#allocation13 + $0xa8] sm:$0xff]
        %v2983 = vld [vmem:[#allocation13 + $0xb0] sm:$0xff]
        %v2984 = vld [vmem:[#allocation13 + $0xb8] sm:$0xff]
        %v2985 = vld [vmem:[#allocation13 + $0xc0] sm:$0xff]
        %v2986 = vld [vmem:[#allocation13 + $0xc8] sm:$0xff]
        %v2987 = vld [vmem:[#allocation13 + $0xd0] sm:$0xff]
        %v2988 = vld [vmem:[#allocation13 + $0xd8] sm:$0xff]
        %v2989 = vld [vmem:[#allocation13 + $0xe0] sm:$0xff]
        %v2990 = vld [vmem:[#allocation13 + $0xe8] sm:$0xff]
        %v2991 = vld [vmem:[#allocation13 + $0xf0] sm:$0xff]
        %v2992 = vld [vmem:[#allocation13 + $0xf8] sm:$0xff]
        %v2993 = vld [vmem:[#allocation13 + $0x100] sm:$0xff]
        %v2994 = vld [vmem:[#allocation13 + $0x108] sm:$0xff]
        %v2995 = vld [vmem:[#allocation13 + $0x110] sm:$0xff]
        %v2996 = vld [vmem:[#allocation13 + $0x118] sm:$0xff]
        %v2997 = vld [vmem:[#allocation13 + $0x120] sm:$0xff]
        %v2998 = vld [vmem:[#allocation13 + $0x128] sm:$0xff]
        %v2999 = vld [vmem:[#allocation13 + $0x130] sm:$0xff]
        %v3000 = vld [vmem:[#allocation13 + $0x138] sm:$0xff]
        %v3001 = vld [vmem:[#allocation13 + $0x140] sm:$0xff]
        %v3002 = vld [vmem:[#allocation13 + $0x148] sm:$0xff]
        %v3003 = vld [vmem:[#allocation13 + $0x150] sm:$0xff]
        %v3004 = vld [vmem:[#allocation13 + $0x158] sm:$0xff]
        %v3005 = vld [vmem:[#allocation13 + $0x160] sm:$0xff]
        %v3006 = vld [vmem:[#allocation13 + $0x168] sm:$0xff]
        %v3007 = vld [vmem:[#allocation13 + $0x170] sm:$0xff]
        %v3008 = vld [vmem:[#allocation13 + $0x178] sm:$0xff]
        %v3009 = vld [vmem:[#allocation13 + $0x180] sm:$0xff]
        %v3010 = vld [vmem:[#allocation13 + $0x188] sm:$0xff]
        %v3011 = vld [vmem:[#allocation13 + $0x190] sm:$0xff]
        %v3012 = vld [vmem:[#allocation13 + $0x198] sm:$0xff]
        %v3013 = vld [vmem:[#allocation13 + $0x1a0] sm:$0xff]
        %v3014 = vld [vmem:[#allocation13 + $0x1a8] sm:$0xff]
        %v3015 = vld [vmem:[#allocation13 + $0x1b0] sm:$0xff]
        %v3016 = vld [vmem:[#allocation13 + $0x1b8] sm:$0xff]
        %v3017 = vld [vmem:[#allocation13 + $0x1c0] sm:$0xff]
        %v3018 = vld [vmem:[#allocation13 + $0x1c8] sm:$0xff]
        %v3019 = vld [vmem:[#allocation13 + $0x1d0] sm:$0xff]
        %v3020 = vld [vmem:[#allocation13 + $0x1d8] sm:$0xff]
        %v3021 = vld [vmem:[#allocation13 + $0x1e0] sm:$0xff]
        %v3022 = vld [vmem:[#allocation13 + $0x1e8] sm:$0xff]
        %v3023 = vld [vmem:[#allocation13 + $0x1f0] sm:$0xff]
        %v3024 = vld [vmem:[#allocation13 + $0x1f8] sm:$0xff]
        %v3025 = vld [vmem:[#allocation13 + $0x200] sm:$0xff]
        %v3026 = vld [vmem:[#allocation13 + $0x208] sm:$0xff]
        %v3027 = vld [vmem:[#allocation13 + $0x210] sm:$0xff]
        %v3028 = vld [vmem:[#allocation13 + $0x218] sm:$0xff]
        %v3029 = vld [vmem:[#allocation13 + $0x220] sm:$0xff]
        %v3030 = vld [vmem:[#allocation13 + $0x228] sm:$0xff]
        %v3031 = vld [vmem:[#allocation13 + $0x230] sm:$0xff]
        %v3032 = vld [vmem:[#allocation13 + $0x238] sm:$0xff]
        %v3033 = vld [vmem:[#allocation13 + $0x240] sm:$0xff]
        %v3034 = vld [vmem:[#allocation13 + $0x248] sm:$0xff]
        %v3035 = vld [vmem:[#allocation13 + $0x250] sm:$0xff]
        %v3036 = vld [vmem:[#allocation13 + $0x258] sm:$0xff]
        %v3037 = vld [vmem:[#allocation13 + $0x260] sm:$0xff]
        %v3038 = vld [vmem:[#allocation13 + $0x268] sm:$0xff]
        %v3039 = vld [vmem:[#allocation13 + $0x270] sm:$0xff]
        %v3040 = vld [vmem:[#allocation13 + $0x278] sm:$0xff]
        %v3041 = vld [vmem:[#allocation13 + $0x280] sm:$0xff]
        %v3042 = vld [vmem:[#allocation13 + $0x288] sm:$0xff]
        %v3043 = vld [vmem:[#allocation13 + $0x290] sm:$0xff]
        %v3044 = vld [vmem:[#allocation13 + $0x298] sm:$0xff]
        %v3045 = vld [vmem:[#allocation13 + $0x2a0] sm:$0xff]
        %v3046 = vld [vmem:[#allocation13 + $0x2a8] sm:$0xff]
        %v3047 = vld [vmem:[#allocation13 + $0x2b0] sm:$0xff]
        %v3048 = vld [vmem:[#allocation13 + $0x2b8] sm:$0xff]
        %v3049 = vld [vmem:[#allocation13 + $0x2c0] sm:$0xff]
        %v3050 = vld [vmem:[#allocation13 + $0x2c8] sm:$0xff]
        %v3051 = vld [vmem:[#allocation13 + $0x2d0] sm:$0xff]
        %v3052 = vld [vmem:[#allocation13 + $0x2d8] sm:$0xff]
        %v3053 = vld [vmem:[#allocation13 + $0x2e0] sm:$0xff]
        %v3054 = vld [vmem:[#allocation13 + $0x2e8] sm:$0xff]
        %v3055 = vld [vmem:[#allocation13 + $0x2f0] sm:$0xff]
        %v3056 = vld [vmem:[#allocation13 + $0x2f8] sm:$0xff]
        %v3057 = vld [vmem:[#allocation13 + $0x300] sm:$0xff]
        %v3058 = vld [vmem:[#allocation13 + $0x308] sm:$0xff]
        %v3059 = vld [vmem:[#allocation13 + $0x310] sm:$0xff]
        %v3060 = vld [vmem:[#allocation13 + $0x318] sm:$0xff]
        %v3061 = vld [vmem:[#allocation13 + $0x320] sm:$0xff]
        %v3062 = vld [vmem:[#allocation13 + $0x328] sm:$0xff]
        %v3063 = vld [vmem:[#allocation13 + $0x330] sm:$0xff]
        %v3064 = vld [vmem:[#allocation13 + $0x338] sm:$0xff]
        %v3065 = vld [vmem:[#allocation13 + $0x340] sm:$0xff]
        %v3066 = vld [vmem:[#allocation13 + $0x348] sm:$0xff]
        %v3067 = vld [vmem:[#allocation13 + $0x350] sm:$0xff]
        %v3068 = vld [vmem:[#allocation13 + $0x358] sm:$0xff]
        %v3069 = vld [vmem:[#allocation13 + $0x360] sm:$0xff]
        %v3070 = vld [vmem:[#allocation13 + $0x368] sm:$0xff]
        %v3071 = vld [vmem:[#allocation13 + $0x370] sm:$0xff]
        %v3072 = vld [vmem:[#allocation13 + $0x378] sm:$0xff]
        %v3073 = vld [vmem:[#allocation13 + $0x380] sm:$0xff]
        %v3074 = vld [vmem:[#allocation13 + $0x388] sm:$0xff]
        %v3075 = vld [vmem:[#allocation13 + $0x390] sm:$0xff]
        %v3076 = vld [vmem:[#allocation13 + $0x398] sm:$0xff]
        %v3077 = vld [vmem:[#allocation13 + $0x3a0] sm:$0xff]
        %v3078 = vld [vmem:[#allocation13 + $0x3a8] sm:$0xff]
        %v3079 = vld [vmem:[#allocation13 + $0x3b0] sm:$0xff]
        %v3080 = vld [vmem:[#allocation13 + $0x3b8] sm:$0xff]
        %v3081 = vld [vmem:[#allocation13 + $0x3c0] sm:$0xff]
        %v3082 = vld [vmem:[#allocation13 + $0x3c8] sm:$0xff]
        %v3083 = vld [vmem:[#allocation13 + $0x3d0] sm:$0xff]
        %v3084 = vld [vmem:[#allocation13 + $0x3d8] sm:$0xff]
        %v3085 = vld [vmem:[#allocation13 + $0x3e0] sm:$0xff]
        %v3086 = vld [vmem:[#allocation13 + $0x3e8] sm:$0xff]
        %v3087 = vld [vmem:[#allocation13 + $0x3f0] sm:$0xff]
        %v3088 = vld [vmem:[#allocation13 + $0x3f8] sm:$0xff]
        %v3089 = vld [vmem:[%s10] sm:$0x3]
        %v3091 = vlaneseq
        %v3092 = vshrl.u32 %v3091, 7
        %v3093 = vsub.s32 0, %v3092
        %v3094 = vrot.slane %v3089, %v3093
        %v3095 = vlaneseq
        %v3096 = vshrl.u32 %v3095, 7
        %v3097 = vsub.s32 1, %v3096
        %v3098 = vrot.slane %v3089, %v3097
        %3101 = vmatprep.subr.mxu0 %v2992
        %3102 = vmatpush1.msra.mxu0 %v2991
        %3103 = vmatprep.subr.mxu0 %v2990
        %3104 = vmatpush1.msra.mxu0 %v2989
        %3105 = vmatprep.subr.mxu0 %v2988
        %3106 = vmatpush1.msra.mxu0 %v2987
        %3107 = vmatprep.subr.mxu0 %v2986
        %3108 = vmatpush1.msra.mxu0 %v2985
        %3109 = vmatprep.subr.mxu0 %v2984
        %3110 = vmatpush1.msra.mxu0 %v2983
        %3111 = vmatprep.subr.mxu0 %v2982
        %3112 = vmatpush1.msra.mxu0 %v2981
        %3113 = vmatprep.subr.mxu0 %v2980
        %3114 = vmatpush1.msra.mxu0 %v2979
        %3115 = vmatprep.subr.mxu0 %v2978
        %3116 = vmatpush1.msra.mxu0 %v2977
        %3117 = vmatprep.subr.mxu0 %v2976
        %3118 = vmatpush1.msra.mxu0 %v2975
        %3119 = vmatprep.subr.mxu0 %v2974
        %3120 = vmatpush1.msra.mxu0 %v2973
        %3121 = vmatprep.subr.mxu0 %v2972
        %3122 = vmatpush1.msra.mxu0 %v2971
        %3123 = vmatprep.subr.mxu0 %v2970
        %3124 = vmatpush1.msra.mxu0 %v2969
        %3125 = vmatprep.subr.mxu0 %v2968
        %3126 = vmatpush1.msra.mxu0 %v2967
        %3127 = vmatprep.subr.mxu0 %v2966
        %3128 = vmatpush1.msra.mxu0 %v2965
        %3129 = vmatprep.subr.mxu0 %v2964
        %3130 = vmatpush1.msra.mxu0 %v2963
        %3131 = vmatprep.subr.mxu0 %v2962
        %3132 = vmatpush1.msra.mxu0 %v2961
        %3133 = vmatprep.subr.mxu0 %v3024
        %3134 = vmatpush2.msra.mxu0 %v3023
        %3135 = vmatprep.subr.mxu0 %v3022
        %3136 = vmatpush2.msra.mxu0 %v3021
        %3137 = vmatprep.subr.mxu0 %v3020
        %3138 = vmatpush2.msra.mxu0 %v3019
        %3139 = vmatprep.subr.mxu0 %v3018
        %3140 = vmatpush2.msra.mxu0 %v3017
        %3141 = vmatprep.subr.mxu0 %v3016
        %3142 = vmatpush2.msra.mxu0 %v3015
        %3143 = vmatprep.subr.mxu0 %v3014
        %3144 = vmatpush2.msra.mxu0 %v3013
        %3145 = vmatprep.subr.mxu0 %v3012
        %3146 = vmatpush2.msra.mxu0 %v3011
        %3147 = vmatprep.subr.mxu0 %v3010
        %3148 = vmatpush2.msra.mxu0 %v3009
        %3149 = vmatprep.subr.mxu0 %v3008
        %3150 = vmatpush2.msra.mxu0 %v3007
        %3151 = vmatprep.subr.mxu0 %v3006
        %3152 = vmatpush2.msra.mxu0 %v3005
        %3153 = vmatprep.subr.mxu0 %v3004
        %3154 = vmatpush2.msra.mxu0 %v3003
        %3155 = vmatprep.subr.mxu0 %v3002
        %3156 = vmatpush2.msra.mxu0 %v3001
        %3157 = vmatprep.subr.mxu0 %v3000
        %3158 = vmatpush2.msra.mxu0 %v2999
        %3159 = vmatprep.subr.mxu0 %v2998
        %3160 = vmatpush2.msra.mxu0 %v2997
        %3161 = vmatprep.subr.mxu0 %v2996
        %3162 = vmatpush2.msra.mxu0 %v2995
        %3163 = vmatprep.subr.mxu0 %v2994
        %3164 = vmatpush2.msra.mxu0 %v2993
        %3165 = vmatprep.mubr.f32.mxu0 %v2073
        %3166 = vmatmul.mubr.f32.gmra.mxu0 %v2071
        %v3167 = vpop.f32.mrf.mxu0
        %v3168 = vadd.f32 %v3094, %v3167
        %v3169 = vpop.f32.mrf.mxu0
        %v3170 = vadd.f32 %v3098, %v3169
        %3171 = vmatprep.mubr.f32.mxu0 %v2079
        %3172 = vmatmul.mubr.f32.gmra.mxu0 %v2077
        %v3173 = vpop.f32.mrf.mxu0
        %v3174 = vadd.f32 %v3094, %v3173
        %v3175 = vpop.f32.mrf.mxu0
        %v3176 = vadd.f32 %v3098, %v3175
        %3177 = vmatprep.mubr.f32.mxu0 %v2085
        %3178 = vmatmul.mubr.f32.gmra.mxu0 %v2083
        %v3179 = vpop.f32.mrf.mxu0
        %v3180 = vadd.f32 %v3094, %v3179
        %v3181 = vpop.f32.mrf.mxu0
        %v3182 = vadd.f32 %v3098, %v3181
        %3183 = vmatprep.mubr.f32.mxu0 %v2091
        %3184 = vmatmul.mubr.f32.gmra.mxu0 %v2089
        %v3185 = vpop.f32.mrf.mxu0
        %v3186 = vadd.f32 %v3094, %v3185
        %v3187 = vpop.f32.mrf.mxu0
        %v3188 = vadd.f32 %v3098, %v3187
        %3189 = vdwg.mxu0
        %3190 = vmatprep.subr.mxu0 %v3056
        %3191 = vmatpush1.msra.mxu0 %v3055
        %3192 = vmatprep.subr.mxu0 %v3054
        %3193 = vmatpush1.msra.mxu0 %v3053
        %3194 = vmatprep.subr.mxu0 %v3052
        %3195 = vmatpush1.msra.mxu0 %v3051
        %3196 = vmatprep.subr.mxu0 %v3050
        %3197 = vmatpush1.msra.mxu0 %v3049
        %3198 = vmatprep.subr.mxu0 %v3048
        %3199 = vmatpush1.msra.mxu0 %v3047
        %3200 = vmatprep.subr.mxu0 %v3046
        %3201 = vmatpush1.msra.mxu0 %v3045
        %3202 = vmatprep.subr.mxu0 %v3044
        %3203 = vmatpush1.msra.mxu0 %v3043
        %3204 = vmatprep.subr.mxu0 %v3042
        %3205 = vmatpush1.msra.mxu0 %v3041
        %3206 = vmatprep.subr.mxu0 %v3040
        %3207 = vmatpush1.msra.mxu0 %v3039
        %3208 = vmatprep.subr.mxu0 %v3038
        %3209 = vmatpush1.msra.mxu0 %v3037
        %3210 = vmatprep.subr.mxu0 %v3036
        %3211 = vmatpush1.msra.mxu0 %v3035
        %3212 = vmatprep.subr.mxu0 %v3034
        %3213 = vmatpush1.msra.mxu0 %v3033
        %3214 = vmatprep.subr.mxu0 %v3032
        %3215 = vmatpush1.msra.mxu0 %v3031
        %3216 = vmatprep.subr.mxu0 %v3030
        %3217 = vmatpush1.msra.mxu0 %v3029
        %3218 = vmatprep.subr.mxu0 %v3028
        %3219 = vmatpush1.msra.mxu0 %v3027
        %3220 = vmatprep.subr.mxu0 %v3026
        %3221 = vmatpush1.msra.mxu0 %v3025
        %3222 = vmatprep.subr.mxu0 %v3088
        %3223 = vmatpush2.msra.mxu0 %v3087
        %3224 = vmatprep.subr.mxu0 %v3086
        %3225 = vmatpush2.msra.mxu0 %v3085
        %3226 = vmatprep.subr.mxu0 %v3084
        %3227 = vmatpush2.msra.mxu0 %v3083
        %3228 = vmatprep.subr.mxu0 %v3082
        %3229 = vmatpush2.msra.mxu0 %v3081
        %3230 = vmatprep.subr.mxu0 %v3080
        %3231 = vmatpush2.msra.mxu0 %v3079
        %3232 = vmatprep.subr.mxu0 %v3078
        %3233 = vmatpush2.msra.mxu0 %v3077
        %3234 = vmatprep.subr.mxu0 %v3076
        %3235 = vmatpush2.msra.mxu0 %v3075
        %3236 = vmatprep.subr.mxu0 %v3074
        %3237 = vmatpush2.msra.mxu0 %v3073
        %3238 = vmatprep.subr.mxu0 %v3072
        %3239 = vmatpush2.msra.mxu0 %v3071
        %3240 = vmatprep.subr.mxu0 %v3070
        %3241 = vmatpush2.msra.mxu0 %v3069
        %3242 = vmatprep.subr.mxu0 %v3068
        %3243 = vmatpush2.msra.mxu0 %v3067
        %3244 = vmatprep.subr.mxu0 %v3066
        %3245 = vmatpush2.msra.mxu0 %v3065
        %3246 = vmatprep.subr.mxu0 %v3064
        %3247 = vmatpush2.msra.mxu0 %v3063
        %3248 = vmatprep.subr.mxu0 %v3062
        %3249 = vmatpush2.msra.mxu0 %v3061
        %3250 = vmatprep.subr.mxu0 %v3060
        %3251 = vmatpush2.msra.mxu0 %v3059
        %3252 = vmatprep.subr.mxu0 %v3058
        %3253 = vmatpush2.msra.mxu0 %v3057
        %3254 = vmatprep.mubr.f32.mxu0 %v2251
        %3255 = vmatmul.mubr.f32.gmra.mxu0 %v2249
        %v3256 = vpop.f32.mrf.mxu0
        %v3257 = vadd.f32 %v3168, %v3256
        %v3258 = vpop.f32.mrf.mxu0
        %v3259 = vadd.f32 %v3170, %v3258
        %3260 = vmatprep.mubr.f32.mxu0 %v2257
        %3261 = vmatmul.mubr.f32.gmra.mxu0 %v2255
        %v3262 = vpop.f32.mrf.mxu0
        %v3263 = vadd.f32 %v3174, %v3262
        %v3264 = vpop.f32.mrf.mxu0
        %v3265 = vadd.f32 %v3176, %v3264
        %3266 = vmatprep.mubr.f32.mxu0 %v2263
        %3267 = vmatmul.mubr.f32.gmra.mxu0 %v2261
        %v3268 = vpop.f32.mrf.mxu0
        %v3269 = vadd.f32 %v3180, %v3268
        %v3270 = vpop.f32.mrf.mxu0
        %v3271 = vadd.f32 %v3182, %v3270
        %3272 = vmatprep.mubr.f32.mxu0 %v2269
        %3273 = vmatmul.mubr.f32.gmra.mxu0 %v2267
        %v3274 = vpop.f32.mrf.mxu0
        %v3275 = vadd.f32 %v3186, %v3274
        %v3276 = vpop.f32.mrf.mxu0
        %v3277 = vadd.f32 %v3188, %v3276
        %3278 = vdwg.mxu0
        %3279 = vmatprep.subr.mxu0 0.0
        %3280 = vmatpush1.xpose.msra.mxu0 0.0
        %3281 = vmatprep.subr.mxu0 0.0
        %3282 = vmatpush1.xpose.msra.mxu0 0.0
        %3283 = vmatprep.subr.mxu0 0.0
        %3284 = vmatpush1.xpose.msra.mxu0 0.0
        %3285 = vmatprep.subr.mxu0 0.0
        %3286 = vmatpush1.xpose.msra.mxu0 0.0
        %3287 = vmatprep.subr.mxu0 0.0
        %3288 = vmatpush1.xpose.msra.mxu0 0.0
        %3289 = vmatprep.subr.mxu0 0.0
        %3290 = vmatpush1.xpose.msra.mxu0 0.0
        %3291 = vmatprep.subr.mxu0 0.0
        %3292 = vmatpush1.xpose.msra.mxu0 0.0
        %3293 = vmatprep.subr.mxu0 0.0
        %3294 = vmatpush1.xpose.msra.mxu0 0.0
        %3295 = vmatprep.subr.mxu0 0.0
        %3296 = vmatpush1.xpose.msra.mxu0 0.0
        %3297 = vmatprep.subr.mxu0 0.0
        %3298 = vmatpush1.xpose.msra.mxu0 0.0
        %3299 = vmatprep.subr.mxu0 0.0
        %3300 = vmatpush1.xpose.msra.mxu0 0.0
        %3301 = vmatprep.subr.mxu0 0.0
        %3302 = vmatpush1.xpose.msra.mxu0 0.0
        %3303 = vmatprep.subr.mxu0 0.0
        %3304 = vmatpush1.xpose.msra.mxu0 0.0
        %3305 = vmatprep.subr.mxu0 0.0
        %3306 = vmatpush1.xpose.msra.mxu0 0.0
        %3307 = vmatprep.subr.mxu0 0.0
        %3308 = vmatpush1.xpose.msra.mxu0 0.0
        %3309 = vmatprep.subr.mxu0 %v3259
        %3310 = vmatpush1.xpose.msra.mxu0 %v3257
        %3311 = vmatprep.subr.mxu0 0.0
        %3312 = vmatpush2.xpose.msra.mxu0 0.0
        %3313 = vmatprep.subr.mxu0 0.0
        %3314 = vmatpush2.xpose.msra.mxu0 0.0
        %3315 = vmatprep.subr.mxu0 0.0
        %3316 = vmatpush2.xpose.msra.mxu0 0.0
        %3317 = vmatprep.subr.mxu0 0.0
        %3318 = vmatpush2.xpose.msra.mxu0 0.0
        %3319 = vmatprep.subr.mxu0 0.0
        %3320 = vmatpush2.xpose.msra.mxu0 0.0
        %3321 = vmatprep.subr.mxu0 0.0
        %3322 = vmatpush2.xpose.msra.mxu0 0.0
        %3323 = vmatprep.subr.mxu0 0.0
        %3324 = vmatpush2.xpose.msra.mxu0 0.0
        %3325 = vmatprep.subr.mxu0 0.0
        %3326 = vmatpush2.xpose.msra.mxu0 0.0
        %3327 = vmatprep.subr.mxu0 0.0
        %3328 = vmatpush2.xpose.msra.mxu0 0.0
        %3329 = vmatprep.subr.mxu0 0.0
        %3330 = vmatpush2.xpose.msra.mxu0 0.0
        %3331 = vmatprep.subr.mxu0 0.0
        %3332 = vmatpush2.xpose.msra.mxu0 0.0
        %3333 = vmatprep.subr.mxu0 0.0
        %3334 = vmatpush2.xpose.msra.mxu0 0.0
        %3335 = vmatprep.subr.mxu0 0.0
        %3336 = vmatpush2.xpose.msra.mxu0 0.0
        %3337 = vmatprep.subr.mxu0 0.0
        %3338 = vmatpush2.xpose.msra.mxu0 0.0
        %3339 = vmatprep.subr.mxu0 0.0
        %3340 = vmatpush2.xpose.msra.mxu0 0.0
        %3341 = vmatprep.subr.mxu0 0.0
        %3342 = vmatpush2.xpose.msra.mxu0 0.0
        %3343 = vmatprep.mubr.f32.mxu0 %v2917
        %3344 = vmatmul.mubr.f32.gmra.mxu0 %v2915
        %v3345 = vpop.f32.mrf.mxu0
        %v3346 = vadd.f32 0.0, %v3345
        %v3347 = vpop.f32.mrf.mxu0
        %3348 = vmatprep.mubr.f32.mxu0 %v2923
        %3349 = vmatmul.mubr.f32.gmra.mxu0 %v2921
        %v3350 = vpop.f32.mrf.mxu0
        %v3351 = vadd.f32 0.0, %v3350
        %v3352 = vpop.f32.mrf.mxu0
        %3353 = vdwg.mxu0
        %3354 = vmatprep.subr.mxu0 0.0
        %3355 = vmatpush1.xpose.msra.mxu0 0.0
        %3356 = vmatprep.subr.mxu0 0.0
        %3357 = vmatpush1.xpose.msra.mxu0 0.0
        %3358 = vmatprep.subr.mxu0 0.0
        %3359 = vmatpush1.xpose.msra.mxu0 0.0
        %3360 = vmatprep.subr.mxu0 0.0
        %3361 = vmatpush1.xpose.msra.mxu0 0.0
        %3362 = vmatprep.subr.mxu0 0.0
        %3363 = vmatpush1.xpose.msra.mxu0 0.0
        %3364 = vmatprep.subr.mxu0 0.0
        %3365 = vmatpush1.xpose.msra.mxu0 0.0
        %3366 = vmatprep.subr.mxu0 0.0
        %3367 = vmatpush1.xpose.msra.mxu0 0.0
        %3368 = vmatprep.subr.mxu0 0.0
        %3369 = vmatpush1.xpose.msra.mxu0 0.0
        %3370 = vmatprep.subr.mxu0 0.0
        %3371 = vmatpush1.xpose.msra.mxu0 0.0
        %3372 = vmatprep.subr.mxu0 0.0
        %3373 = vmatpush1.xpose.msra.mxu0 0.0
        %3374 = vmatprep.subr.mxu0 0.0
        %3375 = vmatpush1.xpose.msra.mxu0 0.0
        %3376 = vmatprep.subr.mxu0 0.0
        %3377 = vmatpush1.xpose.msra.mxu0 0.0
        %3378 = vmatprep.subr.mxu0 0.0
        %3379 = vmatpush1.xpose.msra.mxu0 0.0
        %3380 = vmatprep.subr.mxu0 0.0
        %3381 = vmatpush1.xpose.msra.mxu0 0.0
        %3382 = vmatprep.subr.mxu0 0.0
        %3383 = vmatpush1.xpose.msra.mxu0 0.0
        %3384 = vmatprep.subr.mxu0 %v3265
        %3385 = vmatpush1.xpose.msra.mxu0 %v3263
        %3386 = vmatprep.subr.mxu0 0.0
        %3387 = vmatpush2.xpose.msra.mxu0 0.0
        %3388 = vmatprep.subr.mxu0 0.0
        %3389 = vmatpush2.xpose.msra.mxu0 0.0
        %3390 = vmatprep.subr.mxu0 0.0
        %3391 = vmatpush2.xpose.msra.mxu0 0.0
        %3392 = vmatprep.subr.mxu0 0.0
        %3393 = vmatpush2.xpose.msra.mxu0 0.0
        %3394 = vmatprep.subr.mxu0 0.0
        %3395 = vmatpush2.xpose.msra.mxu0 0.0
        %3396 = vmatprep.subr.mxu0 0.0
        %3397 = vmatpush2.xpose.msra.mxu0 0.0
        %3398 = vmatprep.subr.mxu0 0.0
        %3399 = vmatpush2.xpose.msra.mxu0 0.0
        %3400 = vmatprep.subr.mxu0 0.0
        %3401 = vmatpush2.xpose.msra.mxu0 0.0
        %3402 = vmatprep.subr.mxu0 0.0
        %3403 = vmatpush2.xpose.msra.mxu0 0.0
        %3404 = vmatprep.subr.mxu0 0.0
        %3405 = vmatpush2.xpose.msra.mxu0 0.0
        %3406 = vmatprep.subr.mxu0 0.0
        %3407 = vmatpush2.xpose.msra.mxu0 0.0
        %3408 = vmatprep.subr.mxu0 0.0
        %3409 = vmatpush2.xpose.msra.mxu0 0.0
        %3410 = vmatprep.subr.mxu0 0.0
        %3411 = vmatpush2.xpose.msra.mxu0 0.0
        %3412 = vmatprep.subr.mxu0 0.0
        %3413 = vmatpush2.xpose.msra.mxu0 0.0
        %3414 = vmatprep.subr.mxu0 0.0
        %3415 = vmatpush2.xpose.msra.mxu0 0.0
        %3416 = vmatprep.subr.mxu0 0.0
        %3417 = vmatpush2.xpose.msra.mxu0 0.0
        %3418 = vmatprep.mubr.f32.mxu0 %v2929
        %3419 = vmatmul.mubr.f32.gmra.mxu0 %v2927
        %v3420 = vpop.f32.mrf.mxu0
        %v3421 = vadd.f32 0.0, %v3420
        %v3422 = vpop.f32.mrf.mxu0
        %3423 = vmatprep.mubr.f32.mxu0 %v2935
        %3424 = vmatmul.mubr.f32.gmra.mxu0 %v2933
        %v3425 = vpop.f32.mrf.mxu0
        %v3426 = vadd.f32 0.0, %v3425
        %v3427 = vpop.f32.mrf.mxu0
        %3428 = vdwg.mxu0
        %3429 = vmatprep.subr.mxu0 0.0
        %3430 = vmatpush1.xpose.msra.mxu0 0.0
        %3431 = vmatprep.subr.mxu0 0.0
        %3432 = vmatpush1.xpose.msra.mxu0 0.0
        %3433 = vmatprep.subr.mxu0 0.0
        %3434 = vmatpush1.xpose.msra.mxu0 0.0
        %3435 = vmatprep.subr.mxu0 0.0
        %3436 = vmatpush1.xpose.msra.mxu0 0.0
        %3437 = vmatprep.subr.mxu0 0.0
        %3438 = vmatpush1.xpose.msra.mxu0 0.0
        %3439 = vmatprep.subr.mxu0 0.0
        %3440 = vmatpush1.xpose.msra.mxu0 0.0
        %3441 = vmatprep.subr.mxu0 0.0
        %3442 = vmatpush1.xpose.msra.mxu0 0.0
        %3443 = vmatprep.subr.mxu0 0.0
        %3444 = vmatpush1.xpose.msra.mxu0 0.0
        %3445 = vmatprep.subr.mxu0 0.0
        %3446 = vmatpush1.xpose.msra.mxu0 0.0
        %3447 = vmatprep.subr.mxu0 0.0
        %3448 = vmatpush1.xpose.msra.mxu0 0.0
        %3449 = vmatprep.subr.mxu0 0.0
        %3450 = vmatpush1.xpose.msra.mxu0 0.0
        %3451 = vmatprep.subr.mxu0 0.0
        %3452 = vmatpush1.xpose.msra.mxu0 0.0
        %3453 = vmatprep.subr.mxu0 0.0
        %3454 = vmatpush1.xpose.msra.mxu0 0.0
        %3455 = vmatprep.subr.mxu0 0.0
        %3456 = vmatpush1.xpose.msra.mxu0 0.0
        %3457 = vmatprep.subr.mxu0 0.0
        %3458 = vmatpush1.xpose.msra.mxu0 0.0
        %3459 = vmatprep.subr.mxu0 %v3271
        %3460 = vmatpush1.xpose.msra.mxu0 %v3269
        %3461 = vmatprep.subr.mxu0 0.0
        %3462 = vmatpush2.xpose.msra.mxu0 0.0
        %3463 = vmatprep.subr.mxu0 0.0
        %3464 = vmatpush2.xpose.msra.mxu0 0.0
        %3465 = vmatprep.subr.mxu0 0.0
        %3466 = vmatpush2.xpose.msra.mxu0 0.0
        %3467 = vmatprep.subr.mxu0 0.0
        %3468 = vmatpush2.xpose.msra.mxu0 0.0
        %3469 = vmatprep.subr.mxu0 0.0
        %3470 = vmatpush2.xpose.msra.mxu0 0.0
        %3471 = vmatprep.subr.mxu0 0.0
        %3472 = vmatpush2.xpose.msra.mxu0 0.0
        %3473 = vmatprep.subr.mxu0 0.0
        %3474 = vmatpush2.xpose.msra.mxu0 0.0
        %3475 = vmatprep.subr.mxu0 0.0
        %3476 = vmatpush2.xpose.msra.mxu0 0.0
        %3477 = vmatprep.subr.mxu0 0.0
        %3478 = vmatpush2.xpose.msra.mxu0 0.0
        %3479 = vmatprep.subr.mxu0 0.0
        %3480 = vmatpush2.xpose.msra.mxu0 0.0
        %3481 = vmatprep.subr.mxu0 0.0
        %3482 = vmatpush2.xpose.msra.mxu0 0.0
        %3483 = vmatprep.subr.mxu0 0.0
        %3484 = vmatpush2.xpose.msra.mxu0 0.0
        %3485 = vmatprep.subr.mxu0 0.0
        %3486 = vmatpush2.xpose.msra.mxu0 0.0
        %3487 = vmatprep.subr.mxu0 0.0
        %3488 = vmatpush2.xpose.msra.mxu0 0.0
        %3489 = vmatprep.subr.mxu0 0.0
        %3490 = vmatpush2.xpose.msra.mxu0 0.0
        %3491 = vmatprep.subr.mxu0 0.0
        %3492 = vmatpush2.xpose.msra.mxu0 0.0
        %3493 = vmatprep.mubr.f32.mxu0 %v2941
        %3494 = vmatmul.mubr.f32.gmra.mxu0 %v2939
        %v3495 = vpop.f32.mrf.mxu0
        %v3496 = vadd.f32 0.0, %v3495
        %v3497 = vpop.f32.mrf.mxu0
        %3498 = vmatprep.mubr.f32.mxu0 %v2947
        %3499 = vmatmul.mubr.f32.gmra.mxu0 %v2945
        %v3500 = vpop.f32.mrf.mxu0
        %v3501 = vadd.f32 0.0, %v3500
        %v3502 = vpop.f32.mrf.mxu0
        %3503 = vdwg.mxu0
        %3504 = vmatprep.subr.mxu0 0.0
        %3505 = vmatpush1.xpose.msra.mxu0 0.0
        %3506 = vmatprep.subr.mxu0 0.0
        %3507 = vmatpush1.xpose.msra.mxu0 0.0
        %3508 = vmatprep.subr.mxu0 0.0
        %3509 = vmatpush1.xpose.msra.mxu0 0.0
        %3510 = vmatprep.subr.mxu0 0.0
        %3511 = vmatpush1.xpose.msra.mxu0 0.0
        %3512 = vmatprep.subr.mxu0 0.0
        %3513 = vmatpush1.xpose.msra.mxu0 0.0
        %3514 = vmatprep.subr.mxu0 0.0
        %3515 = vmatpush1.xpose.msra.mxu0 0.0
        %3516 = vmatprep.subr.mxu0 0.0
        %3517 = vmatpush1.xpose.msra.mxu0 0.0
        %3518 = vmatprep.subr.mxu0 0.0
        %3519 = vmatpush1.xpose.msra.mxu0 0.0
        %3520 = vmatprep.subr.mxu0 0.0
        %3521 = vmatpush1.xpose.msra.mxu0 0.0
        %3522 = vmatprep.subr.mxu0 0.0
        %3523 = vmatpush1.xpose.msra.mxu0 0.0
        %3524 = vmatprep.subr.mxu0 0.0
        %3525 = vmatpush1.xpose.msra.mxu0 0.0
        %3526 = vmatprep.subr.mxu0 0.0
        %3527 = vmatpush1.xpose.msra.mxu0 0.0
        %3528 = vmatprep.subr.mxu0 0.0
        %3529 = vmatpush1.xpose.msra.mxu0 0.0
        %3530 = vmatprep.subr.mxu0 0.0
        %3531 = vmatpush1.xpose.msra.mxu0 0.0
        %3532 = vmatprep.subr.mxu0 0.0
        %3533 = vmatpush1.xpose.msra.mxu0 0.0
        %3534 = vmatprep.subr.mxu0 %v3277
        %3535 = vmatpush1.xpose.msra.mxu0 %v3275
        %3536 = vmatprep.subr.mxu0 0.0
        %3537 = vmatpush2.xpose.msra.mxu0 0.0
        %3538 = vmatprep.subr.mxu0 0.0
        %3539 = vmatpush2.xpose.msra.mxu0 0.0
        %3540 = vmatprep.subr.mxu0 0.0
        %3541 = vmatpush2.xpose.msra.mxu0 0.0
        %3542 = vmatprep.subr.mxu0 0.0
        %3543 = vmatpush2.xpose.msra.mxu0 0.0
        %3544 = vmatprep.subr.mxu0 0.0
        %3545 = vmatpush2.xpose.msra.mxu0 0.0
        %3546 = vmatprep.subr.mxu0 0.0
        %3547 = vmatpush2.xpose.msra.mxu0 0.0
        %3548 = vmatprep.subr.mxu0 0.0
        %3549 = vmatpush2.xpose.msra.mxu0 0.0
        %3550 = vmatprep.subr.mxu0 0.0
        %3551 = vmatpush2.xpose.msra.mxu0 0.0
        %3552 = vmatprep.subr.mxu0 0.0
        %3553 = vmatpush2.xpose.msra.mxu0 0.0
        %3554 = vmatprep.subr.mxu0 0.0
        %3555 = vmatpush2.xpose.msra.mxu0 0.0
        %3556 = vmatprep.subr.mxu0 0.0
        %3557 = vmatpush2.xpose.msra.mxu0 0.0
        %3558 = vmatprep.subr.mxu0 0.0
        %3559 = vmatpush2.xpose.msra.mxu0 0.0
        %3560 = vmatprep.subr.mxu0 0.0
        %3561 = vmatpush2.xpose.msra.mxu0 0.0
        %3562 = vmatprep.subr.mxu0 0.0
        %3563 = vmatpush2.xpose.msra.mxu0 0.0
        %3564 = vmatprep.subr.mxu0 0.0
        %3565 = vmatpush2.xpose.msra.mxu0 0.0
        %3566 = vmatprep.subr.mxu0 0.0
        %3567 = vmatpush2.xpose.msra.mxu0 0.0
        %3568 = vmatprep.mubr.f32.mxu0 %v2953
        %3569 = vmatmul.mubr.f32.gmra.mxu0 %v2951
        %v3570 = vpop.f32.mrf.mxu0
        %v3571 = vadd.f32 0.0, %v3570
        %v3572 = vpop.f32.mrf.mxu0
        %3573 = vmatprep.mubr.f32.mxu0 %v2959
        %3574 = vmatmul.mubr.f32.gmra.mxu0 %v2957
        %v3575 = vpop.f32.mrf.mxu0
        %v3576 = vadd.f32 0.0, %v3575
        %v3577 = vpop.f32.mrf.mxu0
        %3578 = vdwg.mxu0
        %v3579 = vsel %vm625, %v3346, -inf
        %3580 = vmax.xlane.f32.xlu0 %v3579
        %v3581 = vpop.xlane.xlu0 %3580
        %v3582 = vsel %vm625, %v3351, -inf
        %3583 = vmax.xlane.f32.xlu0 %v3582
        %v3584 = vpop.xlane.xlu0 %3583
        %v3585 = vsel %vm625, %v3421, -inf
        %3586 = vmax.xlane.f32.xlu0 %v3585
        %v3587 = vpop.xlane.xlu0 %3586
        %v3588 = vsel %vm625, %v3426, -inf
        %3589 = vmax.xlane.f32.xlu0 %v3588
        %v3590 = vpop.xlane.xlu0 %3589
        %v3591 = vsel %vm625, %v3496, -inf
        %3592 = vmax.xlane.f32.xlu0 %v3591
        %v3593 = vpop.xlane.xlu0 %3592
        %v3594 = vsel %vm625, %v3501, -inf
        %3595 = vmax.xlane.f32.xlu0 %v3594
        %v3596 = vpop.xlane.xlu0 %3595
        %v3597 = vsel %vm625, %v3571, -inf
        %3598 = vmax.xlane.f32.xlu0 %v3597
        %v3599 = vpop.xlane.xlu0 %3598
        %v3600 = vsel %vm625, %v3576, -inf
        %3601 = vmax.xlane.f32.xlu0 %v3600
        %v3602 = vpop.xlane.xlu0 %3601
        %v3603 = vsub.f32 %v3346, %v3581
        %v3604 = vsub.f32 %v3351, %v3584
        %v3605 = vsub.f32 %v3421, %v3587
        %v3606 = vsub.f32 %v3426, %v3590
        %v3607 = vsub.f32 %v3496, %v3593
        %v3608 = vsub.f32 %v3501, %v3596
        %v3609 = vsub.f32 %v3571, %v3599
        %v3610 = vsub.f32 %v3576, %v3602
        %v3611 = vmul.f32 %v3603, 1.442695
        %v3612 = vpow.pop %v3611
        %v3613 = vmul.f32 %v3604, 1.442695
        %v3614 = vpow.pop %v3613
        %v3615 = vmul.f32 %v3605, 1.442695
        %v3616 = vpow.pop %v3615
        %v3617 = vmul.f32 %v3606, 1.442695
        %v3618 = vpow.pop %v3617
        %v3619 = vmul.f32 %v3607, 1.442695
        %v3620 = vpow.pop %v3619
        %v3621 = vmul.f32 %v3608, 1.442695
        %v3622 = vpow.pop %v3621
        %v3623 = vmul.f32 %v3609, 1.442695
        %v3624 = vpow.pop %v3623
        %v3625 = vmul.f32 %v3610, 1.442695
        %v3626 = vpow.pop %v3625
        %v3627 = vsel %vm625, %v3612, 0.0
        %3628 = vadd.xlane.f32.xlu0 %v3627
        %v3629 = vpop.xlane.xlu0 %3628
        %v3630 = vsel %vm625, %v3614, 0.0
        %3631 = vadd.xlane.f32.xlu0 %v3630
        %v3632 = vpop.xlane.xlu0 %3631
        %v3633 = vsel %vm625, %v3616, 0.0
        %3634 = vadd.xlane.f32.xlu0 %v3633
        %v3635 = vpop.xlane.xlu0 %3634
        %v3636 = vsel %vm625, %v3618, 0.0
        %3637 = vadd.xlane.f32.xlu0 %v3636
        %v3638 = vpop.xlane.xlu0 %3637
        %v3639 = vsel %vm625, %v3620, 0.0
        %3640 = vadd.xlane.f32.xlu0 %v3639
        %v3641 = vpop.xlane.xlu0 %3640
        %v3642 = vsel %vm625, %v3622, 0.0
        %3643 = vadd.xlane.f32.xlu0 %v3642
        %v3644 = vpop.xlane.xlu0 %3643
        %v3645 = vsel %vm625, %v3624, 0.0
        %3646 = vadd.xlane.f32.xlu0 %v3645
        %v3647 = vpop.xlane.xlu0 %3646
        %v3648 = vsel %vm625, %v3626, 0.0
        %3649 = vadd.xlane.f32.xlu0 %v3648
        %v3650 = vpop.xlane.xlu0 %3649
        %v3651 = vrcp.pop %v3629
        %v3652 = vrcp.pop %v3632
        %v3653 = vrcp.pop %v3635
        %v3654 = vrcp.pop %v3638
        %v3655 = vrcp.pop %v3641
        %v3656 = vrcp.pop %v3644
        %v3657 = vrcp.pop %v3647
        %v3658 = vrcp.pop %v3650
        %v3659 = vmul.f32 %v3612, %v3651
        %v3660 = vmul.f32 %v3614, %v3652
        %v3661 = vmul.f32 %v3616, %v3653
        %v3662 = vmul.f32 %v3618, %v3654
        %v3663 = vmul.f32 %v3620, %v3655
        %v3664 = vmul.f32 %v3622, %v3656
        %v3665 = vmul.f32 %v3624, %v3657
        %v3666 = vmul.f32 %v3626, %v3658
        %v3668 = vsel %vm625, %v3659, 0
        %v3671 = vsel %vm625, %v3660, 0
        %v3674 = vsel %vm625, %v3661, 0
        %v3677 = vsel %vm625, %v3662, 0
        %v3680 = vsel %vm625, %v3663, 0
        %v3683 = vsel %vm625, %v3664, 0
        %v3686 = vsel %vm625, %v3665, 0
        %v3689 = vsel %vm625, %v3666, 0
        %3691 = vmatprep.subr.mxu0 0.0
        %3692 = vmatpush1.msra.mxu0 0.0
        %3693 = vmatprep.subr.mxu0 0.0
        %3694 = vmatpush1.msra.mxu0 0.0
        %3695 = vmatprep.subr.mxu0 0.0
        %3696 = vmatpush1.msra.mxu0 0.0
        %3697 = vmatprep.subr.mxu0 0.0
        %3698 = vmatpush1.msra.mxu0 0.0
        %3699 = vmatprep.subr.mxu0 0.0
        %3700 = vmatpush1.msra.mxu0 0.0
        %3701 = vmatprep.subr.mxu0 0.0
        %3702 = vmatpush1.msra.mxu0 0.0
        %3703 = vmatprep.subr.mxu0 0.0
        %3704 = vmatpush1.msra.mxu0 0.0
        %3705 = vmatprep.subr.mxu0 0.0
        %3706 = vmatpush1.msra.mxu0 0.0
        %3707 = vmatprep.subr.mxu0 0.0
        %3708 = vmatpush1.msra.mxu0 0.0
        %3709 = vmatprep.subr.mxu0 0.0
        %3710 = vmatpush1.msra.mxu0 0.0
        %3711 = vmatprep.subr.mxu0 0.0
        %3712 = vmatpush1.msra.mxu0 0.0
        %3713 = vmatprep.subr.mxu0 0.0
        %3714 = vmatpush1.msra.mxu0 0.0
        %3715 = vmatprep.subr.mxu0 0.0
        %3716 = vmatpush1.msra.mxu0 0.0
        %3717 = vmatprep.subr.mxu0 0.0
        %3718 = vmatpush1.msra.mxu0 0.0
        %3719 = vmatprep.subr.mxu0 0.0
        %3720 = vmatpush1.msra.mxu0 0.0
        %3721 = vmatprep.subr.mxu0 %v2593
        %3722 = vmatpush1.msra.mxu0 %v2591
        %3723 = vmatprep.subr.mxu0 0.0
        %3724 = vmatpush2.msra.mxu0 0.0
        %3725 = vmatprep.subr.mxu0 0.0
        %3726 = vmatpush2.msra.mxu0 0.0
        %3727 = vmatprep.subr.mxu0 0.0
        %3728 = vmatpush2.msra.mxu0 0.0
        %3729 = vmatprep.subr.mxu0 0.0
        %3730 = vmatpush2.msra.mxu0 0.0
        %3731 = vmatprep.subr.mxu0 0.0
        %3732 = vmatpush2.msra.mxu0 0.0
        %3733 = vmatprep.subr.mxu0 0.0
        %3734 = vmatpush2.msra.mxu0 0.0
        %3735 = vmatprep.subr.mxu0 0.0
        %3736 = vmatpush2.msra.mxu0 0.0
        %3737 = vmatprep.subr.mxu0 0.0
        %3738 = vmatpush2.msra.mxu0 0.0
        %3739 = vmatprep.subr.mxu0 0.0
        %3740 = vmatpush2.msra.mxu0 0.0
        %3741 = vmatprep.subr.mxu0 0.0
        %3742 = vmatpush2.msra.mxu0 0.0
        %3743 = vmatprep.subr.mxu0 0.0
        %3744 = vmatpush2.msra.mxu0 0.0
        %3745 = vmatprep.subr.mxu0 0.0
        %3746 = vmatpush2.msra.mxu0 0.0
        %3747 = vmatprep.subr.mxu0 0.0
        %3748 = vmatpush2.msra.mxu0 0.0
        %3749 = vmatprep.subr.mxu0 0.0
        %3750 = vmatpush2.msra.mxu0 0.0
        %3751 = vmatprep.subr.mxu0 0.0
        %3752 = vmatpush2.msra.mxu0 0.0
        %3753 = vmatprep.subr.mxu0 0.0
        %3754 = vmatpush2.msra.mxu0 0.0
        %3755 = vmatprep.mubr.f32.mxu0 0.0
        %3756 = vmatmul.mubr.f32.gmra.mxu0 %v3668
        %v3757 = vpop.f32.mrf.mxu0
        %v3758 = vadd.f32 0.0, %v3757
        %v3759 = vpop.f32.mrf.mxu0
        %v3760 = vadd.f32 0.0, %v3759
        %3761 = vmatprep.mubr.f32.mxu0 0.0
        %3762 = vmatmul.mubr.f32.gmra.mxu0 %v3671
        %v3763 = vpop.f32.mrf.mxu0
        %v3764 = vadd.f32 0.0, %v3763
        %v3765 = vpop.f32.mrf.mxu0
        %v3766 = vadd.f32 0.0, %v3765
        %3767 = vmatprep.mubr.f32.mxu0 0.0
        %3768 = vmatmul.mubr.f32.gmra.mxu0 %v3674
        %v3769 = vpop.f32.mrf.mxu0
        %v3770 = vadd.f32 0.0, %v3769
        %v3771 = vpop.f32.mrf.mxu0
        %v3772 = vadd.f32 0.0, %v3771
        %3773 = vmatprep.mubr.f32.mxu0 0.0
        %3774 = vmatmul.mubr.f32.gmra.mxu0 %v3677
        %v3775 = vpop.f32.mrf.mxu0
        %v3776 = vadd.f32 0.0, %v3775
        %v3777 = vpop.f32.mrf.mxu0
        %v3778 = vadd.f32 0.0, %v3777
        %3779 = vmatprep.mubr.f32.mxu0 0.0
        %3780 = vmatmul.mubr.f32.gmra.mxu0 %v3680
        %v3781 = vpop.f32.mrf.mxu0
        %v3782 = vadd.f32 0.0, %v3781
        %v3783 = vpop.f32.mrf.mxu0
        %v3784 = vadd.f32 0.0, %v3783
        %3785 = vmatprep.mubr.f32.mxu0 0.0
        %3786 = vmatmul.mubr.f32.gmra.mxu0 %v3683
        %v3787 = vpop.f32.mrf.mxu0
        %v3788 = vadd.f32 0.0, %v3787
        %v3789 = vpop.f32.mrf.mxu0
        %v3790 = vadd.f32 0.0, %v3789
        %3791 = vmatprep.mubr.f32.mxu0 0.0
        %3792 = vmatmul.mubr.f32.gmra.mxu0 %v3686
        %v3793 = vpop.f32.mrf.mxu0
        %v3794 = vadd.f32 0.0, %v3793
        %v3795 = vpop.f32.mrf.mxu0
        %v3796 = vadd.f32 0.0, %v3795
        %3797 = vmatprep.mubr.f32.mxu0 0.0
        %3798 = vmatmul.mubr.f32.gmra.mxu0 %v3689
        %v3799 = vpop.f32.mrf.mxu0
        %v3800 = vadd.f32 0.0, %v3799
        %v3801 = vpop.f32.mrf.mxu0
        %v3802 = vadd.f32 0.0, %v3801
        %3803 = vdwg.mxu0
        %3804 = vst [vmem:[%s574] sm:$0xff] %v3758
        %3805 = vst [vmem:[%s574 + $0x8] sm:$0xff] %v3760
        %3806 = vst [vmem:[%s574 + $0x10] sm:$0xff] %v3764
        %3807 = vst [vmem:[%s574 + $0x18] sm:$0xff] %v3766
        %3808 = vst [vmem:[%s574 + $0x20] sm:$0xff] %v3770
        %3809 = vst [vmem:[%s574 + $0x28] sm:$0xff] %v3772
        %3810 = vst [vmem:[%s574 + $0x30] sm:$0xff] %v3776
        %3811 = vst [vmem:[%s574 + $0x38] sm:$0xff] %v3778
        %3812 = vst [vmem:[%s574 + $0x40] sm:$0xff] %v3782
        %3813 = vst [vmem:[%s574 + $0x48] sm:$0xff] %v3784
        %3814 = vst [vmem:[%s574 + $0x50] sm:$0xff] %v3788
        %3815 = vst [vmem:[%s574 + $0x58] sm:$0xff] %v3790
        %3816 = vst [vmem:[%s574 + $0x60] sm:$0xff] %v3794
        %3817 = vst [vmem:[%s574 + $0x68] sm:$0xff] %v3796
        %3818 = vst [vmem:[%s574 + $0x70] sm:$0xff] %v3800
        %3819 = vst [vmem:[%s574 + $0x78] sm:$0xff] %v3802
        %s3820 = sand.u32 %s331, 1
        %s3821 = scalar_lea.sflag [#allocation5], %s3820
        %s3822 = sand.u32 %s331, 1
        %s3823 = smul.addr %s3822, 128
        %s3824 = scalar_lea.vmem [#allocation16], %s3823
        // Predicated region
        $region101: #{tpu_custom_call.1} parent=71 // pred_check
          %p3825 = pneg %p341
        $region102: #{tpu_custom_call.1} parent=71 // pred_check_branch
          %3827 = sbr.rel (%p3825) target = $region104
        $region103: #{tpu_custom_call.1} parent=71 // pred_region
          %s3829 = ssub.s32 2048, 2048
          %3830 = vsyncadd %s3821, %s3829
          %s3831 = smul.addr %s35, 16
          %s3832 = smul.addr %s3831, 128
          %s3833 = scalar_lea.hbm %s13, %s3832
          %s3834 = sshll.u32 %s3824, 4
          %s3835 = int_to_ptr.vmem [resolvable:$true] %s3834
          %3840 = dma.vmem_to_hbm [thread:$0]  %s3835, 2048, %s3833, %s3821, 256, 256, 16
        $region104: #{tpu_custom_call.1} parent=71 // pred_fallthru
          _
      $region72: #{tpu_custom_call.1} parent=5 // pred_fallthru
        _
      %p3841 = scmp.le.s32.totalorder 2, %s30
      // Predicated region
      $region105: #{tpu_custom_call.1} parent=5 // pred_check
        %p3842 = pneg %p3841
      $region106: #{tpu_custom_call.1} parent=5 // pred_check_branch
        %3844 = sbr.rel (%p3842) target = $region108
      $region107: #{tpu_custom_call.1} parent=5 // pred_region
        %s3845 = ssub.s32 %s30, 2
        // Predicated region
        $region109: #{tpu_custom_call.1} parent=107 // pred_check
          %p3846 = pneg %p347
        $region110: #{tpu_custom_call.1} parent=107 // pred_check_branch
          %3848 = sbr.rel (%p3846) target = $region112
        $region111: #{tpu_custom_call.1} parent=107 // pred_region
          %s3849 = sand.u32 %s332, 1
          %s3850 = scalar_lea.sflag [#allocation5], %s3849
          %s3851 = sand.u32 %s332, 1
          %s3852 = smul.addr %s3851, 128
          %s3853 = scalar_lea.vmem [#allocation16], %s3852
          %3854 = dma.done %s3850, 2048
        $region112: #{tpu_custom_call.1} parent=107 // pred_fallthru
          _
      $region108: #{tpu_custom_call.1} parent=5 // pred_fallthru
        _
    $region6: #{tpu_custom_call.1} parent=1 // loop_footer
      %s34 = sadd.s32 1, %s30
    $region7: #{tpu_custom_call.1} parent=1 // loop_footer_branch
      %29 = sbr.rel target = $region3
    $region8: #{tpu_custom_call.1} parent=1 // loop_exit
      _
    %3855 = vsyncpa [#allocation4], 1
    %s3856 = scalar_lea.sflag [#allocation4], 1
    %3857 = vsyncpa %s3856, 1
    %3858 = vsyncpa [#allocation11], 1
    %3859 = vsyncpa [#allocation14], 1
    %3860 = vsyncpa [#allocation5], 1
    %s3861 = scalar_lea.sflag [#allocation5], 1
    %3862 = vsyncpa %s3861, 1
    %3863 = vsyncpa [#allocation6], 1
    %s3864 = scalar_lea.sflag [#allocation6], 1
    %3865 = vsyncpa %s3864, 1
    %3866 = vsyncpa [#allocation9], 1

</llo_original>
